<compile_context>
chip_gen: v5e
topology: v5e:2x2
jax: 0.10.0
libtpu: 0.0.40
codegen_flags: <defaults>
</compile_context>

<pallas_src>
import jax
import jax.numpy as jnp
from jax.experimental import pallas as pl
from jax.experimental.pallas import tpu as pltpu

# ---- model hyper-parameters (from MixerModel.__init__ with small d_model) ----
D_MODEL   = 32            # d_model (small, as requested)
LAYER_NUM = 2             # depth
ARY       = 2
SEQ       = ARY + 2       # max_seq_len = block_width = num_state_vectors = ary + 2
HEADS     = 8
DIM_HEAD  = 64
INNER     = HEADS * DIM_HEAD          # 512
FF_DIM    = 4 * D_MODEL               # 128

_SCALE  = 1.0 / (DIM_HEAD ** 0.5)
_QKV_W  = 3 * DIM_HEAD                          # 192
_PACK_W = max(4 * DIM_HEAD, 2 * FF_DIM)         # 256: per-head [q|k|v|wo^T], ffn [w1|w2^T]

_SLAB_ROWS = 6                                  # ln1_g, ln1_b, ln2_g, ln2_b, b1, b2
_FG_ROW    = LAYER_NUM * _SLAB_ROWS
_FB_ROW    = _FG_ROW + 1


def _is_pow2(n: int) -> bool:
    return n > 0 and (n & (n - 1)) == 0


def _floordiv_const(x, d: int):
    return (x >> (d.bit_length() - 1)) if _is_pow2(d) else (x // d)


def _mod_const(x, d: int):
    return (x & (d - 1)) if _is_pow2(d) else (x % d)


def _layernorm(x, g, b):
    mu  = jnp.mean(x, axis=-1, keepdims=True)
    var = jnp.mean(jnp.square(x - mu), axis=-1, keepdims=True)
    return (x - mu) * jax.lax.rsqrt(var + 1e-5) * g + b


# --------------------------- fused whole-model kernel ---------------------------------
def _model_kernel(x_ref, pos_ref, slab_ref, w_ref, o_ref):
    x = x_ref[...]                               # (B*S, D) f32, batch folded into sublanes
    bs = x.shape[0]

    # ---- hoisted per-call constants ----------------------------------------------
    # Batch-tile the (head, s, [q|k|v]) positional bias to (head, b*s, ...) with a tiny
    # 0/1 batched matmul (keeps pos an S-sized input stream; no tiled-dim reshapes).
    tok  = jax.lax.broadcasted_iota(jnp.int32, (bs, SEQ), 0)
    blk  = jax.lax.broadcasted_iota(jnp.int32, (bs, SEQ), 1)
    tsel = jnp.where(_mod_const(tok, SEQ) == blk, 1.0, 0.0).astype(jnp.float32)
    tsel = jnp.broadcast_to(tsel[None], (HEADS, bs, SEQ))
    pos  = jnp.einsum('hns,hsc->hnc', tsel, pos_ref[...],
                      preferred_element_type=jnp.float32)          # (H, B*S, 3*Dh) f32

    # Additive same-sample mask (tokens only attend within their own batch element),
    # built from iotas in-kernel -- no quadratic HBM constant.
    rt = jax.lax.broadcasted_iota(jnp.int32, (bs, bs), 0)
    ct = jax.lax.broadcasted_iota(jnp.int32, (bs, bs), 1)
    bias = jnp.where(_floordiv_const(rt, SEQ) == _floordiv_const(ct, SEQ),
                     0.0, -1e9).astype(jnp.float32)                # (B*S, B*S) f32

    for l in range(LAYER_NUM):                   # static unroll over layers
        r = l * _SLAB_ROWS
        ln1_g = slab_ref[r + 0:r + 1, :D_MODEL]
        ln1_b = slab_ref[r + 1:r + 2, :D_MODEL]
        ln2_g = slab_ref[r + 2:r + 3, :D_MODEL]
        ln2_b = slab_ref[r + 3:r + 4, :D_MODEL]
        fb1   = slab_ref[r + 4:r + 5, :FF_DIM]
        fb2   = slab_ref[r + 5:r + 6, :D_MODEL]

        w_attn = w_ref[l, 0:HEADS]                             # (H, D, PACK_W) bf16
        wqkv   = w_attn[:, :, 0:_QKV_W]                        # (H, D, 3*Dh)
        woT    = w_attn[:, :, _QKV_W:_QKV_W + DIM_HEAD]        # (H, D, Dh)  == wo_h^T
        w1     = w_ref[l, HEADS, :, 0:FF_DIM]                  # (D, FF) bf16
        w2T    = w_ref[l, HEADS, :, FF_DIM:2 * FF_DIM]         # (D, FF) bf16 == w2^T

        # ---- pre-norm multi-head self-attention (head axis = einsum batch dim) ----
        h  = _layernorm(x, ln1_g, ln1_b)
        hb = jnp.broadcast_to(h.astype(jnp.bfloat16)[None], (HEADS, bs, D_MODEL))
        qkv = jnp.einsum('hnd,hdc->hnc', hb, wqkv,
                         preferred_element_type=jnp.float32) + pos   # (H, B*S, 3*Dh)
        q = qkv[:, :, 0:DIM_HEAD].astype(jnp.bfloat16)               # 1/sqrt(Dh) pre-folded
        k = qkv[:, :, DIM_HEAD:2 * DIM_HEAD].astype(jnp.bfloat16)
        v = qkv[:, :, 2 * DIM_HEAD:3 * DIM_HEAD].astype(jnp.bfloat16)

        s = jnp.einsum('hqd,hkd->hqk', q, k,
                       preferred_element_type=jnp.float32) + bias[None]
        s = s - jnp.max(s, axis=-1, keepdims=True)
        e = jnp.exp(s)
        a = e * pl.reciprocal(jnp.sum(e, axis=-1, keepdims=True), approx=True)
        o = jnp.einsum('hqk,hkd->hqd', a.astype(jnp.bfloat16), v,
                       preferred_element_type=jnp.float32)           # (H, B*S, Dh)
        proj = jnp.einsum('hqd,hcd->hqc', o.astype(jnp.bfloat16), woT,
                          preferred_element_type=jnp.float32)        # (H, B*S, D)
        attn_out = proj[0]
        for hh in range(1, HEADS):                                   # head-sum: 7 cheap adds
            attn_out = attn_out + proj[hh]
        x = x + attn_out

        # ---- pre-norm feed-forward ----
        h2 = _layernorm(x, ln2_g, ln2_b)
        f = jnp.dot(h2.astype(jnp.bfloat16), w1,
                    preferred_element_type=jnp.float32) + fb1
        # TODO(synk): PyTorch nn.GELU default is the exact erf form; tanh approx used here.
        f = jax.nn.gelu(f, approximate=True)
        x = x + jnp.einsum('nf,df->nd', f.astype(jnp.bfloat16), w2T,
                           preferred_element_type=jnp.float32) + fb2

    # ---- final LayerNorm ----
    fg = slab_ref[_FG_ROW:_FG_ROW + 1, :D_MODEL]
    fb = slab_ref[_FB_ROW:_FB_ROW + 1, :D_MODEL]
    o_ref[...] = _layernorm(x, fg, fb)


def _vmem_spec():
    # full array, VMEM-resident, no blocking / pipelining (total footprint << 1 MiB)
    return pl.BlockSpec(memory_space=pltpu.MemorySpace.VMEM)


# --------------------------- parameters & packing --------------------------------------
def init_params(key):
    """Conventional (PyTorch-like) parameter layout."""
    def nrm(k, shape, scale=0.02):
        return (scale * jax.random.normal(k, shape)).astype(jnp.float32)

    ks = jax.random.split(key, 6 * LAYER_NUM)
    return dict(
        wq=jnp.stack([nrm(ks[6 * l + 0], (D_MODEL, INNER)) for l in range(LAYER_NUM)]),
        wk=jnp.stack([nrm(ks[6 * l + 1], (D_MODEL, INNER)) for l in range(LAYER_NUM)]),
        wv=jnp.stack([nrm(ks[6 * l + 2], (D_MODEL, INNER)) for l in range(LAYER_NUM)]),
        wo=jnp.stack([nrm(ks[6 * l + 3], (INNER, D_MODEL)) for l in range(LAYER_NUM)]),
        w1=jnp.stack([nrm(ks[6 * l + 4], (D_MODEL, FF_DIM)) for l in range(LAYER_NUM)]),
        w2=jnp.stack([nrm(ks[6 * l + 5], (FF_DIM, D_MODEL)) for l in range(LAYER_NUM)]),
        ln1_g=jnp.ones((LAYER_NUM, D_MODEL), jnp.float32),
        ln1_b=jnp.zeros((LAYER_NUM, D_MODEL), jnp.float32),
        ln2_g=jnp.ones((LAYER_NUM, D_MODEL), jnp.float32),
        ln2_b=jnp.zeros((LAYER_NUM, D_MODEL), jnp.float32),
        b1=jnp.zeros((LAYER_NUM, FF_DIM), jnp.float32),
        b2=jnp.zeros((LAYER_NUM, D_MODEL), jnp.float32),
        fg=jnp.ones((1, D_MODEL), jnp.float32),
        fb=jnp.zeros((1, D_MODEL), jnp.float32),
    )


def pack_params(p):
    """Re-layout params into the two kernel streams (call once, outside the hot path)."""
    L = LAYER_NUM

    def heads_major(w):              # (L, D, H*Dh) -> (L, H, D, Dh)
        return w.reshape(L, D_MODEL, HEADS, DIM_HEAD).transpose(0, 2, 1, 3)

    wq  = heads_major(p['wq'] * _SCALE)       # fold 1/sqrt(dim_head) into the q columns
    wk  = heads_major(p['wk'])
    wv  = heads_major(p['wv'])
    woT = p['wo'].reshape(L, HEADS, DIM_HEAD, D_MODEL).transpose(0, 1, 3, 2)   # (L,H,D,Dh)
    w_attn = jnp.concatenate([wq, wk, wv, woT], axis=-1)                       # (L,H,D,4*Dh)
    w_attn = jnp.pad(w_attn, ((0, 0), (0, 0), (0, 0), (0, _PACK_W - 4 * DIM_HEAD)))

    w2T   = jnp.swapaxes(p['w2'], 1, 2)                                        # (L, D, FF)
    w_ffn = jnp.concatenate([p['w1'], w2T], axis=-1)                           # (L, D, 2*FF)
    w_ffn = jnp.pad(w_ffn, ((0, 0), (0, 0), (0, _PACK_W - 2 * FF_DIM)))
    w_all = jnp.concatenate([w_attn, w_ffn[:, None]], axis=1)                  # (L, H+1, D, PACK_W)

    def pad128(v):
        return jnp.pad(v, ((0, 0), (0, 128 - v.shape[-1])))

    per_layer = jnp.stack([pad128(p['ln1_g']), pad128(p['ln1_b']),
                           pad128(p['ln2_g']), pad128(p['ln2_b']),
                           pad128(p['b1']),    pad128(p['b2'])], axis=1)       # (L, 6, 128)
    slab = jnp.concatenate([per_layer.reshape(L * _SLAB_ROWS, 128),
                            pad128(p['fg']), pad128(p['fb'])], axis=0)         # (6L+2, 128)

    return dict(w_all=w_all.astype(jnp.bfloat16), slab=slab.astype(jnp.float32))


# ------------------------------------ forward ------------------------------------------
@jax.jit
def mixer_forward(packed, x, miss_ent_domain, pos_query, pos_key, pos_value):
    # TODO(synk): miss_ent_domain's exact use inside Hmte_Model is unknown; unused here.
    del miss_ent_domain
    B, S, D = x.shape
    x2 = x.reshape(B * S, D).astype(jnp.float32)

    def heads_first(pm):             # (S, H*Dh) -> (H, S, Dh)
        return pm.reshape(S, HEADS, DIM_HEAD).transpose(1, 0, 2)

    # head-major fused positional bias (q|k|v); attention scale folded into the q part
    pos3 = jnp.concatenate([heads_first(pos_query * _SCALE),
                            heads_first(pos_key),
                            heads_first(pos_value)], axis=-1).astype(jnp.float32)  # (H, S, 3*Dh)

    inputs = (x2, pos3, packed['slab'], packed['w_all'])
    out = pl.pallas_call(
        _model_kernel,
        out_shape=jax.ShapeDtypeStruct((B * S, D), jnp.float32),
        in_specs=[_vmem_spec() for _ in inputs],
        out_specs=_vmem_spec(),
    )(*inputs)
    return out.reshape(B, S, D)


if __name__ == "__main__":
    key = jax.random.PRNGKey(0)
    kx, kq, kk, kv, kp = jax.random.split(key, 5)

    B = 2
    x          = jax.random.normal(kx, (B, SEQ, D_MODEL), dtype=jnp.float32)
    pos_query  = 0.02 * jax.random.normal(kq, (SEQ, INNER), dtype=jnp.float32)
    pos_key    = 0.02 * jax.random.normal(kk, (SEQ, INNER), dtype=jnp.float32)
    pos_value  = 0.02 * jax.random.normal(kv, (SEQ, INNER), dtype=jnp.float32)
    miss_ent_domain = jnp.array([1], dtype=jnp.int32)

    params = init_params(kp)
    packed = pack_params(params)

    out = mixer_forward(packed, x, miss_ent_domain, pos_query, pos_key, pos_value)
    jax.block_until_ready(out)
    assert out.shape == (B, SEQ, D_MODEL) and out.dtype == jnp.float32
    assert bool(jnp.all(jnp.isfinite(out)))
    print("KERNEL_OK")
</pallas_src>

<mosaic_0001>
module attributes {stable_mosaic.version = 11 : i64} {
  func.func @_model_kernel(%arg0: memref<8x32xf32, #tpu.memory_space<vmem>>, %arg1: memref<8x4x192xf32, #tpu.memory_space<vmem>>, %arg2: memref<14x128xf32, #tpu.memory_space<vmem>>, %arg3: memref<2x9x32x256xbf16, #tpu.memory_space<vmem>>, %arg4: memref<8x32xf32, #tpu.memory_space<vmem>>) attributes {dimension_semantics = [], scalar_prefetch = 0 : i64, scratch_operands = 0 : i64, tpu.core_type = #tpu.core_type<tc>} {
    %c0 = arith.constant 0 : index
    %c0_0 = arith.constant 0 : index
    %0 = vector.load %arg0[%c0, %c0_0] : memref<8x32xf32, #tpu.memory_space<vmem>>, vector<8x32xf32>
    %1 = tpu.iota {dimensions = array<i32: 0>} : vector<8x4xi32>
    %2 = tpu.iota {dimensions = array<i32: 1>} : vector<8x4xi32>
    %c3_i32 = arith.constant 3 : i32
    %3 = vector.broadcast %c3_i32 : i32 to vector<8x4xi32>
    %4 = arith.andi %1, %3 : vector<8x4xi32>
    %5 = arith.cmpi eq, %4, %2 : vector<8x4xi32>
    %cst = arith.constant 1.000000e+00 : f32
    %cst_1 = arith.constant 0.000000e+00 : f32
    %6 = vector.broadcast %cst : f32 to vector<8x4xf32>
    %7 = vector.broadcast %cst_1 : f32 to vector<8x4xf32>
    %8 = arith.select %5, %6, %7 : vector<8x4xi1>, vector<8x4xf32>
    %9 = vector.shape_cast %8 : vector<8x4xf32> to vector<1x8x4xf32>
    %10 = vector.shape_cast %9 : vector<1x8x4xf32> to vector<1x8x4xf32>
    %11 = vector.broadcast %10 : vector<1x8x4xf32> to vector<8x8x4xf32>
    %c0_2 = arith.constant 0 : index
    %c0_3 = arith.constant 0 : index
    %c0_4 = arith.constant 0 : index
    %12 = vector.load %arg1[%c0_2, %c0_3, %c0_4] : memref<8x4x192xf32, #tpu.memory_space<vmem>>, vector<8x4x192xf32>
    "tpu.trace_start"() <{level = 10 : i32, message = "hns,hsc->hnc"}> : () -> ()
    %cst_5 = arith.constant dense<0.000000e+00> : vector<8x8x192xf32>
    %13 = tpu.matmul %11, %12, %cst_5 {dimension_numbers = #tpu.dot_dimension_numbers<[2], [1], [1], [2], [0, 0, 0, 1, 1, 2], [0], [0]>} : vector<8x8x4xf32>, vector<8x4x192xf32>, vector<8x8x192xf32> -> vector<8x8x192xf32>
    "tpu.trace_stop"() : () -> ()
    %14 = tpu.iota {dimensions = array<i32: 0>} : vector<8x8xi32>
    %15 = tpu.iota {dimensions = array<i32: 1>} : vector<8x8xi32>
    %c2_i32 = arith.constant 2 : i32
    %16 = vector.broadcast %c2_i32 : i32 to vector<8x8xi32>
    %17 = arith.shrsi %14, %16 : vector<8x8xi32>
    %c2_i32_6 = arith.constant 2 : i32
    %18 = vector.broadcast %c2_i32_6 : i32 to vector<8x8xi32>
    %19 = arith.shrsi %15, %18 : vector<8x8xi32>
    %20 = arith.cmpi eq, %17, %19 : vector<8x8xi32>
    %cst_7 = arith.constant 0.000000e+00 : f32
    %cst_8 = arith.constant -1.000000e+09 : f32
    %21 = vector.broadcast %cst_7 : f32 to vector<8x8xf32>
    %22 = vector.broadcast %cst_8 : f32 to vector<8x8xf32>
    %23 = arith.select %20, %21, %22 : vector<8x8xi1>, vector<8x8xf32>
    %c0_9 = arith.constant 0 : index
    %c0_10 = arith.constant 0 : index
    %24 = vector.load %arg2[%c0_9, %c0_10] : memref<14x128xf32, #tpu.memory_space<vmem>>, vector<1x32xf32>
    %c1 = arith.constant 1 : index
    %c0_11 = arith.constant 0 : index
    %25 = vector.load %arg2[%c1, %c0_11] : memref<14x128xf32, #tpu.memory_space<vmem>>, vector<1x32xf32>
    %c2 = arith.constant 2 : index
    %c0_12 = arith.constant 0 : index
    %26 = vector.load %arg2[%c2, %c0_12] : memref<14x128xf32, #tpu.memory_space<vmem>>, vector<1x32xf32>
    %c3 = arith.constant 3 : index
    %c0_13 = arith.constant 0 : index
    %27 = vector.load %arg2[%c3, %c0_13] : memref<14x128xf32, #tpu.memory_space<vmem>>, vector<1x32xf32>
    %c4 = arith.constant 4 : index
    %c0_14 = arith.constant 0 : index
    %28 = vector.load %arg2[%c4, %c0_14] : memref<14x128xf32, #tpu.memory_space<vmem>>, vector<1x128xf32>
    %c5 = arith.constant 5 : index
    %c0_15 = arith.constant 0 : index
    %29 = vector.load %arg2[%c5, %c0_15] : memref<14x128xf32, #tpu.memory_space<vmem>>, vector<1x32xf32>
    %c0_16 = arith.constant 0 : index
    %c0_17 = arith.constant 0 : index
    %c0_18 = arith.constant 0 : index
    %c0_19 = arith.constant 0 : index
    %30 = vector.load %arg3[%c0_16, %c0_17, %c0_18, %c0_19] : memref<2x9x32x256xbf16, #tpu.memory_space<vmem>>, vector<1x8x32x256xbf16>
    %31 = vector.shape_cast %30 : vector<1x8x32x256xbf16> to vector<8x32x256xbf16>
    %32 = vector.extract_strided_slice %31 {offsets = [0, 0, 0], sizes = [8, 32, 192], strides = [1, 1, 1]} : vector<8x32x256xbf16> to vector<8x32x192xbf16>
    %33 = vector.extract_strided_slice %31 {offsets = [0, 0, 192], sizes = [8, 32, 64], strides = [1, 1, 1]} : vector<8x32x256xbf16> to vector<8x32x64xbf16>
    %c0_20 = arith.constant 0 : index
    %c8 = arith.constant 8 : index
    %c0_21 = arith.constant 0 : index
    %c0_22 = arith.constant 0 : index
    %34 = vector.load %arg3[%c0_20, %c8, %c0_21, %c0_22] : memref<2x9x32x256xbf16, #tpu.memory_space<vmem>>, vector<1x1x32x128xbf16>
    %35 = vector.shape_cast %34 : vector<1x1x32x128xbf16> to vector<32x128xbf16>
    %c0_23 = arith.constant 0 : index
    %c8_24 = arith.constant 8 : index
    %c0_25 = arith.constant 0 : index
    %c128 = arith.constant 128 : index
    %36 = vector.load %arg3[%c0_23, %c8_24, %c0_25, %c128] : memref<2x9x32x256xbf16, #tpu.memory_space<vmem>>, vector<1x1x32x128xbf16>
    %37 = vector.shape_cast %36 : vector<1x1x32x128xbf16> to vector<32x128xbf16>
    %cst_26 = arith.constant dense<0.000000e+00> : vector<8xf32>
    %38 = vector.multi_reduction <add>, %0, %cst_26 [1] : vector<8x32xf32> to vector<8xf32>
    %39 = vector.shape_cast %38 : vector<8xf32> to vector<8x1xf32>
    %cst_27 = arith.constant 3.200000e+01 : f32
    %40 = vector.broadcast %cst_27 : f32 to vector<8x1xf32>
    %41 = arith.divf %39, %40 : vector<8x1xf32>
    %42 = vector.broadcast %41 : vector<8x1xf32> to vector<8x32xf32>
    %43 = arith.subf %0, %42 : vector<8x32xf32>
    %44 = arith.mulf %43, %43 : vector<8x32xf32>
    %cst_28 = arith.constant dense<0.000000e+00> : vector<8xf32>
    %45 = vector.multi_reduction <add>, %44, %cst_28 [1] : vector<8x32xf32> to vector<8xf32>
    %46 = vector.shape_cast %45 : vector<8xf32> to vector<8x1xf32>
    %cst_29 = arith.constant 3.200000e+01 : f32
    %47 = vector.broadcast %cst_29 : f32 to vector<8x1xf32>
    %48 = arith.divf %46, %47 : vector<8x1xf32>
    %49 = vector.broadcast %41 : vector<8x1xf32> to vector<8x32xf32>
    %50 = arith.subf %0, %49 : vector<8x32xf32>
    %cst_30 = arith.constant 9.99999974E-6 : f32
    %51 = vector.broadcast %cst_30 : f32 to vector<8x1xf32>
    %52 = arith.addf %48, %51 : vector<8x1xf32>
    %53 = math.rsqrt %52 : vector<8x1xf32>
    %54 = vector.broadcast %53 : vector<8x1xf32> to vector<8x32xf32>
    %55 = arith.mulf %50, %54 : vector<8x32xf32>
    %56 = vector.broadcast %24 : vector<1x32xf32> to vector<8x32xf32>
    %57 = arith.mulf %55, %56 : vector<8x32xf32>
    %58 = vector.broadcast %25 : vector<1x32xf32> to vector<8x32xf32>
    %59 = arith.addf %57, %58 : vector<8x32xf32>
    %60 = arith.truncf %59 : vector<8x32xf32> to vector<8x32xbf16>
    %61 = vector.shape_cast %60 : vector<8x32xbf16> to vector<1x8x32xbf16>
    %62 = vector.shape_cast %61 : vector<1x8x32xbf16> to vector<1x8x32xbf16>
    %63 = vector.broadcast %62 : vector<1x8x32xbf16> to vector<8x8x32xbf16>
    "tpu.trace_start"() <{level = 10 : i32, message = "hnd,hdc->hnc"}> : () -> ()
    %cst_31 = arith.constant dense<0.000000e+00> : vector<8x8x192xf32>
    %64 = tpu.matmul %63, %32, %cst_31 {dimension_numbers = #tpu.dot_dimension_numbers<[2], [1], [1], [2], [0, 0, 0, 1, 1, 2], [0], [0]>} : vector<8x8x32xbf16>, vector<8x32x192xbf16>, vector<8x8x192xf32> -> vector<8x8x192xf32>
    "tpu.trace_stop"() : () -> ()
    %65 = arith.addf %64, %13 : vector<8x8x192xf32>
    %66 = vector.extract_strided_slice %65 {offsets = [0, 0, 0], sizes = [8, 8, 64], strides = [1, 1, 1]} : vector<8x8x192xf32> to vector<8x8x64xf32>
    %67 = arith.truncf %66 : vector<8x8x64xf32> to vector<8x8x64xbf16>
    %68 = vector.extract_strided_slice %65 {offsets = [0, 0, 64], sizes = [8, 8, 64], strides = [1, 1, 1]} : vector<8x8x192xf32> to vector<8x8x64xf32>
    %69 = arith.truncf %68 : vector<8x8x64xf32> to vector<8x8x64xbf16>
    %70 = vector.extract_strided_slice %65 {offsets = [0, 0, 128], sizes = [8, 8, 64], strides = [1, 1, 1]} : vector<8x8x192xf32> to vector<8x8x64xf32>
    %71 = arith.truncf %70 : vector<8x8x64xf32> to vector<8x8x64xbf16>
    "tpu.trace_start"() <{level = 10 : i32, message = "hqd,hkd->hqk"}> : () -> ()
    %cst_32 = arith.constant dense<0.000000e+00> : vector<8x8x8xf32>
    %72 = tpu.matmul %67, %69, %cst_32 {dimension_numbers = #tpu.dot_dimension_numbers<[2], [2], [1], [1], [0, 0, 0, 1, 1, 1], [0], [0]>} : vector<8x8x64xbf16>, vector<8x8x64xbf16>, vector<8x8x8xf32> -> vector<8x8x8xf32>
    "tpu.trace_stop"() : () -> ()
    %73 = vector.shape_cast %23 : vector<8x8xf32> to vector<1x8x8xf32>
    %74 = vector.broadcast %73 : vector<1x8x8xf32> to vector<8x8x8xf32>
    %75 = arith.addf %72, %74 : vector<8x8x8xf32>
    %cst_33 = arith.constant dense<0xFF800000> : vector<8x8xf32>
    %76 = vector.multi_reduction <maximumf>, %75, %cst_33 [2] : vector<8x8x8xf32> to vector<8x8xf32>
    %77 = vector.shape_cast %76 : vector<8x8xf32> to vector<8x8x1xf32>
    %78 = vector.broadcast %77 : vector<8x8x1xf32> to vector<8x8x8xf32>
    %79 = arith.subf %75, %78 : vector<8x8x8xf32>
    %80 = math.exp %79 : vector<8x8x8xf32>
    %cst_34 = arith.constant dense<0.000000e+00> : vector<8x8xf32>
    %81 = vector.multi_reduction <add>, %80, %cst_34 [2] : vector<8x8x8xf32> to vector<8x8xf32>
    %82 = vector.shape_cast %81 : vector<8x8xf32> to vector<8x8x1xf32>
    %83 = tpu.reciprocal %82 {approx = true} : vector<8x8x1xf32> -> vector<8x8x1xf32>
    %84 = vector.broadcast %83 : vector<8x8x1xf32> to vector<8x8x8xf32>
    %85 = arith.mulf %80, %84 : vector<8x8x8xf32>
    %86 = arith.truncf %85 : vector<8x8x8xf32> to vector<8x8x8xbf16>
    "tpu.trace_start"() <{level = 10 : i32, message = "hqk,hkd->hqd"}> : () -> ()
    %cst_35 = arith.constant dense<0.000000e+00> : vector<8x8x64xf32>
    %87 = tpu.matmul %86, %71, %cst_35 {dimension_numbers = #tpu.dot_dimension_numbers<[2], [1], [1], [2], [0, 0, 0, 1, 1, 2], [0], [0]>} : vector<8x8x8xbf16>, vector<8x8x64xbf16>, vector<8x8x64xf32> -> vector<8x8x64xf32>
    "tpu.trace_stop"() : () -> ()
    %88 = arith.truncf %87 : vector<8x8x64xf32> to vector<8x8x64xbf16>
    "tpu.trace_start"() <{level = 10 : i32, message = "hqd,hcd->hqc"}> : () -> ()
    %cst_36 = arith.constant dense<0.000000e+00> : vector<8x8x32xf32>
    %89 = tpu.matmul %88, %33, %cst_36 {dimension_numbers = #tpu.dot_dimension_numbers<[2], [2], [1], [1], [0, 0, 0, 1, 1, 1], [0], [0]>} : vector<8x8x64xbf16>, vector<8x32x64xbf16>, vector<8x8x32xf32> -> vector<8x8x32xf32>
    "tpu.trace_stop"() : () -> ()
    %90 = vector.extract_strided_slice %89 {offsets = [0, 0, 0], sizes = [1, 8, 32], strides = [1, 1, 1]} : vector<8x8x32xf32> to vector<1x8x32xf32>
    %91 = vector.shape_cast %90 : vector<1x8x32xf32> to vector<8x32xf32>
    %92 = vector.extract_strided_slice %89 {offsets = [1, 0, 0], sizes = [1, 8, 32], strides = [1, 1, 1]} : vector<8x8x32xf32> to vector<1x8x32xf32>
    %93 = vector.shape_cast %92 : vector<1x8x32xf32> to vector<8x32xf32>
    %94 = arith.addf %91, %93 : vector<8x32xf32>
    %95 = vector.extract_strided_slice %89 {offsets = [2, 0, 0], sizes = [1, 8, 32], strides = [1, 1, 1]} : vector<8x8x32xf32> to vector<1x8x32xf32>
    %96 = vector.shape_cast %95 : vector<1x8x32xf32> to vector<8x32xf32>
    %97 = arith.addf %94, %96 : vector<8x32xf32>
    %98 = vector.extract_strided_slice %89 {offsets = [3, 0, 0], sizes = [1, 8, 32], strides = [1, 1, 1]} : vector<8x8x32xf32> to vector<1x8x32xf32>
    %99 = vector.shape_cast %98 : vector<1x8x32xf32> to vector<8x32xf32>
    %100 = arith.addf %97, %99 : vector<8x32xf32>
    %101 = vector.extract_strided_slice %89 {offsets = [4, 0, 0], sizes = [1, 8, 32], strides = [1, 1, 1]} : vector<8x8x32xf32> to vector<1x8x32xf32>
    %102 = vector.shape_cast %101 : vector<1x8x32xf32> to vector<8x32xf32>
    %103 = arith.addf %100, %102 : vector<8x32xf32>
    %104 = vector.extract_strided_slice %89 {offsets = [5, 0, 0], sizes = [1, 8, 32], strides = [1, 1, 1]} : vector<8x8x32xf32> to vector<1x8x32xf32>
    %105 = vector.shape_cast %104 : vector<1x8x32xf32> to vector<8x32xf32>
    %106 = arith.addf %103, %105 : vector<8x32xf32>
    %107 = vector.extract_strided_slice %89 {offsets = [6, 0, 0], sizes = [1, 8, 32], strides = [1, 1, 1]} : vector<8x8x32xf32> to vector<1x8x32xf32>
    %108 = vector.shape_cast %107 : vector<1x8x32xf32> to vector<8x32xf32>
    %109 = arith.addf %106, %108 : vector<8x32xf32>
    %110 = vector.extract_strided_slice %89 {offsets = [7, 0, 0], sizes = [1, 8, 32], strides = [1, 1, 1]} : vector<8x8x32xf32> to vector<1x8x32xf32>
    %111 = vector.shape_cast %110 : vector<1x8x32xf32> to vector<8x32xf32>
    %112 = arith.addf %109, %111 : vector<8x32xf32>
    %113 = arith.addf %0, %112 : vector<8x32xf32>
    %cst_37 = arith.constant dense<0.000000e+00> : vector<8xf32>
    %114 = vector.multi_reduction <add>, %113, %cst_37 [1] : vector<8x32xf32> to vector<8xf32>
    %115 = vector.shape_cast %114 : vector<8xf32> to vector<8x1xf32>
    %cst_38 = arith.constant 3.200000e+01 : f32
    %116 = vector.broadcast %cst_38 : f32 to vector<8x1xf32>
    %117 = arith.divf %115, %116 : vector<8x1xf32>
    %118 = vector.broadcast %117 : vector<8x1xf32> to vector<8x32xf32>
    %119 = arith.subf %113, %118 : vector<8x32xf32>
    %120 = arith.mulf %119, %119 : vector<8x32xf32>
    %cst_39 = arith.constant dense<0.000000e+00> : vector<8xf32>
    %121 = vector.multi_reduction <add>, %120, %cst_39 [1] : vector<8x32xf32> to vector<8xf32>
    %122 = vector.shape_cast %121 : vector<8xf32> to vector<8x1xf32>
    %cst_40 = arith.constant 3.200000e+01 : f32
    %123 = vector.broadcast %cst_40 : f32 to vector<8x1xf32>
    %124 = arith.divf %122, %123 : vector<8x1xf32>
    %125 = vector.broadcast %117 : vector<8x1xf32> to vector<8x32xf32>
    %126 = arith.subf %113, %125 : vector<8x32xf32>
    %cst_41 = arith.constant 9.99999974E-6 : f32
    %127 = vector.broadcast %cst_41 : f32 to vector<8x1xf32>
    %128 = arith.addf %124, %127 : vector<8x1xf32>
    %129 = math.rsqrt %128 : vector<8x1xf32>
    %130 = vector.broadcast %129 : vector<8x1xf32> to vector<8x32xf32>
    %131 = arith.mulf %126, %130 : vector<8x32xf32>
    %132 = vector.broadcast %26 : vector<1x32xf32> to vector<8x32xf32>
    %133 = arith.mulf %131, %132 : vector<8x32xf32>
    %134 = vector.broadcast %27 : vector<1x32xf32> to vector<8x32xf32>
    %135 = arith.addf %133, %134 : vector<8x32xf32>
    %136 = arith.truncf %135 : vector<8x32xf32> to vector<8x32xbf16>
    %cst_42 = arith.constant dense<0.000000e+00> : vector<8x128xf32>
    %137 = tpu.matmul %136, %35, %cst_42 {dimension_numbers = #tpu.dot_dimension_numbers<[1], [0], [0], [1], [0, 0, 1, 1], [], []>} : vector<8x32xbf16>, vector<32x128xbf16>, vector<8x128xf32> -> vector<8x128xf32>
    %138 = vector.broadcast %28 : vector<1x128xf32> to vector<8x128xf32>
    %139 = arith.addf %137, %138 : vector<8x128xf32>
    %140 = arith.mulf %139, %139 : vector<8x128xf32>
    %141 = arith.mulf %139, %140 : vector<8x128xf32>
    %cst_43 = arith.constant 4.471500e-02 : f32
    %142 = vector.broadcast %cst_43 : f32 to vector<8x128xf32>
    %143 = arith.mulf %142, %141 : vector<8x128xf32>
    %144 = arith.addf %139, %143 : vector<8x128xf32>
    %cst_44 = arith.constant 0.797884583 : f32
    %145 = vector.broadcast %cst_44 : f32 to vector<8x128xf32>
    %146 = arith.mulf %145, %144 : vector<8x128xf32>
    %147 = math.tanh %146 : vector<8x128xf32>
    %cst_45 = arith.constant 1.000000e+00 : f32
    %148 = vector.broadcast %cst_45 : f32 to vector<8x128xf32>
    %149 = arith.addf %148, %147 : vector<8x128xf32>
    %cst_46 = arith.constant 5.000000e-01 : f32
    %150 = vector.broadcast %cst_46 : f32 to vector<8x128xf32>
    %151 = arith.mulf %150, %149 : vector<8x128xf32>
    %152 = arith.mulf %139, %151 : vector<8x128xf32>
    %153 = arith.truncf %152 : vector<8x128xf32> to vector<8x128xbf16>
    "tpu.trace_start"() <{level = 10 : i32, message = "nf,df->nd"}> : () -> ()
    %cst_47 = arith.constant dense<0.000000e+00> : vector<8x32xf32>
    %154 = tpu.matmul %153, %37, %cst_47 {dimension_numbers = #tpu.dot_dimension_numbers<[1], [1], [0], [0], [0, 0, 1, 0], [], []>} : vector<8x128xbf16>, vector<32x128xbf16>, vector<8x32xf32> -> vector<8x32xf32>
    "tpu.trace_stop"() : () -> ()
    %155 = arith.addf %113, %154 : vector<8x32xf32>
    %156 = vector.broadcast %29 : vector<1x32xf32> to vector<8x32xf32>
    %157 = arith.addf %155, %156 : vector<8x32xf32>
    %c6 = arith.constant 6 : index
    %c0_48 = arith.constant 0 : index
    %158 = vector.load %arg2[%c6, %c0_48] : memref<14x128xf32, #tpu.memory_space<vmem>>, vector<1x32xf32>
    %c7 = arith.constant 7 : index
    %c0_49 = arith.constant 0 : index
    %159 = vector.load %arg2[%c7, %c0_49] : memref<14x128xf32, #tpu.memory_space<vmem>>, vector<1x32xf32>
    %c8_50 = arith.constant 8 : index
    %c0_51 = arith.constant 0 : index
    %160 = vector.load %arg2[%c8_50, %c0_51] : memref<14x128xf32, #tpu.memory_space<vmem>>, vector<1x32xf32>
    %c9 = arith.constant 9 : index
    %c0_52 = arith.constant 0 : index
    %161 = vector.load %arg2[%c9, %c0_52] : memref<14x128xf32, #tpu.memory_space<vmem>>, vector<1x32xf32>
    %c10 = arith.constant 10 : index
    %c0_53 = arith.constant 0 : index
    %162 = vector.load %arg2[%c10, %c0_53] : memref<14x128xf32, #tpu.memory_space<vmem>>, vector<1x128xf32>
    %c11 = arith.constant 11 : index
    %c0_54 = arith.constant 0 : index
    %163 = vector.load %arg2[%c11, %c0_54] : memref<14x128xf32, #tpu.memory_space<vmem>>, vector<1x32xf32>
    %c1_55 = arith.constant 1 : index
    %c0_56 = arith.constant 0 : index
    %c0_57 = arith.constant 0 : index
    %c0_58 = arith.constant 0 : index
    %164 = vector.load %arg3[%c1_55, %c0_56, %c0_57, %c0_58] : memref<2x9x32x256xbf16, #tpu.memory_space<vmem>>, vector<1x8x32x256xbf16>
    %165 = vector.shape_cast %164 : vector<1x8x32x256xbf16> to vector<8x32x256xbf16>
    %166 = vector.extract_strided_slice %165 {offsets = [0, 0, 0], sizes = [8, 32, 192], strides = [1, 1, 1]} : vector<8x32x256xbf16> to vector<8x32x192xbf16>
    %167 = vector.extract_strided_slice %165 {offsets = [0, 0, 192], sizes = [8, 32, 64], strides = [1, 1, 1]} : vector<8x32x256xbf16> to vector<8x32x64xbf16>
    %c1_59 = arith.constant 1 : index
    %c8_60 = arith.constant 8 : index
    %c0_61 = arith.constant 0 : index
    %c0_62 = arith.constant 0 : index
    %168 = vector.load %arg3[%c1_59, %c8_60, %c0_61, %c0_62] : memref<2x9x32x256xbf16, #tpu.memory_space<vmem>>, vector<1x1x32x128xbf16>
    %169 = vector.shape_cast %168 : vector<1x1x32x128xbf16> to vector<32x128xbf16>
    %c1_63 = arith.constant 1 : index
    %c8_64 = arith.constant 8 : index
    %c0_65 = arith.constant 0 : index
    %c128_66 = arith.constant 128 : index
    %170 = vector.load %arg3[%c1_63, %c8_64, %c0_65, %c128_66] : memref<2x9x32x256xbf16, #tpu.memory_space<vmem>>, vector<1x1x32x128xbf16>
    %171 = vector.shape_cast %170 : vector<1x1x32x128xbf16> to vector<32x128xbf16>
    %cst_67 = arith.constant dense<0.000000e+00> : vector<8xf32>
    %172 = vector.multi_reduction <add>, %157, %cst_67 [1] : vector<8x32xf32> to vector<8xf32>
    %173 = vector.shape_cast %172 : vector<8xf32> to vector<8x1xf32>
    %cst_68 = arith.constant 3.200000e+01 : f32
    %174 = vector.broadcast %cst_68 : f32 to vector<8x1xf32>
    %175 = arith.divf %173, %174 : vector<8x1xf32>
    %176 = vector.broadcast %175 : vector<8x1xf32> to vector<8x32xf32>
    %177 = arith.subf %157, %176 : vector<8x32xf32>
    %178 = arith.mulf %177, %177 : vector<8x32xf32>
    %cst_69 = arith.constant dense<0.000000e+00> : vector<8xf32>
    %179 = vector.multi_reduction <add>, %178, %cst_69 [1] : vector<8x32xf32> to vector<8xf32>
    %180 = vector.shape_cast %179 : vector<8xf32> to vector<8x1xf32>
    %cst_70 = arith.constant 3.200000e+01 : f32
    %181 = vector.broadcast %cst_70 : f32 to vector<8x1xf32>
    %182 = arith.divf %180, %181 : vector<8x1xf32>
    %183 = vector.broadcast %175 : vector<8x1xf32> to vector<8x32xf32>
    %184 = arith.subf %157, %183 : vector<8x32xf32>
    %cst_71 = arith.constant 9.99999974E-6 : f32
    %185 = vector.broadcast %cst_71 : f32 to vector<8x1xf32>
    %186 = arith.addf %182, %185 : vector<8x1xf32>
    %187 = math.rsqrt %186 : vector<8x1xf32>
    %188 = vector.broadcast %187 : vector<8x1xf32> to vector<8x32xf32>
    %189 = arith.mulf %184, %188 : vector<8x32xf32>
    %190 = vector.broadcast %158 : vector<1x32xf32> to vector<8x32xf32>
    %191 = arith.mulf %189, %190 : vector<8x32xf32>
    %192 = vector.broadcast %159 : vector<1x32xf32> to vector<8x32xf32>
    %193 = arith.addf %191, %192 : vector<8x32xf32>
    %194 = arith.truncf %193 : vector<8x32xf32> to vector<8x32xbf16>
    %195 = vector.shape_cast %194 : vector<8x32xbf16> to vector<1x8x32xbf16>
    %196 = vector.shape_cast %195 : vector<1x8x32xbf16> to vector<1x8x32xbf16>
    %197 = vector.broadcast %196 : vector<1x8x32xbf16> to vector<8x8x32xbf16>
    "tpu.trace_start"() <{level = 10 : i32, message = "hnd,hdc->hnc"}> : () -> ()
    %cst_72 = arith.constant dense<0.000000e+00> : vector<8x8x192xf32>
    %198 = tpu.matmul %197, %166, %cst_72 {dimension_numbers = #tpu.dot_dimension_numbers<[2], [1], [1], [2], [0, 0, 0, 1, 1, 2], [0], [0]>} : vector<8x8x32xbf16>, vector<8x32x192xbf16>, vector<8x8x192xf32> -> vector<8x8x192xf32>
    "tpu.trace_stop"() : () -> ()
    %199 = arith.addf %198, %13 : vector<8x8x192xf32>
    %200 = vector.extract_strided_slice %199 {offsets = [0, 0, 0], sizes = [8, 8, 64], strides = [1, 1, 1]} : vector<8x8x192xf32> to vector<8x8x64xf32>
    %201 = arith.truncf %200 : vector<8x8x64xf32> to vector<8x8x64xbf16>
    %202 = vector.extract_strided_slice %199 {offsets = [0, 0, 64], sizes = [8, 8, 64], strides = [1, 1, 1]} : vector<8x8x192xf32> to vector<8x8x64xf32>
    %203 = arith.truncf %202 : vector<8x8x64xf32> to vector<8x8x64xbf16>
    %204 = vector.extract_strided_slice %199 {offsets = [0, 0, 128], sizes = [8, 8, 64], strides = [1, 1, 1]} : vector<8x8x192xf32> to vector<8x8x64xf32>
    %205 = arith.truncf %204 : vector<8x8x64xf32> to vector<8x8x64xbf16>
    "tpu.trace_start"() <{level = 10 : i32, message = "hqd,hkd->hqk"}> : () -> ()
    %cst_73 = arith.constant dense<0.000000e+00> : vector<8x8x8xf32>
    %206 = tpu.matmul %201, %203, %cst_73 {dimension_numbers = #tpu.dot_dimension_numbers<[2], [2], [1], [1], [0, 0, 0, 1, 1, 1], [0], [0]>} : vector<8x8x64xbf16>, vector<8x8x64xbf16>, vector<8x8x8xf32> -> vector<8x8x8xf32>
    "tpu.trace_stop"() : () -> ()
    %207 = vector.shape_cast %23 : vector<8x8xf32> to vector<1x8x8xf32>
    %208 = vector.broadcast %207 : vector<1x8x8xf32> to vector<8x8x8xf32>
    %209 = arith.addf %206, %208 : vector<8x8x8xf32>
    %cst_74 = arith.constant dense<0xFF800000> : vector<8x8xf32>
    %210 = vector.multi_reduction <maximumf>, %209, %cst_74 [2] : vector<8x8x8xf32> to vector<8x8xf32>
    %211 = vector.shape_cast %210 : vector<8x8xf32> to vector<8x8x1xf32>
    %212 = vector.broadcast %211 : vector<8x8x1xf32> to vector<8x8x8xf32>
    %213 = arith.subf %209, %212 : vector<8x8x8xf32>
    %214 = math.exp %213 : vector<8x8x8xf32>
    %cst_75 = arith.constant dense<0.000000e+00> : vector<8x8xf32>
    %215 = vector.multi_reduction <add>, %214, %cst_75 [2] : vector<8x8x8xf32> to vector<8x8xf32>
    %216 = vector.shape_cast %215 : vector<8x8xf32> to vector<8x8x1xf32>
    %217 = tpu.reciprocal %216 {approx = true} : vector<8x8x1xf32> -> vector<8x8x1xf32>
    %218 = vector.broadcast %217 : vector<8x8x1xf32> to vector<8x8x8xf32>
    %219 = arith.mulf %214, %218 : vector<8x8x8xf32>
    %220 = arith.truncf %219 : vector<8x8x8xf32> to vector<8x8x8xbf16>
    "tpu.trace_start"() <{level = 10 : i32, message = "hqk,hkd->hqd"}> : () -> ()
    %cst_76 = arith.constant dense<0.000000e+00> : vector<8x8x64xf32>
    %221 = tpu.matmul %220, %205, %cst_76 {dimension_numbers = #tpu.dot_dimension_numbers<[2], [1], [1], [2], [0, 0, 0, 1, 1, 2], [0], [0]>} : vector<8x8x8xbf16>, vector<8x8x64xbf16>, vector<8x8x64xf32> -> vector<8x8x64xf32>
    "tpu.trace_stop"() : () -> ()
    %222 = arith.truncf %221 : vector<8x8x64xf32> to vector<8x8x64xbf16>
    "tpu.trace_start"() <{level = 10 : i32, message = "hqd,hcd->hqc"}> : () -> ()
    %cst_77 = arith.constant dense<0.000000e+00> : vector<8x8x32xf32>
    %223 = tpu.matmul %222, %167, %cst_77 {dimension_numbers = #tpu.dot_dimension_numbers<[2], [2], [1], [1], [0, 0, 0, 1, 1, 1], [0], [0]>} : vector<8x8x64xbf16>, vector<8x32x64xbf16>, vector<8x8x32xf32> -> vector<8x8x32xf32>
    "tpu.trace_stop"() : () -> ()
    %224 = vector.extract_strided_slice %223 {offsets = [0, 0, 0], sizes = [1, 8, 32], strides = [1, 1, 1]} : vector<8x8x32xf32> to vector<1x8x32xf32>
    %225 = vector.shape_cast %224 : vector<1x8x32xf32> to vector<8x32xf32>
    %226 = vector.extract_strided_slice %223 {offsets = [1, 0, 0], sizes = [1, 8, 32], strides = [1, 1, 1]} : vector<8x8x32xf32> to vector<1x8x32xf32>
    %227 = vector.shape_cast %226 : vector<1x8x32xf32> to vector<8x32xf32>
    %228 = arith.addf %225, %227 : vector<8x32xf32>
    %229 = vector.extract_strided_slice %223 {offsets = [2, 0, 0], sizes = [1, 8, 32], strides = [1, 1, 1]} : vector<8x8x32xf32> to vector<1x8x32xf32>
    %230 = vector.shape_cast %229 : vector<1x8x32xf32> to vector<8x32xf32>
    %231 = arith.addf %228, %230 : vector<8x32xf32>
    %232 = vector.extract_strided_slice %223 {offsets = [3, 0, 0], sizes = [1, 8, 32], strides = [1, 1, 1]} : vector<8x8x32xf32> to vector<1x8x32xf32>
    %233 = vector.shape_cast %232 : vector<1x8x32xf32> to vector<8x32xf32>
    %234 = arith.addf %231, %233 : vector<8x32xf32>
    %235 = vector.extract_strided_slice %223 {offsets = [4, 0, 0], sizes = [1, 8, 32], strides = [1, 1, 1]} : vector<8x8x32xf32> to vector<1x8x32xf32>
    %236 = vector.shape_cast %235 : vector<1x8x32xf32> to vector<8x32xf32>
    %237 = arith.addf %234, %236 : vector<8x32xf32>
    %238 = vector.extract_strided_slice %223 {offsets = [5, 0, 0], sizes = [1, 8, 32], strides = [1, 1, 1]} : vector<8x8x32xf32> to vector<1x8x32xf32>
    %239 = vector.shape_cast %238 : vector<1x8x32xf32> to vector<8x32xf32>
    %240 = arith.addf %237, %239 : vector<8x32xf32>
    %241 = vector.extract_strided_slice %223 {offsets = [6, 0, 0], sizes = [1, 8, 32], strides = [1, 1, 1]} : vector<8x8x32xf32> to vector<1x8x32xf32>
    %242 = vector.shape_cast %241 : vector<1x8x32xf32> to vector<8x32xf32>
    %243 = arith.addf %240, %242 : vector<8x32xf32>
    %244 = vector.extract_strided_slice %223 {offsets = [7, 0, 0], sizes = [1, 8, 32], strides = [1, 1, 1]} : vector<8x8x32xf32> to vector<1x8x32xf32>
    %245 = vector.shape_cast %244 : vector<1x8x32xf32> to vector<8x32xf32>
    %246 = arith.addf %243, %245 : vector<8x32xf32>
    %247 = arith.addf %157, %246 : vector<8x32xf32>
    %cst_78 = arith.constant dense<0.000000e+00> : vector<8xf32>
    %248 = vector.multi_reduction <add>, %247, %cst_78 [1] : vector<8x32xf32> to vector<8xf32>
    %249 = vector.shape_cast %248 : vector<8xf32> to vector<8x1xf32>
    %cst_79 = arith.constant 3.200000e+01 : f32
    %250 = vector.broadcast %cst_79 : f32 to vector<8x1xf32>
    %251 = arith.divf %249, %250 : vector<8x1xf32>
    %252 = vector.broadcast %251 : vector<8x1xf32> to vector<8x32xf32>
    %253 = arith.subf %247, %252 : vector<8x32xf32>
    %254 = arith.mulf %253, %253 : vector<8x32xf32>
    %cst_80 = arith.constant dense<0.000000e+00> : vector<8xf32>
    %255 = vector.multi_reduction <add>, %254, %cst_80 [1] : vector<8x32xf32> to vector<8xf32>
    %256 = vector.shape_cast %255 : vector<8xf32> to vector<8x1xf32>
    %cst_81 = arith.constant 3.200000e+01 : f32
    %257 = vector.broadcast %cst_81 : f32 to vector<8x1xf32>
    %258 = arith.divf %256, %257 : vector<8x1xf32>
    %259 = vector.broadcast %251 : vector<8x1xf32> to vector<8x32xf32>
    %260 = arith.subf %247, %259 : vector<8x32xf32>
    %cst_82 = arith.constant 9.99999974E-6 : f32
    %261 = vector.broadcast %cst_82 : f32 to vector<8x1xf32>
    %262 = arith.addf %258, %261 : vector<8x1xf32>
    %263 = math.rsqrt %262 : vector<8x1xf32>
    %264 = vector.broadcast %263 : vector<8x1xf32> to vector<8x32xf32>
    %265 = arith.mulf %260, %264 : vector<8x32xf32>
    %266 = vector.broadcast %160 : vector<1x32xf32> to vector<8x32xf32>
    %267 = arith.mulf %265, %266 : vector<8x32xf32>
    %268 = vector.broadcast %161 : vector<1x32xf32> to vector<8x32xf32>
    %269 = arith.addf %267, %268 : vector<8x32xf32>
    %270 = arith.truncf %269 : vector<8x32xf32> to vector<8x32xbf16>
    %cst_83 = arith.constant dense<0.000000e+00> : vector<8x128xf32>
    %271 = tpu.matmul %270, %169, %cst_83 {dimension_numbers = #tpu.dot_dimension_numbers<[1], [0], [0], [1], [0, 0, 1, 1], [], []>} : vector<8x32xbf16>, vector<32x128xbf16>, vector<8x128xf32> -> vector<8x128xf32>
    %272 = vector.broadcast %162 : vector<1x128xf32> to vector<8x128xf32>
    %273 = arith.addf %271, %272 : vector<8x128xf32>
    %274 = arith.mulf %273, %273 : vector<8x128xf32>
    %275 = arith.mulf %273, %274 : vector<8x128xf32>
    %cst_84 = arith.constant 4.471500e-02 : f32
    %276 = vector.broadcast %cst_84 : f32 to vector<8x128xf32>
    %277 = arith.mulf %276, %275 : vector<8x128xf32>
    %278 = arith.addf %273, %277 : vector<8x128xf32>
    %cst_85 = arith.constant 0.797884583 : f32
    %279 = vector.broadcast %cst_85 : f32 to vector<8x128xf32>
    %280 = arith.mulf %279, %278 : vector<8x128xf32>
    %281 = math.tanh %280 : vector<8x128xf32>
    %cst_86 = arith.constant 1.000000e+00 : f32
    %282 = vector.broadcast %cst_86 : f32 to vector<8x128xf32>
    %283 = arith.addf %282, %281 : vector<8x128xf32>
    %cst_87 = arith.constant 5.000000e-01 : f32
    %284 = vector.broadcast %cst_87 : f32 to vector<8x128xf32>
    %285 = arith.mulf %284, %283 : vector<8x128xf32>
    %286 = arith.mulf %273, %285 : vector<8x128xf32>
    %287 = arith.truncf %286 : vector<8x128xf32> to vector<8x128xbf16>
    "tpu.trace_start"() <{level = 10 : i32, message = "nf,df->nd"}> : () -> ()
    %cst_88 = arith.constant dense<0.000000e+00> : vector<8x32xf32>
    %288 = tpu.matmul %287, %171, %cst_88 {dimension_numbers = #tpu.dot_dimension_numbers<[1], [1], [0], [0], [0, 0, 1, 0], [], []>} : vector<8x128xbf16>, vector<32x128xbf16>, vector<8x32xf32> -> vector<8x32xf32>
    "tpu.trace_stop"() : () -> ()
    %289 = arith.addf %247, %288 : vector<8x32xf32>
    %290 = vector.broadcast %163 : vector<1x32xf32> to vector<8x32xf32>
    %291 = arith.addf %289, %290 : vector<8x32xf32>
    %c12 = arith.constant 12 : index
    %c0_89 = arith.constant 0 : index
    %292 = vector.load %arg2[%c12, %c0_89] : memref<14x128xf32, #tpu.memory_space<vmem>>, vector<1x32xf32>
    %c13 = arith.constant 13 : index
    %c0_90 = arith.constant 0 : index
    %293 = vector.load %arg2[%c13, %c0_90] : memref<14x128xf32, #tpu.memory_space<vmem>>, vector<1x32xf32>
    %cst_91 = arith.constant dense<0.000000e+00> : vector<8xf32>
    %294 = vector.multi_reduction <add>, %291, %cst_91 [1] : vector<8x32xf32> to vector<8xf32>
    %295 = vector.shape_cast %294 : vector<8xf32> to vector<8x1xf32>
    %cst_92 = arith.constant 3.200000e+01 : f32
    %296 = vector.broadcast %cst_92 : f32 to vector<8x1xf32>
    %297 = arith.divf %295, %296 : vector<8x1xf32>
    %298 = vector.broadcast %297 : vector<8x1xf32> to vector<8x32xf32>
    %299 = arith.subf %291, %298 : vector<8x32xf32>
    %300 = arith.mulf %299, %299 : vector<8x32xf32>
    %cst_93 = arith.constant dense<0.000000e+00> : vector<8xf32>
    %301 = vector.multi_reduction <add>, %300, %cst_93 [1] : vector<8x32xf32> to vector<8xf32>
    %302 = vector.shape_cast %301 : vector<8xf32> to vector<8x1xf32>
    %cst_94 = arith.constant 3.200000e+01 : f32
    %303 = vector.broadcast %cst_94 : f32 to vector<8x1xf32>
    %304 = arith.divf %302, %303 : vector<8x1xf32>
    %305 = vector.broadcast %297 : vector<8x1xf32> to vector<8x32xf32>
    %306 = arith.subf %291, %305 : vector<8x32xf32>
    %cst_95 = arith.constant 9.99999974E-6 : f32
    %307 = vector.broadcast %cst_95 : f32 to vector<8x1xf32>
    %308 = arith.addf %304, %307 : vector<8x1xf32>
    %309 = math.rsqrt %308 : vector<8x1xf32>
    %310 = vector.broadcast %309 : vector<8x1xf32> to vector<8x32xf32>
    %311 = arith.mulf %306, %310 : vector<8x32xf32>
    %312 = vector.broadcast %292 : vector<1x32xf32> to vector<8x32xf32>
    %313 = arith.mulf %311, %312 : vector<8x32xf32>
    %314 = vector.broadcast %293 : vector<1x32xf32> to vector<8x32xf32>
    %315 = arith.addf %313, %314 : vector<8x32xf32>
    %c0_96 = arith.constant 0 : index
    %c0_97 = arith.constant 0 : index
    %316 = vector.load %arg4[%c0_96, %c0_97] : memref<8x32xf32, #tpu.memory_space<vmem>>, vector<8x32xf32>
    tpu.vector_store %arg4[%c0_96, %c0_97], %315 {strides = array<i32>} : memref<8x32xf32, #tpu.memory_space<vmem>>, vector<8x32xf32>,
    return
  }
}

</mosaic_0001>

<llo_original>
// kernel: mixer_forward.1
$region0: #{mixer_forward.1}
  #allocation0 [shape = 'u32[]', space=smem, size = 0x4, offset = 0x4, fixed_abs, tag = 'smem constant byte address 0x4 - core index']
  #allocation1 [shape = 'u32[72,128]{1,0:T(1,128)}', space=vmem, size = 0x9000, scoped, tag = 'internal scratch']
  %s0 = inlined_call_operand.vmem [shape: f32[8,32], index: 0, kind: input, shape index: {}]
  %s1 = inlined_call_operand.vmem [shape: f32[8,4,192], index: 1, kind: input, shape index: {}]
  %s2 = inlined_call_operand.vmem [shape: f32[14,128], index: 2, kind: input, shape index: {}]
  %s3 = inlined_call_operand.hbm [shape: bf16[2,9,32,256], index: 3, kind: input, shape index: {}]
  %s4 = inlined_call_operand.hbm [shape: f32[8,32], index: 4, kind: output, shape index: {}]
  %s5 = sld [smem:[#allocation0]]
  $region30: #{mixer_forward.1} parent=0
    _
  %s7 = ssub.s32 1, %s5
  %s8 = scalar_select 0, %s7, %s5
  $region1: #{mixer_forward.1} parent=0
    #allocation2 [shape = 'u8[294912]{0}', space=vmem, size = 0x48000, scoped, tag = 'input window, operand 3, single buffered']
    #allocation3 [shape = 's32[1]{0}', space=sflag, size = 0x4, scoped, tag = 'scoped memory for mixer_forward.1']
    #allocation4 [shape = 's32[1]{0}', space=sflag, size = 0x4, scoped, tag = 'scoped memory for mixer_forward.1']
    #allocation5 [shape = 'u8[4096]{0}', space=vmem, size = 0x1000, scoped, tag = 'output window, operand 0, single buffered']
    %9 = vsyncpa [#allocation3], 0
    %10 = vsyncpa [#allocation4], 0
    // Predicated region
    $region2: #{mixer_forward.1} parent=1 // pred_check
      _
    $region3: #{mixer_forward.1} parent=1 // pred_check_branch
      %12 = sbr.rel (0) target = $region5
    $region4: #{mixer_forward.1} parent=1 // pred_region
      _
    $region5: #{mixer_forward.1} parent=1 // pred_fallthru
      _
    // Predicated region
    $region6: #{mixer_forward.1} parent=1 // pred_check
      _
    $region7: #{mixer_forward.1} parent=1 // pred_check_branch
      %14 = sbr.rel (0) target = $region9
    $region8: #{mixer_forward.1} parent=1 // pred_region
      _
    $region9: #{mixer_forward.1} parent=1 // pred_fallthru
      _
    // Predicated region
    $region10: #{mixer_forward.1} parent=1 // pred_check
      _
    $region11: #{mixer_forward.1} parent=1 // pred_check_branch
      %16 = sbr.rel (0) target = $region13
    $region12: #{mixer_forward.1} parent=1 // pred_region
      _
    $region13: #{mixer_forward.1} parent=1 // pred_fallthru
      _
    // Predicated region
    $region14: #{mixer_forward.1} parent=1 // pred_check
      _
    $region15: #{mixer_forward.1} parent=1 // pred_check_branch
      %18 = sbr.rel (0) target = $region17
    $region16: #{mixer_forward.1} parent=1 // pred_region
      %20 = vsyncadd [#allocation3], 0
      %s21 = sshll.u32 %s3, 4
      %s22 = int_to_ptr.hbm [resolvable:$true] %s21
      %s23 = sshll.u32 [#allocation2], 4
      %s24 = int_to_ptr.vmem [resolvable:$true] %s23
      %29 = dma.hbm_to_vmem [thread:$0]  %s22, 9216, %s24, [#allocation3], 128, 128, 8
    $region17: #{mixer_forward.1} parent=1 // pred_fallthru
      _
    // Predicated region
    $region18: #{mixer_forward.1} parent=1 // pred_check
      _
    $region19: #{mixer_forward.1} parent=1 // pred_check_branch
      %31 = sbr.rel (0) target = $region21
    $region20: #{mixer_forward.1} parent=1 // pred_region
      %33 = dma.done [#allocation3], 9216
    $region21: #{mixer_forward.1} parent=1 // pred_fallthru
      _
    %v35 = vld [vmem:[%s0] sm:$0xff]
    %v36 = vlaneseq
    %v37 = vshrl.u32 %v36, 7
    %v38 = vlaneseq
    %v39 = vand.u32 %v38, 127
    %v40 = vand.u32 %v37, 3
    %vm41 = vcmp.eq.s32.totalorder %v40, %v39
    %v42 = vsel %vm41, 1.0, 0.0
    %v43 = vld [vmem:[%s1] sm:$0xff]
    %v44 = vld [vmem:[%s1 + $0x8] sm:$0xff]
    %v45 = vld [vmem:[%s1 + $0x10] sm:$0xff]
    %v46 = vld [vmem:[%s1 + $0x18] sm:$0xff]
    %v47 = vld [vmem:[%s1 + $0x20] sm:$0xff]
    %v48 = vld [vmem:[%s1 + $0x28] sm:$0xff]
    %v49 = vld [vmem:[%s1 + $0x30] sm:$0xff]
    %v50 = vld [vmem:[%s1 + $0x38] sm:$0xff]
    %52 = vst [vmem:[#allocation1] ss:$2 sm:$0xff] %v43
    %v53 = vld.sshfl [vmem:[#allocation1] sm:$0xff pattern:$0x75316420]
    %v54 = vld.sshfl [vmem:[#allocation1 + $0x8] sm:$0xff pattern:$0x75316420]
    %vm55 = vcmask 31744
    %v57 = vsel %vm55, %v42, 0
    %vm59 = vcmask 1043456
    %v60 = vsel %vm59, %v53, 0
    %v62 = vsel %vm59, %v54, 0
    %64 = vmatpush.msra.mxu0 0.0
    %65 = vmatpush.msra.mxu0 0.0
    %66 = vmatpush.msra.mxu0 0.0
    %67 = vmatpush.msra.mxu0 0.0
    %68 = vmatpush.msra.mxu0 0.0
    %69 = vmatpush.msra.mxu0 0.0
    %70 = vmatpush.msra.mxu0 0.0
    %71 = vmatpush.msra.mxu0 0.0
    %72 = vmatpush.msra.mxu0 0.0
    %73 = vmatpush.msra.mxu0 0.0
    %74 = vmatpush.msra.mxu0 0.0
    %75 = vmatpush.msra.mxu0 0.0
    %76 = vmatpush.msra.mxu0 0.0
    %77 = vmatpush.msra.mxu0 0.0
    %78 = vmatpush.msra.mxu0 0.0
    %79 = vmatpush.msra.mxu0 %v60
    %80 = vmatmul.f32.gmra.mxu0 %v57
    %v81 = vpop.f32.mrf.mxu0
    %v82 = vadd.f32 0.0, %v81
    %83 = vdwg.mxu0
    %84 = vmatpush.msra.mxu0 0.0
    %85 = vmatpush.msra.mxu0 0.0
    %86 = vmatpush.msra.mxu0 0.0
    %87 = vmatpush.msra.mxu0 0.0
    %88 = vmatpush.msra.mxu0 0.0
    %89 = vmatpush.msra.mxu0 0.0
    %90 = vmatpush.msra.mxu0 0.0
    %91 = vmatpush.msra.mxu0 0.0
    %92 = vmatpush.msra.mxu0 0.0
    %93 = vmatpush.msra.mxu0 0.0
    %94 = vmatpush.msra.mxu0 0.0
    %95 = vmatpush.msra.mxu0 0.0
    %96 = vmatpush.msra.mxu0 0.0
    %97 = vmatpush.msra.mxu0 0.0
    %98 = vmatpush.msra.mxu0 0.0
    %99 = vmatpush.msra.mxu0 %v62
    %100 = vmatmul.f32.gmra.mxu0 %v57
    %v101 = vpop.f32.mrf.mxu0
    %v102 = vadd.f32 0.0, %v101
    %103 = vdwg.mxu0
    %105 = vst [vmem:[#allocation1] ss:$2 sm:$0xff] %v44
    %v106 = vld.sshfl [vmem:[#allocation1] sm:$0xff pattern:$0x75316420]
    %v107 = vld.sshfl [vmem:[#allocation1 + $0x8] sm:$0xff pattern:$0x75316420]
    %v108 = vsel %vm59, %v106, 0
    %v110 = vsel %vm59, %v107, 0
    %112 = vmatpush.msra.mxu0 0.0
    %113 = vmatpush.msra.mxu0 0.0
    %114 = vmatpush.msra.mxu0 0.0
    %115 = vmatpush.msra.mxu0 0.0
    %116 = vmatpush.msra.mxu0 0.0
    %117 = vmatpush.msra.mxu0 0.0
    %118 = vmatpush.msra.mxu0 0.0
    %119 = vmatpush.msra.mxu0 0.0
    %120 = vmatpush.msra.mxu0 0.0
    %121 = vmatpush.msra.mxu0 0.0
    %122 = vmatpush.msra.mxu0 0.0
    %123 = vmatpush.msra.mxu0 0.0
    %124 = vmatpush.msra.mxu0 0.0
    %125 = vmatpush.msra.mxu0 0.0
    %126 = vmatpush.msra.mxu0 0.0
    %127 = vmatpush.msra.mxu0 %v108
    %128 = vmatmul.f32.gmra.mxu0 %v57
    %v129 = vpop.f32.mrf.mxu0
    %v130 = vadd.f32 0.0, %v129
    %131 = vdwg.mxu0
    %132 = vmatpush.msra.mxu0 0.0
    %133 = vmatpush.msra.mxu0 0.0
    %134 = vmatpush.msra.mxu0 0.0
    %135 = vmatpush.msra.mxu0 0.0
    %136 = vmatpush.msra.mxu0 0.0
    %137 = vmatpush.msra.mxu0 0.0
    %138 = vmatpush.msra.mxu0 0.0
    %139 = vmatpush.msra.mxu0 0.0
    %140 = vmatpush.msra.mxu0 0.0
    %141 = vmatpush.msra.mxu0 0.0
    %142 = vmatpush.msra.mxu0 0.0
    %143 = vmatpush.msra.mxu0 0.0
    %144 = vmatpush.msra.mxu0 0.0
    %145 = vmatpush.msra.mxu0 0.0
    %146 = vmatpush.msra.mxu0 0.0
    %147 = vmatpush.msra.mxu0 %v110
    %148 = vmatmul.f32.gmra.mxu0 %v57
    %v149 = vpop.f32.mrf.mxu0
    %v150 = vadd.f32 0.0, %v149
    %151 = vdwg.mxu0
    %153 = vst [vmem:[#allocation1] ss:$2 sm:$0xff] %v45
    %v154 = vld.sshfl [vmem:[#allocation1] sm:$0xff pattern:$0x75316420]
    %v155 = vld.sshfl [vmem:[#allocation1 + $0x8] sm:$0xff pattern:$0x75316420]
    %v156 = vsel %vm59, %v154, 0
    %v158 = vsel %vm59, %v155, 0
    %160 = vmatpush.msra.mxu0 0.0
    %161 = vmatpush.msra.mxu0 0.0
    %162 = vmatpush.msra.mxu0 0.0
    %163 = vmatpush.msra.mxu0 0.0
    %164 = vmatpush.msra.mxu0 0.0
    %165 = vmatpush.msra.mxu0 0.0
    %166 = vmatpush.msra.mxu0 0.0
    %167 = vmatpush.msra.mxu0 0.0
    %168 = vmatpush.msra.mxu0 0.0
    %169 = vmatpush.msra.mxu0 0.0
    %170 = vmatpush.msra.mxu0 0.0
    %171 = vmatpush.msra.mxu0 0.0
    %172 = vmatpush.msra.mxu0 0.0
    %173 = vmatpush.msra.mxu0 0.0
    %174 = vmatpush.msra.mxu0 0.0
    %175 = vmatpush.msra.mxu0 %v156
    %176 = vmatmul.f32.gmra.mxu0 %v57
    %v177 = vpop.f32.mrf.mxu0
    %v178 = vadd.f32 0.0, %v177
    %179 = vdwg.mxu0
    %180 = vmatpush.msra.mxu0 0.0
    %181 = vmatpush.msra.mxu0 0.0
    %182 = vmatpush.msra.mxu0 0.0
    %183 = vmatpush.msra.mxu0 0.0
    %184 = vmatpush.msra.mxu0 0.0
    %185 = vmatpush.msra.mxu0 0.0
    %186 = vmatpush.msra.mxu0 0.0
    %187 = vmatpush.msra.mxu0 0.0
    %188 = vmatpush.msra.mxu0 0.0
    %189 = vmatpush.msra.mxu0 0.0
    %190 = vmatpush.msra.mxu0 0.0
    %191 = vmatpush.msra.mxu0 0.0
    %192 = vmatpush.msra.mxu0 0.0
    %193 = vmatpush.msra.mxu0 0.0
    %194 = vmatpush.msra.mxu0 0.0
    %195 = vmatpush.msra.mxu0 %v158
    %196 = vmatmul.f32.gmra.mxu0 %v57
    %v197 = vpop.f32.mrf.mxu0
    %v198 = vadd.f32 0.0, %v197
    %199 = vdwg.mxu0
    %201 = vst [vmem:[#allocation1] ss:$2 sm:$0xff] %v46
    %v202 = vld.sshfl [vmem:[#allocation1] sm:$0xff pattern:$0x75316420]
    %v203 = vld.sshfl [vmem:[#allocation1 + $0x8] sm:$0xff pattern:$0x75316420]
    %v204 = vsel %vm59, %v202, 0
    %v206 = vsel %vm59, %v203, 0
    %208 = vmatpush.msra.mxu0 0.0
    %209 = vmatpush.msra.mxu0 0.0
    %210 = vmatpush.msra.mxu0 0.0
    %211 = vmatpush.msra.mxu0 0.0
    %212 = vmatpush.msra.mxu0 0.0
    %213 = vmatpush.msra.mxu0 0.0
    %214 = vmatpush.msra.mxu0 0.0
    %215 = vmatpush.msra.mxu0 0.0
    %216 = vmatpush.msra.mxu0 0.0
    %217 = vmatpush.msra.mxu0 0.0
    %218 = vmatpush.msra.mxu0 0.0
    %219 = vmatpush.msra.mxu0 0.0
    %220 = vmatpush.msra.mxu0 0.0
    %221 = vmatpush.msra.mxu0 0.0
    %222 = vmatpush.msra.mxu0 0.0
    %223 = vmatpush.msra.mxu0 %v204
    %224 = vmatmul.f32.gmra.mxu0 %v57
    %v225 = vpop.f32.mrf.mxu0
    %v226 = vadd.f32 0.0, %v225
    %227 = vdwg.mxu0
    %228 = vmatpush.msra.mxu0 0.0
    %229 = vmatpush.msra.mxu0 0.0
    %230 = vmatpush.msra.mxu0 0.0
    %231 = vmatpush.msra.mxu0 0.0
    %232 = vmatpush.msra.mxu0 0.0
    %233 = vmatpush.msra.mxu0 0.0
    %234 = vmatpush.msra.mxu0 0.0
    %235 = vmatpush.msra.mxu0 0.0
    %236 = vmatpush.msra.mxu0 0.0
    %237 = vmatpush.msra.mxu0 0.0
    %238 = vmatpush.msra.mxu0 0.0
    %239 = vmatpush.msra.mxu0 0.0
    %240 = vmatpush.msra.mxu0 0.0
    %241 = vmatpush.msra.mxu0 0.0
    %242 = vmatpush.msra.mxu0 0.0
    %243 = vmatpush.msra.mxu0 %v206
    %244 = vmatmul.f32.gmra.mxu0 %v57
    %v245 = vpop.f32.mrf.mxu0
    %v246 = vadd.f32 0.0, %v245
    %247 = vdwg.mxu0
    %249 = vst [vmem:[#allocation1] ss:$2 sm:$0xff] %v47
    %v250 = vld.sshfl [vmem:[#allocation1] sm:$0xff pattern:$0x75316420]
    %v251 = vld.sshfl [vmem:[#allocation1 + $0x8] sm:$0xff pattern:$0x75316420]
    %v252 = vsel %vm59, %v250, 0
    %v254 = vsel %vm59, %v251, 0
    %256 = vmatpush.msra.mxu0 0.0
    %257 = vmatpush.msra.mxu0 0.0
    %258 = vmatpush.msra.mxu0 0.0
    %259 = vmatpush.msra.mxu0 0.0
    %260 = vmatpush.msra.mxu0 0.0
    %261 = vmatpush.msra.mxu0 0.0
    %262 = vmatpush.msra.mxu0 0.0
    %263 = vmatpush.msra.mxu0 0.0
    %264 = vmatpush.msra.mxu0 0.0
    %265 = vmatpush.msra.mxu0 0.0
    %266 = vmatpush.msra.mxu0 0.0
    %267 = vmatpush.msra.mxu0 0.0
    %268 = vmatpush.msra.mxu0 0.0
    %269 = vmatpush.msra.mxu0 0.0
    %270 = vmatpush.msra.mxu0 0.0
    %271 = vmatpush.msra.mxu0 %v252
    %272 = vmatmul.f32.gmra.mxu0 %v57
    %v273 = vpop.f32.mrf.mxu0
    %v274 = vadd.f32 0.0, %v273
    %275 = vdwg.mxu0
    %276 = vmatpush.msra.mxu0 0.0
    %277 = vmatpush.msra.mxu0 0.0
    %278 = vmatpush.msra.mxu0 0.0
    %279 = vmatpush.msra.mxu0 0.0
    %280 = vmatpush.msra.mxu0 0.0
    %281 = vmatpush.msra.mxu0 0.0
    %282 = vmatpush.msra.mxu0 0.0
    %283 = vmatpush.msra.mxu0 0.0
    %284 = vmatpush.msra.mxu0 0.0
    %285 = vmatpush.msra.mxu0 0.0
    %286 = vmatpush.msra.mxu0 0.0
    %287 = vmatpush.msra.mxu0 0.0
    %288 = vmatpush.msra.mxu0 0.0
    %289 = vmatpush.msra.mxu0 0.0
    %290 = vmatpush.msra.mxu0 0.0
    %291 = vmatpush.msra.mxu0 %v254
    %292 = vmatmul.f32.gmra.mxu0 %v57
    %v293 = vpop.f32.mrf.mxu0
    %v294 = vadd.f32 0.0, %v293
    %295 = vdwg.mxu0
    %297 = vst [vmem:[#allocation1] ss:$2 sm:$0xff] %v48
    %v298 = vld.sshfl [vmem:[#allocation1] sm:$0xff pattern:$0x75316420]
    %v299 = vld.sshfl [vmem:[#allocation1 + $0x8] sm:$0xff pattern:$0x75316420]
    %v300 = vsel %vm59, %v298, 0
    %v302 = vsel %vm59, %v299, 0
    %304 = vmatpush.msra.mxu0 0.0
    %305 = vmatpush.msra.mxu0 0.0
    %306 = vmatpush.msra.mxu0 0.0
    %307 = vmatpush.msra.mxu0 0.0
    %308 = vmatpush.msra.mxu0 0.0
    %309 = vmatpush.msra.mxu0 0.0
    %310 = vmatpush.msra.mxu0 0.0
    %311 = vmatpush.msra.mxu0 0.0
    %312 = vmatpush.msra.mxu0 0.0
    %313 = vmatpush.msra.mxu0 0.0
    %314 = vmatpush.msra.mxu0 0.0
    %315 = vmatpush.msra.mxu0 0.0
    %316 = vmatpush.msra.mxu0 0.0
    %317 = vmatpush.msra.mxu0 0.0
    %318 = vmatpush.msra.mxu0 0.0
    %319 = vmatpush.msra.mxu0 %v300
    %320 = vmatmul.f32.gmra.mxu0 %v57
    %v321 = vpop.f32.mrf.mxu0
    %v322 = vadd.f32 0.0, %v321
    %323 = vdwg.mxu0
    %324 = vmatpush.msra.mxu0 0.0
    %325 = vmatpush.msra.mxu0 0.0
    %326 = vmatpush.msra.mxu0 0.0
    %327 = vmatpush.msra.mxu0 0.0
    %328 = vmatpush.msra.mxu0 0.0
    %329 = vmatpush.msra.mxu0 0.0
    %330 = vmatpush.msra.mxu0 0.0
    %331 = vmatpush.msra.mxu0 0.0
    %332 = vmatpush.msra.mxu0 0.0
    %333 = vmatpush.msra.mxu0 0.0
    %334 = vmatpush.msra.mxu0 0.0
    %335 = vmatpush.msra.mxu0 0.0
    %336 = vmatpush.msra.mxu0 0.0
    %337 = vmatpush.msra.mxu0 0.0
    %338 = vmatpush.msra.mxu0 0.0
    %339 = vmatpush.msra.mxu0 %v302
    %340 = vmatmul.f32.gmra.mxu0 %v57
    %v341 = vpop.f32.mrf.mxu0
    %v342 = vadd.f32 0.0, %v341
    %343 = vdwg.mxu0
    %345 = vst [vmem:[#allocation1] ss:$2 sm:$0xff] %v49
    %v346 = vld.sshfl [vmem:[#allocation1] sm:$0xff pattern:$0x75316420]
    %v347 = vld.sshfl [vmem:[#allocation1 + $0x8] sm:$0xff pattern:$0x75316420]
    %v348 = vsel %vm59, %v346, 0
    %v350 = vsel %vm59, %v347, 0
    %352 = vmatpush.msra.mxu0 0.0
    %353 = vmatpush.msra.mxu0 0.0
    %354 = vmatpush.msra.mxu0 0.0
    %355 = vmatpush.msra.mxu0 0.0
    %356 = vmatpush.msra.mxu0 0.0
    %357 = vmatpush.msra.mxu0 0.0
    %358 = vmatpush.msra.mxu0 0.0
    %359 = vmatpush.msra.mxu0 0.0
    %360 = vmatpush.msra.mxu0 0.0
    %361 = vmatpush.msra.mxu0 0.0
    %362 = vmatpush.msra.mxu0 0.0
    %363 = vmatpush.msra.mxu0 0.0
    %364 = vmatpush.msra.mxu0 0.0
    %365 = vmatpush.msra.mxu0 0.0
    %366 = vmatpush.msra.mxu0 0.0
    %367 = vmatpush.msra.mxu0 %v348
    %368 = vmatmul.f32.gmra.mxu0 %v57
    %v369 = vpop.f32.mrf.mxu0
    %v370 = vadd.f32 0.0, %v369
    %371 = vdwg.mxu0
    %372 = vmatpush.msra.mxu0 0.0
    %373 = vmatpush.msra.mxu0 0.0
    %374 = vmatpush.msra.mxu0 0.0
    %375 = vmatpush.msra.mxu0 0.0
    %376 = vmatpush.msra.mxu0 0.0
    %377 = vmatpush.msra.mxu0 0.0
    %378 = vmatpush.msra.mxu0 0.0
    %379 = vmatpush.msra.mxu0 0.0
    %380 = vmatpush.msra.mxu0 0.0
    %381 = vmatpush.msra.mxu0 0.0
    %382 = vmatpush.msra.mxu0 0.0
    %383 = vmatpush.msra.mxu0 0.0
    %384 = vmatpush.msra.mxu0 0.0
    %385 = vmatpush.msra.mxu0 0.0
    %386 = vmatpush.msra.mxu0 0.0
    %387 = vmatpush.msra.mxu0 %v350
    %388 = vmatmul.f32.gmra.mxu0 %v57
    %v389 = vpop.f32.mrf.mxu0
    %v390 = vadd.f32 0.0, %v389
    %391 = vdwg.mxu0
    %393 = vst [vmem:[#allocation1] ss:$2 sm:$0xff] %v50
    %v394 = vld.sshfl [vmem:[#allocation1] sm:$0xff pattern:$0x75316420]
    %v395 = vld.sshfl [vmem:[#allocation1 + $0x8] sm:$0xff pattern:$0x75316420]
    %v396 = vsel %vm59, %v394, 0
    %v398 = vsel %vm59, %v395, 0
    %400 = vmatpush.msra.mxu0 0.0
    %401 = vmatpush.msra.mxu0 0.0
    %402 = vmatpush.msra.mxu0 0.0
    %403 = vmatpush.msra.mxu0 0.0
    %404 = vmatpush.msra.mxu0 0.0
    %405 = vmatpush.msra.mxu0 0.0
    %406 = vmatpush.msra.mxu0 0.0
    %407 = vmatpush.msra.mxu0 0.0
    %408 = vmatpush.msra.mxu0 0.0
    %409 = vmatpush.msra.mxu0 0.0
    %410 = vmatpush.msra.mxu0 0.0
    %411 = vmatpush.msra.mxu0 0.0
    %412 = vmatpush.msra.mxu0 0.0
    %413 = vmatpush.msra.mxu0 0.0
    %414 = vmatpush.msra.mxu0 0.0
    %415 = vmatpush.msra.mxu0 %v396
    %416 = vmatmul.f32.gmra.mxu0 %v57
    %v417 = vpop.f32.mrf.mxu0
    %v418 = vadd.f32 0.0, %v417
    %419 = vdwg.mxu0
    %420 = vmatpush.msra.mxu0 0.0
    %421 = vmatpush.msra.mxu0 0.0
    %422 = vmatpush.msra.mxu0 0.0
    %423 = vmatpush.msra.mxu0 0.0
    %424 = vmatpush.msra.mxu0 0.0
    %425 = vmatpush.msra.mxu0 0.0
    %426 = vmatpush.msra.mxu0 0.0
    %427 = vmatpush.msra.mxu0 0.0
    %428 = vmatpush.msra.mxu0 0.0
    %429 = vmatpush.msra.mxu0 0.0
    %430 = vmatpush.msra.mxu0 0.0
    %431 = vmatpush.msra.mxu0 0.0
    %432 = vmatpush.msra.mxu0 0.0
    %433 = vmatpush.msra.mxu0 0.0
    %434 = vmatpush.msra.mxu0 0.0
    %435 = vmatpush.msra.mxu0 %v398
    %436 = vmatmul.f32.gmra.mxu0 %v57
    %v437 = vpop.f32.mrf.mxu0
    %v438 = vadd.f32 0.0, %v437
    %439 = vdwg.mxu0
    %v440 = vshra.s32 %v37, 2
    %v441 = vshra.s32 %v39, 2
    %vm442 = vcmp.eq.s32.totalorder %v440, %v441
    %v443 = vsel %vm442, 0.0, -1e+09
    %v444 = vld [vmem:[%s2] sm:$0x1]
    %v445 = vld [vmem:[%s2 + $0x1] sm:$0x1]
    %v446 = vld [vmem:[%s2 + $0x2] sm:$0x1]
    %v447 = vld [vmem:[%s2 + $0x3] sm:$0x1]
    %v448 = vld [vmem:[%s2 + $0x4] sm:$0x1]
    %v449 = vld [vmem:[%s2 + $0x5] sm:$0x1]
    %v450 = vld [vmem:[#allocation2] sm:$0xff]
    %v451 = vld [vmem:[#allocation2 + $0x8] sm:$0xff]
    %v452 = vld [vmem:[#allocation2 + $0x10] sm:$0xff]
    %v453 = vld [vmem:[#allocation2 + $0x18] sm:$0xff]
    %v454 = vld [vmem:[#allocation2 + $0x20] sm:$0xff]
    %v455 = vld [vmem:[#allocation2 + $0x28] sm:$0xff]
    %v456 = vld [vmem:[#allocation2 + $0x30] sm:$0xff]
    %v457 = vld [vmem:[#allocation2 + $0x38] sm:$0xff]
    %v458 = vld [vmem:[#allocation2 + $0x40] sm:$0xff]
    %v459 = vld [vmem:[#allocation2 + $0x48] sm:$0xff]
    %v460 = vld [vmem:[#allocation2 + $0x50] sm:$0xff]
    %v461 = vld [vmem:[#allocation2 + $0x58] sm:$0xff]
    %v462 = vld [vmem:[#allocation2 + $0x60] sm:$0xff]
    %v463 = vld [vmem:[#allocation2 + $0x68] sm:$0xff]
    %v464 = vld [vmem:[#allocation2 + $0x70] sm:$0xff]
    %v465 = vld [vmem:[#allocation2 + $0x78] sm:$0xff]
    %v466 = vld [vmem:[#allocation2 + $0x80] sm:$0xff]
    %v467 = vld [vmem:[#allocation2 + $0x88] sm:$0xff]
    %v468 = vld [vmem:[#allocation2 + $0x90] sm:$0xff]
    %v469 = vld [vmem:[#allocation2 + $0x98] sm:$0xff]
    %v470 = vld [vmem:[#allocation2 + $0xa0] sm:$0xff]
    %v471 = vld [vmem:[#allocation2 + $0xa8] sm:$0xff]
    %v472 = vld [vmem:[#allocation2 + $0xb0] sm:$0xff]
    %v473 = vld [vmem:[#allocation2 + $0xb8] sm:$0xff]
    %v474 = vld [vmem:[#allocation2 + $0xc0] sm:$0xff]
    %v475 = vld [vmem:[#allocation2 + $0xc8] sm:$0xff]
    %v476 = vld [vmem:[#allocation2 + $0xd0] sm:$0xff]
    %v477 = vld [vmem:[#allocation2 + $0xd8] sm:$0xff]
    %v478 = vld [vmem:[#allocation2 + $0xe0] sm:$0xff]
    %v479 = vld [vmem:[#allocation2 + $0xe8] sm:$0xff]
    %v480 = vld [vmem:[#allocation2 + $0xf0] sm:$0xff]
    %v481 = vld [vmem:[#allocation2 + $0xf8] sm:$0xff]
    %s482 = scalar_lea.vmem [#allocation2], 256
    %v483 = vld [vmem:[%s482] sm:$0xf]
    %v484 = vld [vmem:[%s482 + $0x8] sm:$0xf]
    %v485 = vld [vmem:[%s482 + $0x10] sm:$0xf]
    %v486 = vld [vmem:[%s482 + $0x18] sm:$0xf]
    %v487 = vld [vmem:[%s482 + $0x4] sm:$0xf]
    %v488 = vld [vmem:[%s482 + $0xc] sm:$0xf]
    %v489 = vld [vmem:[%s482 + $0x14] sm:$0xf]
    %v490 = vld [vmem:[%s482 + $0x1c] sm:$0xf]
    %vm491 = vcmask 261120
    %v492 = vsel %vm491, %v35, 0.0
    %493 = vadd.xlane.f32.xlu0 %v492
    %v494 = vpop.xlane.xlu0 %493
    %v495 = vrcp.pop 32.0
    %v496 = vmul.f32 32.0, %v495
    %v497 = vsub.f32 1.0, %v496
    %v498 = vmul.f32 %v495, %v497
    %v499 = vadd.f32 %v495, %v498
    %vm500 = vweird.f32 %v495
    %v501 = vsel %vm500, %v495, %v499
    %v502 = vmul.f32 %v494, %v501
    %v503 = vsub.f32 %v35, %v502
    %v504 = vmul.f32 %v503, %v503
    %v505 = vsel %vm491, %v504, 0.0
    %506 = vadd.xlane.f32.xlu0 %v505
    %v507 = vpop.xlane.xlu0 %506
    %v508 = vmul.f32 %v507, %v501
    %v509 = vadd.f32 %v508, 1e-05
    %v510 = vrsqrt.pop %v509
    %v511 = vmul.f32 %v510, %v509
    %v512 = vmul.f32 %v511, %v510
    %v513 = vmul.f32 0.5, %v512
    %v514 = vsub.f32 1.5, %v513
    %v515 = vmul.f32 %v510, %v514
    %vm516 = vweird.f32 %v509
    %vm517 = vweird.f32 %v510
    %vm518 = vmor %vm516, %vm517
    %v519 = vsel %vm518, %v510, %v515
    %v520 = vmul.f32 %v503, %v519
    %v521 = vperm.slane %v444, 0
    %v522 = vmul.f32 %v520, %v521
    %v523 = vperm.slane %v445, 0
    %v524 = vadd.f32 %v522, %v523
    %v525 = vpack.c.bf16 %v524, %v524
    %v530 = vunpack.c.l.b16 %v450
    %v531 = vunpack.c.h.b16 %v450
    %v532 = vunpack.c.l.b16 %v451
    %v533 = vunpack.c.h.b16 %v451
    %v534 = vunpack.c.l.b16 %v452
    %v535 = vunpack.c.h.b16 %v452
    %v536 = vunpack.c.l.b16 %v453
    %v537 = vunpack.c.h.b16 %v453
    %v538 = vpack.c.b16 %v532, %v530
    %v539 = vpack.c.b16 %v533, %v531
    %v540 = vpack.c.b16 %v536, %v534
    %v541 = vpack.c.b16 %v537, %v535
    %v547 = vsel %vm491, %v525, 0
    %549 = vmatpush.bf16.msra.mxu0 0
    %550 = vmatpush.bf16.msra.mxu0 0
    %551 = vmatpush.bf16.msra.mxu0 0
    %552 = vmatpush.bf16.msra.mxu0 0
    %553 = vmatpush.bf16.msra.mxu0 0
    %554 = vmatpush.bf16.msra.mxu0 0
    %555 = vmatpush.bf16.msra.mxu0 %v540
    %556 = vmatpush.bf16.msra.mxu0 %v538
    %557 = vmatmul.bf16.gmra.mxu0 %v547
    %v558 = vpop.f32.mrf.mxu0
    %v559 = vadd.f32 %v82, %v558
    %v560 = vpop.f32.mrf.mxu0
    %561 = vdwg.mxu0
    %562 = vmatpush.bf16.msra.mxu0 0
    %563 = vmatpush.bf16.msra.mxu0 0
    %564 = vmatpush.bf16.msra.mxu0 0
    %565 = vmatpush.bf16.msra.mxu0 0
    %566 = vmatpush.bf16.msra.mxu0 0
    %567 = vmatpush.bf16.msra.mxu0 0
    %568 = vmatpush.bf16.msra.mxu0 %v541
    %569 = vmatpush.bf16.msra.mxu0 %v539
    %570 = vmatmul.bf16.gmra.mxu0 %v547
    %v571 = vpop.f32.mrf.mxu0
    %v572 = vadd.f32 %v102, %v571
    %v573 = vpop.f32.mrf.mxu0
    %574 = vdwg.mxu0
    %v579 = vunpack.c.l.b16 %v454
    %v580 = vunpack.c.h.b16 %v454
    %v581 = vunpack.c.l.b16 %v455
    %v582 = vunpack.c.h.b16 %v455
    %v583 = vunpack.c.l.b16 %v456
    %v584 = vunpack.c.h.b16 %v456
    %v585 = vunpack.c.l.b16 %v457
    %v586 = vunpack.c.h.b16 %v457
    %v587 = vpack.c.b16 %v581, %v579
    %v588 = vpack.c.b16 %v582, %v580
    %v589 = vpack.c.b16 %v585, %v583
    %v590 = vpack.c.b16 %v586, %v584
    %595 = vmatpush.bf16.msra.mxu0 0
    %596 = vmatpush.bf16.msra.mxu0 0
    %597 = vmatpush.bf16.msra.mxu0 0
    %598 = vmatpush.bf16.msra.mxu0 0
    %599 = vmatpush.bf16.msra.mxu0 0
    %600 = vmatpush.bf16.msra.mxu0 0
    %601 = vmatpush.bf16.msra.mxu0 %v589
    %602 = vmatpush.bf16.msra.mxu0 %v587
    %603 = vmatmul.bf16.gmra.mxu0 %v547
    %v604 = vpop.f32.mrf.mxu0
    %v605 = vadd.f32 %v130, %v604
    %v606 = vpop.f32.mrf.mxu0
    %607 = vdwg.mxu0
    %608 = vmatpush.bf16.msra.mxu0 0
    %609 = vmatpush.bf16.msra.mxu0 0
    %610 = vmatpush.bf16.msra.mxu0 0
    %611 = vmatpush.bf16.msra.mxu0 0
    %612 = vmatpush.bf16.msra.mxu0 0
    %613 = vmatpush.bf16.msra.mxu0 0
    %614 = vmatpush.bf16.msra.mxu0 %v590
    %615 = vmatpush.bf16.msra.mxu0 %v588
    %616 = vmatmul.bf16.gmra.mxu0 %v547
    %v617 = vpop.f32.mrf.mxu0
    %v618 = vadd.f32 %v150, %v617
    %v619 = vpop.f32.mrf.mxu0
    %620 = vdwg.mxu0
    %v625 = vunpack.c.l.b16 %v458
    %v626 = vunpack.c.h.b16 %v458
    %v627 = vunpack.c.l.b16 %v459
    %v628 = vunpack.c.h.b16 %v459
    %v629 = vunpack.c.l.b16 %v460
    %v630 = vunpack.c.h.b16 %v460
    %v631 = vunpack.c.l.b16 %v461
    %v632 = vunpack.c.h.b16 %v461
    %v633 = vpack.c.b16 %v627, %v625
    %v634 = vpack.c.b16 %v628, %v626
    %v635 = vpack.c.b16 %v631, %v629
    %v636 = vpack.c.b16 %v632, %v630
    %641 = vmatpush.bf16.msra.mxu0 0
    %642 = vmatpush.bf16.msra.mxu0 0
    %643 = vmatpush.bf16.msra.mxu0 0
    %644 = vmatpush.bf16.msra.mxu0 0
    %645 = vmatpush.bf16.msra.mxu0 0
    %646 = vmatpush.bf16.msra.mxu0 0
    %647 = vmatpush.bf16.msra.mxu0 %v635
    %648 = vmatpush.bf16.msra.mxu0 %v633
    %649 = vmatmul.bf16.gmra.mxu0 %v547
    %v650 = vpop.f32.mrf.mxu0
    %v651 = vadd.f32 %v178, %v650
    %v652 = vpop.f32.mrf.mxu0
    %653 = vdwg.mxu0
    %654 = vmatpush.bf16.msra.mxu0 0
    %655 = vmatpush.bf16.msra.mxu0 0
    %656 = vmatpush.bf16.msra.mxu0 0
    %657 = vmatpush.bf16.msra.mxu0 0
    %658 = vmatpush.bf16.msra.mxu0 0
    %659 = vmatpush.bf16.msra.mxu0 0
    %660 = vmatpush.bf16.msra.mxu0 %v636
    %661 = vmatpush.bf16.msra.mxu0 %v634
    %662 = vmatmul.bf16.gmra.mxu0 %v547
    %v663 = vpop.f32.mrf.mxu0
    %v664 = vadd.f32 %v198, %v663
    %v665 = vpop.f32.mrf.mxu0
    %666 = vdwg.mxu0
    %v671 = vunpack.c.l.b16 %v462
    %v672 = vunpack.c.h.b16 %v462
    %v673 = vunpack.c.l.b16 %v463
    %v674 = vunpack.c.h.b16 %v463
    %v675 = vunpack.c.l.b16 %v464
    %v676 = vunpack.c.h.b16 %v464
    %v677 = vunpack.c.l.b16 %v465
    %v678 = vunpack.c.h.b16 %v465
    %v679 = vpack.c.b16 %v673, %v671
    %v680 = vpack.c.b16 %v674, %v672
    %v681 = vpack.c.b16 %v677, %v675
    %v682 = vpack.c.b16 %v678, %v676
    %687 = vmatpush.bf16.msra.mxu0 0
    %688 = vmatpush.bf16.msra.mxu0 0
    %689 = vmatpush.bf16.msra.mxu0 0
    %690 = vmatpush.bf16.msra.mxu0 0
    %691 = vmatpush.bf16.msra.mxu0 0
    %692 = vmatpush.bf16.msra.mxu0 0
    %693 = vmatpush.bf16.msra.mxu0 %v681
    %694 = vmatpush.bf16.msra.mxu0 %v679
    %695 = vmatmul.bf16.gmra.mxu0 %v547
    %v696 = vpop.f32.mrf.mxu0
    %v697 = vadd.f32 %v226, %v696
    %v698 = vpop.f32.mrf.mxu0
    %699 = vdwg.mxu0
    %700 = vmatpush.bf16.msra.mxu0 0
    %701 = vmatpush.bf16.msra.mxu0 0
    %702 = vmatpush.bf16.msra.mxu0 0
    %703 = vmatpush.bf16.msra.mxu0 0
    %704 = vmatpush.bf16.msra.mxu0 0
    %705 = vmatpush.bf16.msra.mxu0 0
    %706 = vmatpush.bf16.msra.mxu0 %v682
    %707 = vmatpush.bf16.msra.mxu0 %v680
    %708 = vmatmul.bf16.gmra.mxu0 %v547
    %v709 = vpop.f32.mrf.mxu0
    %v710 = vadd.f32 %v246, %v709
    %v711 = vpop.f32.mrf.mxu0
    %712 = vdwg.mxu0
    %v717 = vunpack.c.l.b16 %v466
    %v718 = vunpack.c.h.b16 %v466
    %v719 = vunpack.c.l.b16 %v467
    %v720 = vunpack.c.h.b16 %v467
    %v721 = vunpack.c.l.b16 %v468
    %v722 = vunpack.c.h.b16 %v468
    %v723 = vunpack.c.l.b16 %v469
    %v724 = vunpack.c.h.b16 %v469
    %v725 = vpack.c.b16 %v719, %v717
    %v726 = vpack.c.b16 %v720, %v718
    %v727 = vpack.c.b16 %v723, %v721
    %v728 = vpack.c.b16 %v724, %v722
    %733 = vmatpush.bf16.msra.mxu0 0
    %734 = vmatpush.bf16.msra.mxu0 0
    %735 = vmatpush.bf16.msra.mxu0 0
    %736 = vmatpush.bf16.msra.mxu0 0
    %737 = vmatpush.bf16.msra.mxu0 0
    %738 = vmatpush.bf16.msra.mxu0 0
    %739 = vmatpush.bf16.msra.mxu0 %v727
    %740 = vmatpush.bf16.msra.mxu0 %v725
    %741 = vmatmul.bf16.gmra.mxu0 %v547
    %v742 = vpop.f32.mrf.mxu0
    %v743 = vadd.f32 %v274, %v742
    %v744 = vpop.f32.mrf.mxu0
    %745 = vdwg.mxu0
    %746 = vmatpush.bf16.msra.mxu0 0
    %747 = vmatpush.bf16.msra.mxu0 0
    %748 = vmatpush.bf16.msra.mxu0 0
    %749 = vmatpush.bf16.msra.mxu0 0
    %750 = vmatpush.bf16.msra.mxu0 0
    %751 = vmatpush.bf16.msra.mxu0 0
    %752 = vmatpush.bf16.msra.mxu0 %v728
    %753 = vmatpush.bf16.msra.mxu0 %v726
    %754 = vmatmul.bf16.gmra.mxu0 %v547
    %v755 = vpop.f32.mrf.mxu0
    %v756 = vadd.f32 %v294, %v755
    %v757 = vpop.f32.mrf.mxu0
    %758 = vdwg.mxu0
    %v763 = vunpack.c.l.b16 %v470
    %v764 = vunpack.c.h.b16 %v470
    %v765 = vunpack.c.l.b16 %v471
    %v766 = vunpack.c.h.b16 %v471
    %v767 = vunpack.c.l.b16 %v472
    %v768 = vunpack.c.h.b16 %v472
    %v769 = vunpack.c.l.b16 %v473
    %v770 = vunpack.c.h.b16 %v473
    %v771 = vpack.c.b16 %v765, %v763
    %v772 = vpack.c.b16 %v766, %v764
    %v773 = vpack.c.b16 %v769, %v767
    %v774 = vpack.c.b16 %v770, %v768
    %779 = vmatpush.bf16.msra.mxu0 0
    %780 = vmatpush.bf16.msra.mxu0 0
    %781 = vmatpush.bf16.msra.mxu0 0
    %782 = vmatpush.bf16.msra.mxu0 0
    %783 = vmatpush.bf16.msra.mxu0 0
    %784 = vmatpush.bf16.msra.mxu0 0
    %785 = vmatpush.bf16.msra.mxu0 %v773
    %786 = vmatpush.bf16.msra.mxu0 %v771
    %787 = vmatmul.bf16.gmra.mxu0 %v547
    %v788 = vpop.f32.mrf.mxu0
    %v789 = vadd.f32 %v322, %v788
    %v790 = vpop.f32.mrf.mxu0
    %791 = vdwg.mxu0
    %792 = vmatpush.bf16.msra.mxu0 0
    %793 = vmatpush.bf16.msra.mxu0 0
    %794 = vmatpush.bf16.msra.mxu0 0
    %795 = vmatpush.bf16.msra.mxu0 0
    %796 = vmatpush.bf16.msra.mxu0 0
    %797 = vmatpush.bf16.msra.mxu0 0
    %798 = vmatpush.bf16.msra.mxu0 %v774
    %799 = vmatpush.bf16.msra.mxu0 %v772
    %800 = vmatmul.bf16.gmra.mxu0 %v547
    %v801 = vpop.f32.mrf.mxu0
    %v802 = vadd.f32 %v342, %v801
    %v803 = vpop.f32.mrf.mxu0
    %804 = vdwg.mxu0
    %v809 = vunpack.c.l.b16 %v474
    %v810 = vunpack.c.h.b16 %v474
    %v811 = vunpack.c.l.b16 %v475
    %v812 = vunpack.c.h.b16 %v475
    %v813 = vunpack.c.l.b16 %v476
    %v814 = vunpack.c.h.b16 %v476
    %v815 = vunpack.c.l.b16 %v477
    %v816 = vunpack.c.h.b16 %v477
    %v817 = vpack.c.b16 %v811, %v809
    %v818 = vpack.c.b16 %v812, %v810
    %v819 = vpack.c.b16 %v815, %v813
    %v820 = vpack.c.b16 %v816, %v814
    %825 = vmatpush.bf16.msra.mxu0 0
    %826 = vmatpush.bf16.msra.mxu0 0
    %827 = vmatpush.bf16.msra.mxu0 0
    %828 = vmatpush.bf16.msra.mxu0 0
    %829 = vmatpush.bf16.msra.mxu0 0
    %830 = vmatpush.bf16.msra.mxu0 0
    %831 = vmatpush.bf16.msra.mxu0 %v819
    %832 = vmatpush.bf16.msra.mxu0 %v817
    %833 = vmatmul.bf16.gmra.mxu0 %v547
    %v834 = vpop.f32.mrf.mxu0
    %v835 = vadd.f32 %v370, %v834
    %v836 = vpop.f32.mrf.mxu0
    %837 = vdwg.mxu0
    %838 = vmatpush.bf16.msra.mxu0 0
    %839 = vmatpush.bf16.msra.mxu0 0
    %840 = vmatpush.bf16.msra.mxu0 0
    %841 = vmatpush.bf16.msra.mxu0 0
    %842 = vmatpush.bf16.msra.mxu0 0
    %843 = vmatpush.bf16.msra.mxu0 0
    %844 = vmatpush.bf16.msra.mxu0 %v820
    %845 = vmatpush.bf16.msra.mxu0 %v818
    %846 = vmatmul.bf16.gmra.mxu0 %v547
    %v847 = vpop.f32.mrf.mxu0
    %v848 = vadd.f32 %v390, %v847
    %v849 = vpop.f32.mrf.mxu0
    %850 = vdwg.mxu0
    %v855 = vunpack.c.l.b16 %v478
    %v856 = vunpack.c.h.b16 %v478
    %v857 = vunpack.c.l.b16 %v479
    %v858 = vunpack.c.h.b16 %v479
    %v859 = vunpack.c.l.b16 %v480
    %v860 = vunpack.c.h.b16 %v480
    %v861 = vunpack.c.l.b16 %v481
    %v862 = vunpack.c.h.b16 %v481
    %v863 = vpack.c.b16 %v857, %v855
    %v864 = vpack.c.b16 %v858, %v856
    %v865 = vpack.c.b16 %v861, %v859
    %v866 = vpack.c.b16 %v862, %v860
    %871 = vmatpush.bf16.msra.mxu0 0
    %872 = vmatpush.bf16.msra.mxu0 0
    %873 = vmatpush.bf16.msra.mxu0 0
    %874 = vmatpush.bf16.msra.mxu0 0
    %875 = vmatpush.bf16.msra.mxu0 0
    %876 = vmatpush.bf16.msra.mxu0 0
    %877 = vmatpush.bf16.msra.mxu0 %v865
    %878 = vmatpush.bf16.msra.mxu0 %v863
    %879 = vmatmul.bf16.gmra.mxu0 %v547
    %v880 = vpop.f32.mrf.mxu0
    %v881 = vadd.f32 %v418, %v880
    %v882 = vpop.f32.mrf.mxu0
    %883 = vdwg.mxu0
    %884 = vmatpush.bf16.msra.mxu0 0
    %885 = vmatpush.bf16.msra.mxu0 0
    %886 = vmatpush.bf16.msra.mxu0 0
    %887 = vmatpush.bf16.msra.mxu0 0
    %888 = vmatpush.bf16.msra.mxu0 0
    %889 = vmatpush.bf16.msra.mxu0 0
    %890 = vmatpush.bf16.msra.mxu0 %v866
    %891 = vmatpush.bf16.msra.mxu0 %v864
    %892 = vmatmul.bf16.gmra.mxu0 %v547
    %v893 = vpop.f32.mrf.mxu0
    %v894 = vadd.f32 %v438, %v893
    %v895 = vpop.f32.mrf.mxu0
    %896 = vdwg.mxu0
    %v897 = vpack.c.bf16 %v559, %v559
    %v898 = vpack.c.bf16 %v605, %v605
    %v899 = vpack.c.bf16 %v651, %v651
    %v900 = vpack.c.bf16 %v697, %v697
    %v901 = vpack.c.bf16 %v743, %v743
    %v902 = vpack.c.bf16 %v789, %v789
    %v903 = vpack.c.bf16 %v835, %v835
    %v904 = vpack.c.bf16 %v881, %v881
    %v905 = vpack.c.bf16 %v572, %v572
    %v906 = vpack.c.bf16 %v618, %v618
    %v907 = vpack.c.bf16 %v664, %v664
    %v908 = vpack.c.bf16 %v710, %v710
    %v909 = vpack.c.bf16 %v756, %v756
    %v910 = vpack.c.bf16 %v802, %v802
    %v911 = vpack.c.bf16 %v848, %v848
    %v912 = vpack.c.bf16 %v894, %v894
    %v914 = vunpack.c.l.b16 %v897
    %v915 = vpack.c.b16 %v914, %v914
    %916 = vrot.lane.b32.xlu0 %v915, 64
    %v917 = vpop.permute.xlu0 %916
    %vm918 = vcmask 523264
    %v920 = vsel %vm918, %v897, 0
    %v923 = vsel %vm918, %v917, 0
    %925 = vmatpush.bf16.xpose.msra.mxu0 0
    %926 = vmatpush.bf16.xpose.msra.mxu0 0
    %927 = vmatpush.bf16.xpose.msra.mxu0 0
    %928 = vmatpush.bf16.xpose.msra.mxu0 0
    %929 = vmatpush.bf16.xpose.msra.mxu0 0
    %930 = vmatpush.bf16.xpose.msra.mxu0 0
    %931 = vmatpush.bf16.xpose.msra.mxu0 0
    %932 = vmatpush.bf16.xpose.msra.mxu0 %v923
    %933 = vmatmul.bf16.gmra.mxu0 %v920
    %v934 = vpop.f32.mrf.mxu0
    %v935 = vadd.f32 %v443, %v934
    %v936 = vpop.f32.mrf.mxu0
    %937 = vdwg.mxu0
    %v939 = vunpack.c.l.b16 %v898
    %v940 = vpack.c.b16 %v939, %v939
    %941 = vrot.lane.b32.xlu0 %v940, 64
    %v942 = vpop.permute.xlu0 %941
    %v944 = vsel %vm918, %v898, 0
    %v947 = vsel %vm918, %v942, 0
    %949 = vmatpush.bf16.xpose.msra.mxu0 0
    %950 = vmatpush.bf16.xpose.msra.mxu0 0
    %951 = vmatpush.bf16.xpose.msra.mxu0 0
    %952 = vmatpush.bf16.xpose.msra.mxu0 0
    %953 = vmatpush.bf16.xpose.msra.mxu0 0
    %954 = vmatpush.bf16.xpose.msra.mxu0 0
    %955 = vmatpush.bf16.xpose.msra.mxu0 0
    %956 = vmatpush.bf16.xpose.msra.mxu0 %v947
    %957 = vmatmul.bf16.gmra.mxu0 %v944
    %v958 = vpop.f32.mrf.mxu0
    %v959 = vadd.f32 %v443, %v958
    %v960 = vpop.f32.mrf.mxu0
    %961 = vdwg.mxu0
    %v963 = vunpack.c.l.b16 %v899
    %v964 = vpack.c.b16 %v963, %v963
    %965 = vrot.lane.b32.xlu0 %v964, 64
    %v966 = vpop.permute.xlu0 %965
    %v968 = vsel %vm918, %v899, 0
    %v971 = vsel %vm918, %v966, 0
    %973 = vmatpush.bf16.xpose.msra.mxu0 0
    %974 = vmatpush.bf16.xpose.msra.mxu0 0
    %975 = vmatpush.bf16.xpose.msra.mxu0 0
    %976 = vmatpush.bf16.xpose.msra.mxu0 0
    %977 = vmatpush.bf16.xpose.msra.mxu0 0
    %978 = vmatpush.bf16.xpose.msra.mxu0 0
    %979 = vmatpush.bf16.xpose.msra.mxu0 0
    %980 = vmatpush.bf16.xpose.msra.mxu0 %v971
    %981 = vmatmul.bf16.gmra.mxu0 %v968
    %v982 = vpop.f32.mrf.mxu0
    %v983 = vadd.f32 %v443, %v982
    %v984 = vpop.f32.mrf.mxu0
    %985 = vdwg.mxu0
    %v987 = vunpack.c.l.b16 %v900
    %v988 = vpack.c.b16 %v987, %v987
    %989 = vrot.lane.b32.xlu0 %v988, 64
    %v990 = vpop.permute.xlu0 %989
    %v992 = vsel %vm918, %v900, 0
    %v995 = vsel %vm918, %v990, 0
    %997 = vmatpush.bf16.xpose.msra.mxu0 0
    %998 = vmatpush.bf16.xpose.msra.mxu0 0
    %999 = vmatpush.bf16.xpose.msra.mxu0 0
    %1000 = vmatpush.bf16.xpose.msra.mxu0 0
    %1001 = vmatpush.bf16.xpose.msra.mxu0 0
    %1002 = vmatpush.bf16.xpose.msra.mxu0 0
    %1003 = vmatpush.bf16.xpose.msra.mxu0 0
    %1004 = vmatpush.bf16.xpose.msra.mxu0 %v995
    %1005 = vmatmul.bf16.gmra.mxu0 %v992
    %v1006 = vpop.f32.mrf.mxu0
    %v1007 = vadd.f32 %v443, %v1006
    %v1008 = vpop.f32.mrf.mxu0
    %1009 = vdwg.mxu0
    %v1011 = vunpack.c.l.b16 %v901
    %v1012 = vpack.c.b16 %v1011, %v1011
    %1013 = vrot.lane.b32.xlu0 %v1012, 64
    %v1014 = vpop.permute.xlu0 %1013
    %v1016 = vsel %vm918, %v901, 0
    %v1019 = vsel %vm918, %v1014, 0
    %1021 = vmatpush.bf16.xpose.msra.mxu0 0
    %1022 = vmatpush.bf16.xpose.msra.mxu0 0
    %1023 = vmatpush.bf16.xpose.msra.mxu0 0
    %1024 = vmatpush.bf16.xpose.msra.mxu0 0
    %1025 = vmatpush.bf16.xpose.msra.mxu0 0
    %1026 = vmatpush.bf16.xpose.msra.mxu0 0
    %1027 = vmatpush.bf16.xpose.msra.mxu0 0
    %1028 = vmatpush.bf16.xpose.msra.mxu0 %v1019
    %1029 = vmatmul.bf16.gmra.mxu0 %v1016
    %v1030 = vpop.f32.mrf.mxu0
    %v1031 = vadd.f32 %v443, %v1030
    %v1032 = vpop.f32.mrf.mxu0
    %1033 = vdwg.mxu0
    %v1035 = vunpack.c.l.b16 %v902
    %v1036 = vpack.c.b16 %v1035, %v1035
    %1037 = vrot.lane.b32.xlu0 %v1036, 64
    %v1038 = vpop.permute.xlu0 %1037
    %v1040 = vsel %vm918, %v902, 0
    %v1043 = vsel %vm918, %v1038, 0
    %1045 = vmatpush.bf16.xpose.msra.mxu0 0
    %1046 = vmatpush.bf16.xpose.msra.mxu0 0
    %1047 = vmatpush.bf16.xpose.msra.mxu0 0
    %1048 = vmatpush.bf16.xpose.msra.mxu0 0
    %1049 = vmatpush.bf16.xpose.msra.mxu0 0
    %1050 = vmatpush.bf16.xpose.msra.mxu0 0
    %1051 = vmatpush.bf16.xpose.msra.mxu0 0
    %1052 = vmatpush.bf16.xpose.msra.mxu0 %v1043
    %1053 = vmatmul.bf16.gmra.mxu0 %v1040
    %v1054 = vpop.f32.mrf.mxu0
    %v1055 = vadd.f32 %v443, %v1054
    %v1056 = vpop.f32.mrf.mxu0
    %1057 = vdwg.mxu0
    %v1059 = vunpack.c.l.b16 %v903
    %v1060 = vpack.c.b16 %v1059, %v1059
    %1061 = vrot.lane.b32.xlu0 %v1060, 64
    %v1062 = vpop.permute.xlu0 %1061
    %v1064 = vsel %vm918, %v903, 0
    %v1067 = vsel %vm918, %v1062, 0
    %1069 = vmatpush.bf16.xpose.msra.mxu0 0
    %1070 = vmatpush.bf16.xpose.msra.mxu0 0
    %1071 = vmatpush.bf16.xpose.msra.mxu0 0
    %1072 = vmatpush.bf16.xpose.msra.mxu0 0
    %1073 = vmatpush.bf16.xpose.msra.mxu0 0
    %1074 = vmatpush.bf16.xpose.msra.mxu0 0
    %1075 = vmatpush.bf16.xpose.msra.mxu0 0
    %1076 = vmatpush.bf16.xpose.msra.mxu0 %v1067
    %1077 = vmatmul.bf16.gmra.mxu0 %v1064
    %v1078 = vpop.f32.mrf.mxu0
    %v1079 = vadd.f32 %v443, %v1078
    %v1080 = vpop.f32.mrf.mxu0
    %1081 = vdwg.mxu0
    %v1083 = vunpack.c.l.b16 %v904
    %v1084 = vpack.c.b16 %v1083, %v1083
    %1085 = vrot.lane.b32.xlu0 %v1084, 64
    %v1086 = vpop.permute.xlu0 %1085
    %v1088 = vsel %vm918, %v904, 0
    %v1091 = vsel %vm918, %v1086, 0
    %1093 = vmatpush.bf16.xpose.msra.mxu0 0
    %1094 = vmatpush.bf16.xpose.msra.mxu0 0
    %1095 = vmatpush.bf16.xpose.msra.mxu0 0
    %1096 = vmatpush.bf16.xpose.msra.mxu0 0
    %1097 = vmatpush.bf16.xpose.msra.mxu0 0
    %1098 = vmatpush.bf16.xpose.msra.mxu0 0
    %1099 = vmatpush.bf16.xpose.msra.mxu0 0
    %1100 = vmatpush.bf16.xpose.msra.mxu0 %v1091
    %1101 = vmatmul.bf16.gmra.mxu0 %v1088
    %v1102 = vpop.f32.mrf.mxu0
    %v1103 = vadd.f32 %v443, %v1102
    %v1104 = vpop.f32.mrf.mxu0
    %1105 = vdwg.mxu0
    %vm1106 = vcmask 64512
    %v1107 = vsel %vm1106, %v935, -inf
    %1108 = vmax.xlane.f32.xlu0 %v1107
    %v1109 = vpop.xlane.xlu0 %1108
    %v1110 = vsel %vm1106, %v959, -inf
    %1111 = vmax.xlane.f32.xlu0 %v1110
    %v1112 = vpop.xlane.xlu0 %1111
    %v1113 = vsel %vm1106, %v983, -inf
    %1114 = vmax.xlane.f32.xlu0 %v1113
    %v1115 = vpop.xlane.xlu0 %1114
    %v1116 = vsel %vm1106, %v1007, -inf
    %1117 = vmax.xlane.f32.xlu0 %v1116
    %v1118 = vpop.xlane.xlu0 %1117
    %v1119 = vsel %vm1106, %v1031, -inf
    %1120 = vmax.xlane.f32.xlu0 %v1119
    %v1121 = vpop.xlane.xlu0 %1120
    %v1122 = vsel %vm1106, %v1055, -inf
    %1123 = vmax.xlane.f32.xlu0 %v1122
    %v1124 = vpop.xlane.xlu0 %1123
    %v1125 = vsel %vm1106, %v1079, -inf
    %1126 = vmax.xlane.f32.xlu0 %v1125
    %v1127 = vpop.xlane.xlu0 %1126
    %v1128 = vsel %vm1106, %v1103, -inf
    %1129 = vmax.xlane.f32.xlu0 %v1128
    %v1130 = vpop.xlane.xlu0 %1129
    %v1131 = vsub.f32 %v935, %v1109
    %v1132 = vsub.f32 %v959, %v1112
    %v1133 = vsub.f32 %v983, %v1115
    %v1134 = vsub.f32 %v1007, %v1118
    %v1135 = vsub.f32 %v1031, %v1121
    %v1136 = vsub.f32 %v1055, %v1124
    %v1137 = vsub.f32 %v1079, %v1127
    %v1138 = vsub.f32 %v1103, %v1130
    %v1139 = vmul.f32 %v1131, 1.442695
    %v1140 = vpow.pop %v1139
    %v1141 = vmul.f32 %v1132, 1.442695
    %v1142 = vpow.pop %v1141
    %v1143 = vmul.f32 %v1133, 1.442695
    %v1144 = vpow.pop %v1143
    %v1145 = vmul.f32 %v1134, 1.442695
    %v1146 = vpow.pop %v1145
    %v1147 = vmul.f32 %v1135, 1.442695
    %v1148 = vpow.pop %v1147
    %v1149 = vmul.f32 %v1136, 1.442695
    %v1150 = vpow.pop %v1149
    %v1151 = vmul.f32 %v1137, 1.442695
    %v1152 = vpow.pop %v1151
    %v1153 = vmul.f32 %v1138, 1.442695
    %v1154 = vpow.pop %v1153
    %v1155 = vsel %vm1106, %v1140, 0.0
    %1156 = vadd.xlane.f32.xlu0 %v1155
    %v1157 = vpop.xlane.xlu0 %1156
    %v1158 = vsel %vm1106, %v1142, 0.0
    %1159 = vadd.xlane.f32.xlu0 %v1158
    %v1160 = vpop.xlane.xlu0 %1159
    %v1161 = vsel %vm1106, %v1144, 0.0
    %1162 = vadd.xlane.f32.xlu0 %v1161
    %v1163 = vpop.xlane.xlu0 %1162
    %v1164 = vsel %vm1106, %v1146, 0.0
    %1165 = vadd.xlane.f32.xlu0 %v1164
    %v1166 = vpop.xlane.xlu0 %1165
    %v1167 = vsel %vm1106, %v1148, 0.0
    %1168 = vadd.xlane.f32.xlu0 %v1167
    %v1169 = vpop.xlane.xlu0 %1168
    %v1170 = vsel %vm1106, %v1150, 0.0
    %1171 = vadd.xlane.f32.xlu0 %v1170
    %v1172 = vpop.xlane.xlu0 %1171
    %v1173 = vsel %vm1106, %v1152, 0.0
    %1174 = vadd.xlane.f32.xlu0 %v1173
    %v1175 = vpop.xlane.xlu0 %1174
    %v1176 = vsel %vm1106, %v1154, 0.0
    %1177 = vadd.xlane.f32.xlu0 %v1176
    %v1178 = vpop.xlane.xlu0 %1177
    %v1179 = vrcp.pop %v1157
    %v1180 = vrcp.pop %v1160
    %v1181 = vrcp.pop %v1163
    %v1182 = vrcp.pop %v1166
    %v1183 = vrcp.pop %v1169
    %v1184 = vrcp.pop %v1172
    %v1185 = vrcp.pop %v1175
    %v1186 = vrcp.pop %v1178
    %v1187 = vmul.f32 %v1140, %v1179
    %v1188 = vmul.f32 %v1142, %v1180
    %v1189 = vmul.f32 %v1144, %v1181
    %v1190 = vmul.f32 %v1146, %v1182
    %v1191 = vmul.f32 %v1148, %v1183
    %v1192 = vmul.f32 %v1150, %v1184
    %v1193 = vmul.f32 %v1152, %v1185
    %v1194 = vmul.f32 %v1154, %v1186
    %v1195 = vpack.c.bf16 %v1187, %v1187
    %v1196 = vpack.c.bf16 %v1188, %v1188
    %v1197 = vpack.c.bf16 %v1189, %v1189
    %v1198 = vpack.c.bf16 %v1190, %v1190
    %v1199 = vpack.c.bf16 %v1191, %v1191
    %v1200 = vpack.c.bf16 %v1192, %v1192
    %v1201 = vpack.c.bf16 %v1193, %v1193
    %v1202 = vpack.c.bf16 %v1194, %v1194
    %v1204 = vsel %vm1106, %v1195, 0
    %v1207 = vsel %vm59, %v905, 0
    %1209 = vmatpush.bf16.msra.mxu0 0
    %1210 = vmatpush.bf16.msra.mxu0 0
    %1211 = vmatpush.bf16.msra.mxu0 0
    %1212 = vmatpush.bf16.msra.mxu0 0
    %1213 = vmatpush.bf16.msra.mxu0 0
    %1214 = vmatpush.bf16.msra.mxu0 0
    %1215 = vmatpush.bf16.msra.mxu0 0
    %1216 = vmatpush.bf16.msra.mxu0 %v1207
    %1217 = vmatmul.bf16.gmra.mxu0 %v1204
    %v1218 = vpop.f32.mrf.mxu0
    %v1219 = vadd.f32 0.0, %v1218
    %v1220 = vpop.f32.mrf.mxu0
    %1221 = vdwg.mxu0
    %v1223 = vsel %vm1106, %v1196, 0
    %v1226 = vsel %vm59, %v906, 0
    %1228 = vmatpush.bf16.msra.mxu0 0
    %1229 = vmatpush.bf16.msra.mxu0 0
    %1230 = vmatpush.bf16.msra.mxu0 0
    %1231 = vmatpush.bf16.msra.mxu0 0
    %1232 = vmatpush.bf16.msra.mxu0 0
    %1233 = vmatpush.bf16.msra.mxu0 0
    %1234 = vmatpush.bf16.msra.mxu0 0
    %1235 = vmatpush.bf16.msra.mxu0 %v1226
    %1236 = vmatmul.bf16.gmra.mxu0 %v1223
    %v1237 = vpop.f32.mrf.mxu0
    %v1238 = vadd.f32 0.0, %v1237
    %v1239 = vpop.f32.mrf.mxu0
    %1240 = vdwg.mxu0
    %v1242 = vsel %vm1106, %v1197, 0
    %v1245 = vsel %vm59, %v907, 0
    %1247 = vmatpush.bf16.msra.mxu0 0
    %1248 = vmatpush.bf16.msra.mxu0 0
    %1249 = vmatpush.bf16.msra.mxu0 0
    %1250 = vmatpush.bf16.msra.mxu0 0
    %1251 = vmatpush.bf16.msra.mxu0 0
    %1252 = vmatpush.bf16.msra.mxu0 0
    %1253 = vmatpush.bf16.msra.mxu0 0
    %1254 = vmatpush.bf16.msra.mxu0 %v1245
    %1255 = vmatmul.bf16.gmra.mxu0 %v1242
    %v1256 = vpop.f32.mrf.mxu0
    %v1257 = vadd.f32 0.0, %v1256
    %v1258 = vpop.f32.mrf.mxu0
    %1259 = vdwg.mxu0
    %v1261 = vsel %vm1106, %v1198, 0
    %v1264 = vsel %vm59, %v908, 0
    %1266 = vmatpush.bf16.msra.mxu0 0
    %1267 = vmatpush.bf16.msra.mxu0 0
    %1268 = vmatpush.bf16.msra.mxu0 0
    %1269 = vmatpush.bf16.msra.mxu0 0
    %1270 = vmatpush.bf16.msra.mxu0 0
    %1271 = vmatpush.bf16.msra.mxu0 0
    %1272 = vmatpush.bf16.msra.mxu0 0
    %1273 = vmatpush.bf16.msra.mxu0 %v1264
    %1274 = vmatmul.bf16.gmra.mxu0 %v1261
    %v1275 = vpop.f32.mrf.mxu0
    %v1276 = vadd.f32 0.0, %v1275
    %v1277 = vpop.f32.mrf.mxu0
    %1278 = vdwg.mxu0
    %v1280 = vsel %vm1106, %v1199, 0
    %v1283 = vsel %vm59, %v909, 0
    %1285 = vmatpush.bf16.msra.mxu0 0
    %1286 = vmatpush.bf16.msra.mxu0 0
    %1287 = vmatpush.bf16.msra.mxu0 0
    %1288 = vmatpush.bf16.msra.mxu0 0
    %1289 = vmatpush.bf16.msra.mxu0 0
    %1290 = vmatpush.bf16.msra.mxu0 0
    %1291 = vmatpush.bf16.msra.mxu0 0
    %1292 = vmatpush.bf16.msra.mxu0 %v1283
    %1293 = vmatmul.bf16.gmra.mxu0 %v1280
    %v1294 = vpop.f32.mrf.mxu0
    %v1295 = vadd.f32 0.0, %v1294
    %v1296 = vpop.f32.mrf.mxu0
    %1297 = vdwg.mxu0
    %v1299 = vsel %vm1106, %v1200, 0
    %v1302 = vsel %vm59, %v910, 0
    %1304 = vmatpush.bf16.msra.mxu0 0
    %1305 = vmatpush.bf16.msra.mxu0 0
    %1306 = vmatpush.bf16.msra.mxu0 0
    %1307 = vmatpush.bf16.msra.mxu0 0
    %1308 = vmatpush.bf16.msra.mxu0 0
    %1309 = vmatpush.bf16.msra.mxu0 0
    %1310 = vmatpush.bf16.msra.mxu0 0
    %1311 = vmatpush.bf16.msra.mxu0 %v1302
    %1312 = vmatmul.bf16.gmra.mxu0 %v1299
    %v1313 = vpop.f32.mrf.mxu0
    %v1314 = vadd.f32 0.0, %v1313
    %v1315 = vpop.f32.mrf.mxu0
    %1316 = vdwg.mxu0
    %v1318 = vsel %vm1106, %v1201, 0
    %v1321 = vsel %vm59, %v911, 0
    %1323 = vmatpush.bf16.msra.mxu0 0
    %1324 = vmatpush.bf16.msra.mxu0 0
    %1325 = vmatpush.bf16.msra.mxu0 0
    %1326 = vmatpush.bf16.msra.mxu0 0
    %1327 = vmatpush.bf16.msra.mxu0 0
    %1328 = vmatpush.bf16.msra.mxu0 0
    %1329 = vmatpush.bf16.msra.mxu0 0
    %1330 = vmatpush.bf16.msra.mxu0 %v1321
    %1331 = vmatmul.bf16.gmra.mxu0 %v1318
    %v1332 = vpop.f32.mrf.mxu0
    %v1333 = vadd.f32 0.0, %v1332
    %v1334 = vpop.f32.mrf.mxu0
    %1335 = vdwg.mxu0
    %v1337 = vsel %vm1106, %v1202, 0
    %v1340 = vsel %vm59, %v912, 0
    %1342 = vmatpush.bf16.msra.mxu0 0
    %1343 = vmatpush.bf16.msra.mxu0 0
    %1344 = vmatpush.bf16.msra.mxu0 0
    %1345 = vmatpush.bf16.msra.mxu0 0
    %1346 = vmatpush.bf16.msra.mxu0 0
    %1347 = vmatpush.bf16.msra.mxu0 0
    %1348 = vmatpush.bf16.msra.mxu0 0
    %1349 = vmatpush.bf16.msra.mxu0 %v1340
    %1350 = vmatmul.bf16.gmra.mxu0 %v1337
    %v1351 = vpop.f32.mrf.mxu0
    %v1352 = vadd.f32 0.0, %v1351
    %v1353 = vpop.f32.mrf.mxu0
    %1354 = vdwg.mxu0
    %v1355 = vpack.c.bf16 %v1219, %v1219
    %v1356 = vpack.c.bf16 %v1238, %v1238
    %v1357 = vpack.c.bf16 %v1257, %v1257
    %v1358 = vpack.c.bf16 %v1276, %v1276
    %v1359 = vpack.c.bf16 %v1295, %v1295
    %v1360 = vpack.c.bf16 %v1314, %v1314
    %v1361 = vpack.c.bf16 %v1333, %v1333
    %v1362 = vpack.c.bf16 %v1352, %v1352
    %1363 = vrot.lane.b32.xlu0 %v450, 64
    %v1364 = vpop.permute.xlu0 %1363
    %1365 = vrot.lane.b32.xlu0 %v451, 64
    %v1366 = vpop.permute.xlu0 %1365
    %1367 = vrot.lane.b32.xlu0 %v452, 64
    %v1368 = vpop.permute.xlu0 %1367
    %1369 = vrot.lane.b32.xlu0 %v453, 64
    %v1370 = vpop.permute.xlu0 %1369
    %v1371 = vrot.slane %v1364, 4
    %v1372 = vrot.slane %v1366, 4
    %v1373 = vrot.slane %v1368, 4
    %v1374 = vrot.slane %v1370, 4
    %v1375 = vunpack.c.l.b16 %v1371
    %v1376 = vunpack.c.l.b16 %v1372
    %v1377 = vunpack.c.l.b16 %v1373
    %v1378 = vunpack.c.l.b16 %v1374
    %v1379 = vpack.c.b16 %v1376, %v1375
    %v1380 = vpack.c.b16 %v1378, %v1377
    %v1382 = vsel %vm918, %v1355, 0
    %v1385 = vsel %vm918, %v1379, 0
    %v1388 = vsel %vm918, %v1380, 0
    %1390 = vmatpush.bf16.xpose.msra.mxu0 0
    %1391 = vmatpush.bf16.xpose.msra.mxu0 0
    %1392 = vmatpush.bf16.xpose.msra.mxu0 0
    %1393 = vmatpush.bf16.xpose.msra.mxu0 0
    %1394 = vmatpush.bf16.xpose.msra.mxu0 0
    %1395 = vmatpush.bf16.xpose.msra.mxu0 0
    %1396 = vmatpush.bf16.xpose.msra.mxu0 %v1388
    %1397 = vmatpush.bf16.xpose.msra.mxu0 %v1385
    %1398 = vmatmul.bf16.gmra.mxu0 %v1382
    %v1399 = vpop.f32.mrf.mxu0
    %v1400 = vadd.f32 0.0, %v1399
    %v1401 = vpop.f32.mrf.mxu0
    %1402 = vdwg.mxu0
    %1403 = vrot.lane.b32.xlu0 %v454, 64
    %v1404 = vpop.permute.xlu0 %1403
    %1405 = vrot.lane.b32.xlu0 %v455, 64
    %v1406 = vpop.permute.xlu0 %1405
    %1407 = vrot.lane.b32.xlu0 %v456, 64
    %v1408 = vpop.permute.xlu0 %1407
    %1409 = vrot.lane.b32.xlu0 %v457, 64
    %v1410 = vpop.permute.xlu0 %1409
    %v1411 = vrot.slane %v1404, 4
    %v1412 = vrot.slane %v1406, 4
    %v1413 = vrot.slane %v1408, 4
    %v1414 = vrot.slane %v1410, 4
    %v1415 = vunpack.c.l.b16 %v1411
    %v1416 = vunpack.c.l.b16 %v1412
    %v1417 = vunpack.c.l.b16 %v1413
    %v1418 = vunpack.c.l.b16 %v1414
    %v1419 = vpack.c.b16 %v1416, %v1415
    %v1420 = vpack.c.b16 %v1418, %v1417
    %v1422 = vsel %vm918, %v1356, 0
    %v1425 = vsel %vm918, %v1419, 0
    %v1428 = vsel %vm918, %v1420, 0
    %1430 = vmatpush.bf16.xpose.msra.mxu0 0
    %1431 = vmatpush.bf16.xpose.msra.mxu0 0
    %1432 = vmatpush.bf16.xpose.msra.mxu0 0
    %1433 = vmatpush.bf16.xpose.msra.mxu0 0
    %1434 = vmatpush.bf16.xpose.msra.mxu0 0
    %1435 = vmatpush.bf16.xpose.msra.mxu0 0
    %1436 = vmatpush.bf16.xpose.msra.mxu0 %v1428
    %1437 = vmatpush.bf16.xpose.msra.mxu0 %v1425
    %1438 = vmatmul.bf16.gmra.mxu0 %v1422
    %v1439 = vpop.f32.mrf.mxu0
    %v1440 = vadd.f32 0.0, %v1439
    %v1441 = vpop.f32.mrf.mxu0
    %1442 = vdwg.mxu0
    %1443 = vrot.lane.b32.xlu0 %v458, 64
    %v1444 = vpop.permute.xlu0 %1443
    %1445 = vrot.lane.b32.xlu0 %v459, 64
    %v1446 = vpop.permute.xlu0 %1445
    %1447 = vrot.lane.b32.xlu0 %v460, 64
    %v1448 = vpop.permute.xlu0 %1447
    %1449 = vrot.lane.b32.xlu0 %v461, 64
    %v1450 = vpop.permute.xlu0 %1449
    %v1451 = vrot.slane %v1444, 4
    %v1452 = vrot.slane %v1446, 4
    %v1453 = vrot.slane %v1448, 4
    %v1454 = vrot.slane %v1450, 4
    %v1455 = vunpack.c.l.b16 %v1451
    %v1456 = vunpack.c.l.b16 %v1452
    %v1457 = vunpack.c.l.b16 %v1453
    %v1458 = vunpack.c.l.b16 %v1454
    %v1459 = vpack.c.b16 %v1456, %v1455
    %v1460 = vpack.c.b16 %v1458, %v1457
    %v1462 = vsel %vm918, %v1357, 0
    %v1465 = vsel %vm918, %v1459, 0
    %v1468 = vsel %vm918, %v1460, 0
    %1470 = vmatpush.bf16.xpose.msra.mxu0 0
    %1471 = vmatpush.bf16.xpose.msra.mxu0 0
    %1472 = vmatpush.bf16.xpose.msra.mxu0 0
    %1473 = vmatpush.bf16.xpose.msra.mxu0 0
    %1474 = vmatpush.bf16.xpose.msra.mxu0 0
    %1475 = vmatpush.bf16.xpose.msra.mxu0 0
    %1476 = vmatpush.bf16.xpose.msra.mxu0 %v1468
    %1477 = vmatpush.bf16.xpose.msra.mxu0 %v1465
    %1478 = vmatmul.bf16.gmra.mxu0 %v1462
    %v1479 = vpop.f32.mrf.mxu0
    %v1480 = vadd.f32 0.0, %v1479
    %v1481 = vpop.f32.mrf.mxu0
    %1482 = vdwg.mxu0
    %1483 = vrot.lane.b32.xlu0 %v462, 64
    %v1484 = vpop.permute.xlu0 %1483
    %1485 = vrot.lane.b32.xlu0 %v463, 64
    %v1486 = vpop.permute.xlu0 %1485
    %1487 = vrot.lane.b32.xlu0 %v464, 64
    %v1488 = vpop.permute.xlu0 %1487
    %1489 = vrot.lane.b32.xlu0 %v465, 64
    %v1490 = vpop.permute.xlu0 %1489
    %v1491 = vrot.slane %v1484, 4
    %v1492 = vrot.slane %v1486, 4
    %v1493 = vrot.slane %v1488, 4
    %v1494 = vrot.slane %v1490, 4
    %v1495 = vunpack.c.l.b16 %v1491
    %v1496 = vunpack.c.l.b16 %v1492
    %v1497 = vunpack.c.l.b16 %v1493
    %v1498 = vunpack.c.l.b16 %v1494
    %v1499 = vpack.c.b16 %v1496, %v1495
    %v1500 = vpack.c.b16 %v1498, %v1497
    %v1502 = vsel %vm918, %v1358, 0
    %v1505 = vsel %vm918, %v1499, 0
    %v1508 = vsel %vm918, %v1500, 0
    %1510 = vmatpush.bf16.xpose.msra.mxu0 0
    %1511 = vmatpush.bf16.xpose.msra.mxu0 0
    %1512 = vmatpush.bf16.xpose.msra.mxu0 0
    %1513 = vmatpush.bf16.xpose.msra.mxu0 0
    %1514 = vmatpush.bf16.xpose.msra.mxu0 0
    %1515 = vmatpush.bf16.xpose.msra.mxu0 0
    %1516 = vmatpush.bf16.xpose.msra.mxu0 %v1508
    %1517 = vmatpush.bf16.xpose.msra.mxu0 %v1505
    %1518 = vmatmul.bf16.gmra.mxu0 %v1502
    %v1519 = vpop.f32.mrf.mxu0
    %v1520 = vadd.f32 0.0, %v1519
    %v1521 = vpop.f32.mrf.mxu0
    %1522 = vdwg.mxu0
    %1523 = vrot.lane.b32.xlu0 %v466, 64
    %v1524 = vpop.permute.xlu0 %1523
    %1525 = vrot.lane.b32.xlu0 %v467, 64
    %v1526 = vpop.permute.xlu0 %1525
    %1527 = vrot.lane.b32.xlu0 %v468, 64
    %v1528 = vpop.permute.xlu0 %1527
    %1529 = vrot.lane.b32.xlu0 %v469, 64
    %v1530 = vpop.permute.xlu0 %1529
    %v1531 = vrot.slane %v1524, 4
    %v1532 = vrot.slane %v1526, 4
    %v1533 = vrot.slane %v1528, 4
    %v1534 = vrot.slane %v1530, 4
    %v1535 = vunpack.c.l.b16 %v1531
    %v1536 = vunpack.c.l.b16 %v1532
    %v1537 = vunpack.c.l.b16 %v1533
    %v1538 = vunpack.c.l.b16 %v1534
    %v1539 = vpack.c.b16 %v1536, %v1535
    %v1540 = vpack.c.b16 %v1538, %v1537
    %v1542 = vsel %vm918, %v1359, 0
    %v1545 = vsel %vm918, %v1539, 0
    %v1548 = vsel %vm918, %v1540, 0
    %1550 = vmatpush.bf16.xpose.msra.mxu0 0
    %1551 = vmatpush.bf16.xpose.msra.mxu0 0
    %1552 = vmatpush.bf16.xpose.msra.mxu0 0
    %1553 = vmatpush.bf16.xpose.msra.mxu0 0
    %1554 = vmatpush.bf16.xpose.msra.mxu0 0
    %1555 = vmatpush.bf16.xpose.msra.mxu0 0
    %1556 = vmatpush.bf16.xpose.msra.mxu0 %v1548
    %1557 = vmatpush.bf16.xpose.msra.mxu0 %v1545
    %1558 = vmatmul.bf16.gmra.mxu0 %v1542
    %v1559 = vpop.f32.mrf.mxu0
    %v1560 = vadd.f32 0.0, %v1559
    %v1561 = vpop.f32.mrf.mxu0
    %1562 = vdwg.mxu0
    %1563 = vrot.lane.b32.xlu0 %v470, 64
    %v1564 = vpop.permute.xlu0 %1563
    %1565 = vrot.lane.b32.xlu0 %v471, 64
    %v1566 = vpop.permute.xlu0 %1565
    %1567 = vrot.lane.b32.xlu0 %v472, 64
    %v1568 = vpop.permute.xlu0 %1567
    %1569 = vrot.lane.b32.xlu0 %v473, 64
    %v1570 = vpop.permute.xlu0 %1569
    %v1571 = vrot.slane %v1564, 4
    %v1572 = vrot.slane %v1566, 4
    %v1573 = vrot.slane %v1568, 4
    %v1574 = vrot.slane %v1570, 4
    %v1575 = vunpack.c.l.b16 %v1571
    %v1576 = vunpack.c.l.b16 %v1572
    %v1577 = vunpack.c.l.b16 %v1573
    %v1578 = vunpack.c.l.b16 %v1574
    %v1579 = vpack.c.b16 %v1576, %v1575
    %v1580 = vpack.c.b16 %v1578, %v1577
    %v1582 = vsel %vm918, %v1360, 0
    %v1585 = vsel %vm918, %v1579, 0
    %v1588 = vsel %vm918, %v1580, 0
    %1590 = vmatpush.bf16.xpose.msra.mxu0 0
    %1591 = vmatpush.bf16.xpose.msra.mxu0 0
    %1592 = vmatpush.bf16.xpose.msra.mxu0 0
    %1593 = vmatpush.bf16.xpose.msra.mxu0 0
    %1594 = vmatpush.bf16.xpose.msra.mxu0 0
    %1595 = vmatpush.bf16.xpose.msra.mxu0 0
    %1596 = vmatpush.bf16.xpose.msra.mxu0 %v1588
    %1597 = vmatpush.bf16.xpose.msra.mxu0 %v1585
    %1598 = vmatmul.bf16.gmra.mxu0 %v1582
    %v1599 = vpop.f32.mrf.mxu0
    %v1600 = vadd.f32 0.0, %v1599
    %v1601 = vpop.f32.mrf.mxu0
    %1602 = vdwg.mxu0
    %1603 = vrot.lane.b32.xlu0 %v474, 64
    %v1604 = vpop.permute.xlu0 %1603
    %1605 = vrot.lane.b32.xlu0 %v475, 64
    %v1606 = vpop.permute.xlu0 %1605
    %1607 = vrot.lane.b32.xlu0 %v476, 64
    %v1608 = vpop.permute.xlu0 %1607
    %1609 = vrot.lane.b32.xlu0 %v477, 64
    %v1610 = vpop.permute.xlu0 %1609
    %v1611 = vrot.slane %v1604, 4
    %v1612 = vrot.slane %v1606, 4
    %v1613 = vrot.slane %v1608, 4
    %v1614 = vrot.slane %v1610, 4
    %v1615 = vunpack.c.l.b16 %v1611
    %v1616 = vunpack.c.l.b16 %v1612
    %v1617 = vunpack.c.l.b16 %v1613
    %v1618 = vunpack.c.l.b16 %v1614
    %v1619 = vpack.c.b16 %v1616, %v1615
    %v1620 = vpack.c.b16 %v1618, %v1617
    %v1622 = vsel %vm918, %v1361, 0
    %v1625 = vsel %vm918, %v1619, 0
    %v1628 = vsel %vm918, %v1620, 0
    %1630 = vmatpush.bf16.xpose.msra.mxu0 0
    %1631 = vmatpush.bf16.xpose.msra.mxu0 0
    %1632 = vmatpush.bf16.xpose.msra.mxu0 0
    %1633 = vmatpush.bf16.xpose.msra.mxu0 0
    %1634 = vmatpush.bf16.xpose.msra.mxu0 0
    %1635 = vmatpush.bf16.xpose.msra.mxu0 0
    %1636 = vmatpush.bf16.xpose.msra.mxu0 %v1628
    %1637 = vmatpush.bf16.xpose.msra.mxu0 %v1625
    %1638 = vmatmul.bf16.gmra.mxu0 %v1622
    %v1639 = vpop.f32.mrf.mxu0
    %v1640 = vadd.f32 0.0, %v1639
    %v1641 = vpop.f32.mrf.mxu0
    %1642 = vdwg.mxu0
    %1643 = vrot.lane.b32.xlu0 %v478, 64
    %v1644 = vpop.permute.xlu0 %1643
    %1645 = vrot.lane.b32.xlu0 %v479, 64
    %v1646 = vpop.permute.xlu0 %1645
    %1647 = vrot.lane.b32.xlu0 %v480, 64
    %v1648 = vpop.permute.xlu0 %1647
    %1649 = vrot.lane.b32.xlu0 %v481, 64
    %v1650 = vpop.permute.xlu0 %1649
    %v1651 = vrot.slane %v1644, 4
    %v1652 = vrot.slane %v1646, 4
    %v1653 = vrot.slane %v1648, 4
    %v1654 = vrot.slane %v1650, 4
    %v1655 = vunpack.c.l.b16 %v1651
    %v1656 = vunpack.c.l.b16 %v1652
    %v1657 = vunpack.c.l.b16 %v1653
    %v1658 = vunpack.c.l.b16 %v1654
    %v1659 = vpack.c.b16 %v1656, %v1655
    %v1660 = vpack.c.b16 %v1658, %v1657
    %v1662 = vsel %vm918, %v1362, 0
    %v1665 = vsel %vm918, %v1659, 0
    %v1668 = vsel %vm918, %v1660, 0
    %1670 = vmatpush.bf16.xpose.msra.mxu0 0
    %1671 = vmatpush.bf16.xpose.msra.mxu0 0
    %1672 = vmatpush.bf16.xpose.msra.mxu0 0
    %1673 = vmatpush.bf16.xpose.msra.mxu0 0
    %1674 = vmatpush.bf16.xpose.msra.mxu0 0
    %1675 = vmatpush.bf16.xpose.msra.mxu0 0
    %1676 = vmatpush.bf16.xpose.msra.mxu0 %v1668
    %1677 = vmatpush.bf16.xpose.msra.mxu0 %v1665
    %1678 = vmatmul.bf16.gmra.mxu0 %v1662
    %v1679 = vpop.f32.mrf.mxu0
    %v1680 = vadd.f32 0.0, %v1679
    %v1681 = vpop.f32.mrf.mxu0
    %1682 = vdwg.mxu0
    %v1683 = vadd.f32 %v1400, %v1440
    %v1684 = vadd.f32 %v1683, %v1480
    %v1685 = vadd.f32 %v1684, %v1520
    %v1686 = vadd.f32 %v1685, %v1560
    %v1687 = vadd.f32 %v1686, %v1600
    %v1688 = vadd.f32 %v1687, %v1640
    %v1689 = vadd.f32 %v1688, %v1680
    %v1690 = vadd.f32 %v35, %v1689
    %v1691 = vsel %vm491, %v1690, 0.0
    %1692 = vadd.xlane.f32.xlu0 %v1691
    %v1693 = vpop.xlane.xlu0 %1692
    %v1694 = vmul.f32 %v1693, %v501
    %v1695 = vsub.f32 %v1690, %v1694
    %v1696 = vmul.f32 %v1695, %v1695
    %v1697 = vsel %vm491, %v1696, 0.0
    %1698 = vadd.xlane.f32.xlu0 %v1697
    %v1699 = vpop.xlane.xlu0 %1698
    %v1700 = vmul.f32 %v1699, %v501
    %v1701 = vadd.f32 %v1700, 1e-05
    %v1702 = vrsqrt.pop %v1701
    %v1703 = vmul.f32 %v1702, %v1701
    %v1704 = vmul.f32 %v1703, %v1702
    %v1705 = vmul.f32 0.5, %v1704
    %v1706 = vsub.f32 1.5, %v1705
    %v1707 = vmul.f32 %v1702, %v1706
    %vm1708 = vweird.f32 %v1701
    %vm1709 = vweird.f32 %v1702
    %vm1710 = vmor %vm1708, %vm1709
    %v1711 = vsel %vm1710, %v1702, %v1707
    %v1712 = vmul.f32 %v1695, %v1711
    %v1713 = vperm.slane %v446, 0
    %v1714 = vmul.f32 %v1712, %v1713
    %v1715 = vperm.slane %v447, 0
    %v1716 = vadd.f32 %v1714, %v1715
    %v1717 = vpack.c.bf16 %v1716, %v1716
    %v1718 = vperm.slane %v448, 0
    %v1723 = vunpack.c.l.b16 %v483
    %v1724 = vunpack.c.l.b16 %v484
    %v1725 = vunpack.c.l.b16 %v485
    %v1726 = vunpack.c.l.b16 %v486
    %v1727 = vpack.c.b16 %v1724, %v1723
    %v1728 = vpack.c.b16 %v1726, %v1725
    %v1732 = vsel %vm491, %v1717, 0
    %1734 = vmatpush.bf16.msra.mxu0 0
    %1735 = vmatpush.bf16.msra.mxu0 0
    %1736 = vmatpush.bf16.msra.mxu0 0
    %1737 = vmatpush.bf16.msra.mxu0 0
    %1738 = vmatpush.bf16.msra.mxu0 0
    %1739 = vmatpush.bf16.msra.mxu0 0
    %1740 = vmatpush.bf16.msra.mxu0 %v1728
    %1741 = vmatpush.bf16.msra.mxu0 %v1727
    %1742 = vmatmul.bf16.gmra.mxu0 %v1732
    %v1743 = vpop.f32.mrf.mxu0
    %v1744 = vadd.f32 %v1718, %v1743
    %v1745 = vpop.f32.mrf.mxu0
    %1746 = vdwg.mxu0
    %v1747 = vmul.f32 %v1744, %v1744
    %v1748 = vmul.f32 %v1744, %v1747
    %v1749 = vmul.f32 %v1748, 0.044715
    %v1750 = vadd.f32 %v1744, %v1749
    %v1751 = vmul.f32 %v1750, 0.7978846
    %v1752 = vtanh.pop %v1751
    %v1753 = vadd.f32 %v1752, 1.0
    %v1754 = vmul.f32 %v1753, 0.5
    %v1755 = vmul.f32 %v1744, %v1754
    %v1756 = vpack.c.bf16 %v1755, %v1755
    %v1761 = vunpack.c.l.b16 %v487
    %v1762 = vunpack.c.l.b16 %v488
    %v1763 = vunpack.c.l.b16 %v489
    %v1764 = vunpack.c.l.b16 %v490
    %v1765 = vpack.c.b16 %v1762, %v1761
    %v1766 = vpack.c.b16 %v1764, %v1763
    %1769 = vmatpush.bf16.xpose.msra.mxu0 0
    %1770 = vmatpush.bf16.xpose.msra.mxu0 0
    %1771 = vmatpush.bf16.xpose.msra.mxu0 0
    %1772 = vmatpush.bf16.xpose.msra.mxu0 0
    %1773 = vmatpush.bf16.xpose.msra.mxu0 0
    %1774 = vmatpush.bf16.xpose.msra.mxu0 0
    %1775 = vmatpush.bf16.xpose.msra.mxu0 %v1766
    %1776 = vmatpush.bf16.xpose.msra.mxu0 %v1765
    %1777 = vmatmul.bf16.gmra.mxu0 %v1756
    %v1778 = vpop.f32.mrf.mxu0
    %v1779 = vadd.f32 0.0, %v1778
    %v1780 = vpop.f32.mrf.mxu0
    %1781 = vdwg.mxu0
    %v1782 = vadd.f32 %v1690, %v1779
    %v1783 = vperm.slane %v449, 0
    %v1784 = vadd.f32 %v1782, %v1783
    %v1785 = vld [vmem:[%s2 + $0x6] sm:$0x1]
    %v1786 = vld [vmem:[%s2 + $0x7] sm:$0x1]
    %v1787 = vld [vmem:[%s2 + $0x8] sm:$0x1]
    %v1788 = vld [vmem:[%s2 + $0x9] sm:$0x1]
    %v1789 = vld [vmem:[%s2 + $0xa] sm:$0x1]
    %v1790 = vld [vmem:[%s2 + $0xb] sm:$0x1]
    %s1791 = scalar_lea.vmem [#allocation2], 288
    %v1792 = vld [vmem:[%s1791] sm:$0xff]
    %v1793 = vld [vmem:[%s1791 + $0x8] sm:$0xff]
    %v1794 = vld [vmem:[%s1791 + $0x10] sm:$0xff]
    %v1795 = vld [vmem:[%s1791 + $0x18] sm:$0xff]
    %v1796 = vld [vmem:[%s1791 + $0x20] sm:$0xff]
    %v1797 = vld [vmem:[%s1791 + $0x28] sm:$0xff]
    %v1798 = vld [vmem:[%s1791 + $0x30] sm:$0xff]
    %v1799 = vld [vmem:[%s1791 + $0x38] sm:$0xff]
    %v1800 = vld [vmem:[%s1791 + $0x40] sm:$0xff]
    %v1801 = vld [vmem:[%s1791 + $0x48] sm:$0xff]
    %v1802 = vld [vmem:[%s1791 + $0x50] sm:$0xff]
    %v1803 = vld [vmem:[%s1791 + $0x58] sm:$0xff]
    %v1804 = vld [vmem:[%s1791 + $0x60] sm:$0xff]
    %v1805 = vld [vmem:[%s1791 + $0x68] sm:$0xff]
    %v1806 = vld [vmem:[%s1791 + $0x70] sm:$0xff]
    %v1807 = vld [vmem:[%s1791 + $0x78] sm:$0xff]
    %v1808 = vld [vmem:[%s1791 + $0x80] sm:$0xff]
    %v1809 = vld [vmem:[%s1791 + $0x88] sm:$0xff]
    %v1810 = vld [vmem:[%s1791 + $0x90] sm:$0xff]
    %v1811 = vld [vmem:[%s1791 + $0x98] sm:$0xff]
    %v1812 = vld [vmem:[%s1791 + $0xa0] sm:$0xff]
    %v1813 = vld [vmem:[%s1791 + $0xa8] sm:$0xff]
    %v1814 = vld [vmem:[%s1791 + $0xb0] sm:$0xff]
    %v1815 = vld [vmem:[%s1791 + $0xb8] sm:$0xff]
    %v1816 = vld [vmem:[%s1791 + $0xc0] sm:$0xff]
    %v1817 = vld [vmem:[%s1791 + $0xc8] sm:$0xff]
    %v1818 = vld [vmem:[%s1791 + $0xd0] sm:$0xff]
    %v1819 = vld [vmem:[%s1791 + $0xd8] sm:$0xff]
    %v1820 = vld [vmem:[%s1791 + $0xe0] sm:$0xff]
    %v1821 = vld [vmem:[%s1791 + $0xe8] sm:$0xff]
    %v1822 = vld [vmem:[%s1791 + $0xf0] sm:$0xff]
    %v1823 = vld [vmem:[%s1791 + $0xf8] sm:$0xff]
    %s1824 = scalar_lea.vmem [#allocation2], 544
    %v1825 = vld [vmem:[%s1824] sm:$0xf]
    %v1826 = vld [vmem:[%s1824 + $0x8] sm:$0xf]
    %v1827 = vld [vmem:[%s1824 + $0x10] sm:$0xf]
    %v1828 = vld [vmem:[%s1824 + $0x18] sm:$0xf]
    %v1829 = vld [vmem:[%s1824 + $0x4] sm:$0xf]
    %v1830 = vld [vmem:[%s1824 + $0xc] sm:$0xf]
    %v1831 = vld [vmem:[%s1824 + $0x14] sm:$0xf]
    %v1832 = vld [vmem:[%s1824 + $0x1c] sm:$0xf]
    %v1833 = vsel %vm491, %v1784, 0.0
    %1834 = vadd.xlane.f32.xlu0 %v1833
    %v1835 = vpop.xlane.xlu0 %1834
    %v1836 = vmul.f32 %v1835, %v501
    %v1837 = vsub.f32 %v1784, %v1836
    %v1838 = vmul.f32 %v1837, %v1837
    %v1839 = vsel %vm491, %v1838, 0.0
    %1840 = vadd.xlane.f32.xlu0 %v1839
    %v1841 = vpop.xlane.xlu0 %1840
    %v1842 = vmul.f32 %v1841, %v501
    %v1843 = vadd.f32 %v1842, 1e-05
    %v1844 = vrsqrt.pop %v1843
    %v1845 = vmul.f32 %v1844, %v1843
    %v1846 = vmul.f32 %v1845, %v1844
    %v1847 = vmul.f32 0.5, %v1846
    %v1848 = vsub.f32 1.5, %v1847
    %v1849 = vmul.f32 %v1844, %v1848
    %vm1850 = vweird.f32 %v1843
    %vm1851 = vweird.f32 %v1844
    %vm1852 = vmor %vm1850, %vm1851
    %v1853 = vsel %vm1852, %v1844, %v1849
    %v1854 = vmul.f32 %v1837, %v1853
    %v1855 = vperm.slane %v1785, 0
    %v1856 = vmul.f32 %v1854, %v1855
    %v1857 = vperm.slane %v1786, 0
    %v1858 = vadd.f32 %v1856, %v1857
    %v1859 = vpack.c.bf16 %v1858, %v1858
    %v1864 = vunpack.c.l.b16 %v1792
    %v1865 = vunpack.c.h.b16 %v1792
    %v1866 = vunpack.c.l.b16 %v1793
    %v1867 = vunpack.c.h.b16 %v1793
    %v1868 = vunpack.c.l.b16 %v1794
    %v1869 = vunpack.c.h.b16 %v1794
    %v1870 = vunpack.c.l.b16 %v1795
    %v1871 = vunpack.c.h.b16 %v1795
    %v1872 = vpack.c.b16 %v1866, %v1864
    %v1873 = vpack.c.b16 %v1867, %v1865
    %v1874 = vpack.c.b16 %v1870, %v1868
    %v1875 = vpack.c.b16 %v1871, %v1869
    %v1881 = vsel %vm491, %v1859, 0
    %1883 = vmatpush.bf16.msra.mxu0 0
    %1884 = vmatpush.bf16.msra.mxu0 0
    %1885 = vmatpush.bf16.msra.mxu0 0
    %1886 = vmatpush.bf16.msra.mxu0 0
    %1887 = vmatpush.bf16.msra.mxu0 0
    %1888 = vmatpush.bf16.msra.mxu0 0
    %1889 = vmatpush.bf16.msra.mxu0 %v1874
    %1890 = vmatpush.bf16.msra.mxu0 %v1872
    %1891 = vmatmul.bf16.gmra.mxu0 %v1881
    %v1892 = vpop.f32.mrf.mxu0
    %v1893 = vadd.f32 %v82, %v1892
    %v1894 = vpop.f32.mrf.mxu0
    %1895 = vdwg.mxu0
    %1896 = vmatpush.bf16.msra.mxu0 0
    %1897 = vmatpush.bf16.msra.mxu0 0
    %1898 = vmatpush.bf16.msra.mxu0 0
    %1899 = vmatpush.bf16.msra.mxu0 0
    %1900 = vmatpush.bf16.msra.mxu0 0
    %1901 = vmatpush.bf16.msra.mxu0 0
    %1902 = vmatpush.bf16.msra.mxu0 %v1875
    %1903 = vmatpush.bf16.msra.mxu0 %v1873
    %1904 = vmatmul.bf16.gmra.mxu0 %v1881
    %v1905 = vpop.f32.mrf.mxu0
    %v1906 = vadd.f32 %v102, %v1905
    %v1907 = vpop.f32.mrf.mxu0
    %1908 = vdwg.mxu0
    %v1913 = vunpack.c.l.b16 %v1796
    %v1914 = vunpack.c.h.b16 %v1796
    %v1915 = vunpack.c.l.b16 %v1797
    %v1916 = vunpack.c.h.b16 %v1797
    %v1917 = vunpack.c.l.b16 %v1798
    %v1918 = vunpack.c.h.b16 %v1798
    %v1919 = vunpack.c.l.b16 %v1799
    %v1920 = vunpack.c.h.b16 %v1799
    %v1921 = vpack.c.b16 %v1915, %v1913
    %v1922 = vpack.c.b16 %v1916, %v1914
    %v1923 = vpack.c.b16 %v1919, %v1917
    %v1924 = vpack.c.b16 %v1920, %v1918
    %1929 = vmatpush.bf16.msra.mxu0 0
    %1930 = vmatpush.bf16.msra.mxu0 0
    %1931 = vmatpush.bf16.msra.mxu0 0
    %1932 = vmatpush.bf16.msra.mxu0 0
    %1933 = vmatpush.bf16.msra.mxu0 0
    %1934 = vmatpush.bf16.msra.mxu0 0
    %1935 = vmatpush.bf16.msra.mxu0 %v1923
    %1936 = vmatpush.bf16.msra.mxu0 %v1921
    %1937 = vmatmul.bf16.gmra.mxu0 %v1881
    %v1938 = vpop.f32.mrf.mxu0
    %v1939 = vadd.f32 %v130, %v1938
    %v1940 = vpop.f32.mrf.mxu0
    %1941 = vdwg.mxu0
    %1942 = vmatpush.bf16.msra.mxu0 0
    %1943 = vmatpush.bf16.msra.mxu0 0
    %1944 = vmatpush.bf16.msra.mxu0 0
    %1945 = vmatpush.bf16.msra.mxu0 0
    %1946 = vmatpush.bf16.msra.mxu0 0
    %1947 = vmatpush.bf16.msra.mxu0 0
    %1948 = vmatpush.bf16.msra.mxu0 %v1924
    %1949 = vmatpush.bf16.msra.mxu0 %v1922
    %1950 = vmatmul.bf16.gmra.mxu0 %v1881
    %v1951 = vpop.f32.mrf.mxu0
    %v1952 = vadd.f32 %v150, %v1951
    %v1953 = vpop.f32.mrf.mxu0
    %1954 = vdwg.mxu0
    %v1959 = vunpack.c.l.b16 %v1800
    %v1960 = vunpack.c.h.b16 %v1800
    %v1961 = vunpack.c.l.b16 %v1801
    %v1962 = vunpack.c.h.b16 %v1801
    %v1963 = vunpack.c.l.b16 %v1802
    %v1964 = vunpack.c.h.b16 %v1802
    %v1965 = vunpack.c.l.b16 %v1803
    %v1966 = vunpack.c.h.b16 %v1803
    %v1967 = vpack.c.b16 %v1961, %v1959
    %v1968 = vpack.c.b16 %v1962, %v1960
    %v1969 = vpack.c.b16 %v1965, %v1963
    %v1970 = vpack.c.b16 %v1966, %v1964
    %1975 = vmatpush.bf16.msra.mxu0 0
    %1976 = vmatpush.bf16.msra.mxu0 0
    %1977 = vmatpush.bf16.msra.mxu0 0
    %1978 = vmatpush.bf16.msra.mxu0 0
    %1979 = vmatpush.bf16.msra.mxu0 0
    %1980 = vmatpush.bf16.msra.mxu0 0
    %1981 = vmatpush.bf16.msra.mxu0 %v1969
    %1982 = vmatpush.bf16.msra.mxu0 %v1967
    %1983 = vmatmul.bf16.gmra.mxu0 %v1881
    %v1984 = vpop.f32.mrf.mxu0
    %v1985 = vadd.f32 %v178, %v1984
    %v1986 = vpop.f32.mrf.mxu0
    %1987 = vdwg.mxu0
    %1988 = vmatpush.bf16.msra.mxu0 0
    %1989 = vmatpush.bf16.msra.mxu0 0
    %1990 = vmatpush.bf16.msra.mxu0 0
    %1991 = vmatpush.bf16.msra.mxu0 0
    %1992 = vmatpush.bf16.msra.mxu0 0
    %1993 = vmatpush.bf16.msra.mxu0 0
    %1994 = vmatpush.bf16.msra.mxu0 %v1970
    %1995 = vmatpush.bf16.msra.mxu0 %v1968
    %1996 = vmatmul.bf16.gmra.mxu0 %v1881
    %v1997 = vpop.f32.mrf.mxu0
    %v1998 = vadd.f32 %v198, %v1997
    %v1999 = vpop.f32.mrf.mxu0
    %2000 = vdwg.mxu0
    %v2005 = vunpack.c.l.b16 %v1804
    %v2006 = vunpack.c.h.b16 %v1804
    %v2007 = vunpack.c.l.b16 %v1805
    %v2008 = vunpack.c.h.b16 %v1805
    %v2009 = vunpack.c.l.b16 %v1806
    %v2010 = vunpack.c.h.b16 %v1806
    %v2011 = vunpack.c.l.b16 %v1807
    %v2012 = vunpack.c.h.b16 %v1807
    %v2013 = vpack.c.b16 %v2007, %v2005
    %v2014 = vpack.c.b16 %v2008, %v2006
    %v2015 = vpack.c.b16 %v2011, %v2009
    %v2016 = vpack.c.b16 %v2012, %v2010
    %2021 = vmatpush.bf16.msra.mxu0 0
    %2022 = vmatpush.bf16.msra.mxu0 0
    %2023 = vmatpush.bf16.msra.mxu0 0
    %2024 = vmatpush.bf16.msra.mxu0 0
    %2025 = vmatpush.bf16.msra.mxu0 0
    %2026 = vmatpush.bf16.msra.mxu0 0
    %2027 = vmatpush.bf16.msra.mxu0 %v2015
    %2028 = vmatpush.bf16.msra.mxu0 %v2013
    %2029 = vmatmul.bf16.gmra.mxu0 %v1881
    %v2030 = vpop.f32.mrf.mxu0
    %v2031 = vadd.f32 %v226, %v2030
    %v2032 = vpop.f32.mrf.mxu0
    %2033 = vdwg.mxu0
    %2034 = vmatpush.bf16.msra.mxu0 0
    %2035 = vmatpush.bf16.msra.mxu0 0
    %2036 = vmatpush.bf16.msra.mxu0 0
    %2037 = vmatpush.bf16.msra.mxu0 0
    %2038 = vmatpush.bf16.msra.mxu0 0
    %2039 = vmatpush.bf16.msra.mxu0 0
    %2040 = vmatpush.bf16.msra.mxu0 %v2016
    %2041 = vmatpush.bf16.msra.mxu0 %v2014
    %2042 = vmatmul.bf16.gmra.mxu0 %v1881
    %v2043 = vpop.f32.mrf.mxu0
    %v2044 = vadd.f32 %v246, %v2043
    %v2045 = vpop.f32.mrf.mxu0
    %2046 = vdwg.mxu0
    %v2051 = vunpack.c.l.b16 %v1808
    %v2052 = vunpack.c.h.b16 %v1808
    %v2053 = vunpack.c.l.b16 %v1809
    %v2054 = vunpack.c.h.b16 %v1809
    %v2055 = vunpack.c.l.b16 %v1810
    %v2056 = vunpack.c.h.b16 %v1810
    %v2057 = vunpack.c.l.b16 %v1811
    %v2058 = vunpack.c.h.b16 %v1811
    %v2059 = vpack.c.b16 %v2053, %v2051
    %v2060 = vpack.c.b16 %v2054, %v2052
    %v2061 = vpack.c.b16 %v2057, %v2055
    %v2062 = vpack.c.b16 %v2058, %v2056
    %2067 = vmatpush.bf16.msra.mxu0 0
    %2068 = vmatpush.bf16.msra.mxu0 0
    %2069 = vmatpush.bf16.msra.mxu0 0
    %2070 = vmatpush.bf16.msra.mxu0 0
    %2071 = vmatpush.bf16.msra.mxu0 0
    %2072 = vmatpush.bf16.msra.mxu0 0
    %2073 = vmatpush.bf16.msra.mxu0 %v2061
    %2074 = vmatpush.bf16.msra.mxu0 %v2059
    %2075 = vmatmul.bf16.gmra.mxu0 %v1881
    %v2076 = vpop.f32.mrf.mxu0
    %v2077 = vadd.f32 %v274, %v2076
    %v2078 = vpop.f32.mrf.mxu0
    %2079 = vdwg.mxu0
    %2080 = vmatpush.bf16.msra.mxu0 0
    %2081 = vmatpush.bf16.msra.mxu0 0
    %2082 = vmatpush.bf16.msra.mxu0 0
    %2083 = vmatpush.bf16.msra.mxu0 0
    %2084 = vmatpush.bf16.msra.mxu0 0
    %2085 = vmatpush.bf16.msra.mxu0 0
    %2086 = vmatpush.bf16.msra.mxu0 %v2062
    %2087 = vmatpush.bf16.msra.mxu0 %v2060
    %2088 = vmatmul.bf16.gmra.mxu0 %v1881
    %v2089 = vpop.f32.mrf.mxu0
    %v2090 = vadd.f32 %v294, %v2089
    %v2091 = vpop.f32.mrf.mxu0
    %2092 = vdwg.mxu0
    %v2097 = vunpack.c.l.b16 %v1812
    %v2098 = vunpack.c.h.b16 %v1812
    %v2099 = vunpack.c.l.b16 %v1813
    %v2100 = vunpack.c.h.b16 %v1813
    %v2101 = vunpack.c.l.b16 %v1814
    %v2102 = vunpack.c.h.b16 %v1814
    %v2103 = vunpack.c.l.b16 %v1815
    %v2104 = vunpack.c.h.b16 %v1815
    %v2105 = vpack.c.b16 %v2099, %v2097
    %v2106 = vpack.c.b16 %v2100, %v2098
    %v2107 = vpack.c.b16 %v2103, %v2101
    %v2108 = vpack.c.b16 %v2104, %v2102
    %2113 = vmatpush.bf16.msra.mxu0 0
    %2114 = vmatpush.bf16.msra.mxu0 0
    %2115 = vmatpush.bf16.msra.mxu0 0
    %2116 = vmatpush.bf16.msra.mxu0 0
    %2117 = vmatpush.bf16.msra.mxu0 0
    %2118 = vmatpush.bf16.msra.mxu0 0
    %2119 = vmatpush.bf16.msra.mxu0 %v2107
    %2120 = vmatpush.bf16.msra.mxu0 %v2105
    %2121 = vmatmul.bf16.gmra.mxu0 %v1881
    %v2122 = vpop.f32.mrf.mxu0
    %v2123 = vadd.f32 %v322, %v2122
    %v2124 = vpop.f32.mrf.mxu0
    %2125 = vdwg.mxu0
    %2126 = vmatpush.bf16.msra.mxu0 0
    %2127 = vmatpush.bf16.msra.mxu0 0
    %2128 = vmatpush.bf16.msra.mxu0 0
    %2129 = vmatpush.bf16.msra.mxu0 0
    %2130 = vmatpush.bf16.msra.mxu0 0
    %2131 = vmatpush.bf16.msra.mxu0 0
    %2132 = vmatpush.bf16.msra.mxu0 %v2108
    %2133 = vmatpush.bf16.msra.mxu0 %v2106
    %2134 = vmatmul.bf16.gmra.mxu0 %v1881
    %v2135 = vpop.f32.mrf.mxu0
    %v2136 = vadd.f32 %v342, %v2135
    %v2137 = vpop.f32.mrf.mxu0
    %2138 = vdwg.mxu0
    %v2143 = vunpack.c.l.b16 %v1816
    %v2144 = vunpack.c.h.b16 %v1816
    %v2145 = vunpack.c.l.b16 %v1817
    %v2146 = vunpack.c.h.b16 %v1817
    %v2147 = vunpack.c.l.b16 %v1818
    %v2148 = vunpack.c.h.b16 %v1818
    %v2149 = vunpack.c.l.b16 %v1819
    %v2150 = vunpack.c.h.b16 %v1819
    %v2151 = vpack.c.b16 %v2145, %v2143
    %v2152 = vpack.c.b16 %v2146, %v2144
    %v2153 = vpack.c.b16 %v2149, %v2147
    %v2154 = vpack.c.b16 %v2150, %v2148
    %2159 = vmatpush.bf16.msra.mxu0 0
    %2160 = vmatpush.bf16.msra.mxu0 0
    %2161 = vmatpush.bf16.msra.mxu0 0
    %2162 = vmatpush.bf16.msra.mxu0 0
    %2163 = vmatpush.bf16.msra.mxu0 0
    %2164 = vmatpush.bf16.msra.mxu0 0
    %2165 = vmatpush.bf16.msra.mxu0 %v2153
    %2166 = vmatpush.bf16.msra.mxu0 %v2151
    %2167 = vmatmul.bf16.gmra.mxu0 %v1881
    %v2168 = vpop.f32.mrf.mxu0
    %v2169 = vadd.f32 %v370, %v2168
    %v2170 = vpop.f32.mrf.mxu0
    %2171 = vdwg.mxu0
    %2172 = vmatpush.bf16.msra.mxu0 0
    %2173 = vmatpush.bf16.msra.mxu0 0
    %2174 = vmatpush.bf16.msra.mxu0 0
    %2175 = vmatpush.bf16.msra.mxu0 0
    %2176 = vmatpush.bf16.msra.mxu0 0
    %2177 = vmatpush.bf16.msra.mxu0 0
    %2178 = vmatpush.bf16.msra.mxu0 %v2154
    %2179 = vmatpush.bf16.msra.mxu0 %v2152
    %2180 = vmatmul.bf16.gmra.mxu0 %v1881
    %v2181 = vpop.f32.mrf.mxu0
    %v2182 = vadd.f32 %v390, %v2181
    %v2183 = vpop.f32.mrf.mxu0
    %2184 = vdwg.mxu0
    %v2189 = vunpack.c.l.b16 %v1820
    %v2190 = vunpack.c.h.b16 %v1820
    %v2191 = vunpack.c.l.b16 %v1821
    %v2192 = vunpack.c.h.b16 %v1821
    %v2193 = vunpack.c.l.b16 %v1822
    %v2194 = vunpack.c.h.b16 %v1822
    %v2195 = vunpack.c.l.b16 %v1823
    %v2196 = vunpack.c.h.b16 %v1823
    %v2197 = vpack.c.b16 %v2191, %v2189
    %v2198 = vpack.c.b16 %v2192, %v2190
    %v2199 = vpack.c.b16 %v2195, %v2193
    %v2200 = vpack.c.b16 %v2196, %v2194
    %2205 = vmatpush.bf16.msra.mxu0 0
    %2206 = vmatpush.bf16.msra.mxu0 0
    %2207 = vmatpush.bf16.msra.mxu0 0
    %2208 = vmatpush.bf16.msra.mxu0 0
    %2209 = vmatpush.bf16.msra.mxu0 0
    %2210 = vmatpush.bf16.msra.mxu0 0
    %2211 = vmatpush.bf16.msra.mxu0 %v2199
    %2212 = vmatpush.bf16.msra.mxu0 %v2197
    %2213 = vmatmul.bf16.gmra.mxu0 %v1881
    %v2214 = vpop.f32.mrf.mxu0
    %v2215 = vadd.f32 %v418, %v2214
    %v2216 = vpop.f32.mrf.mxu0
    %2217 = vdwg.mxu0
    %2218 = vmatpush.bf16.msra.mxu0 0
    %2219 = vmatpush.bf16.msra.mxu0 0
    %2220 = vmatpush.bf16.msra.mxu0 0
    %2221 = vmatpush.bf16.msra.mxu0 0
    %2222 = vmatpush.bf16.msra.mxu0 0
    %2223 = vmatpush.bf16.msra.mxu0 0
    %2224 = vmatpush.bf16.msra.mxu0 %v2200
    %2225 = vmatpush.bf16.msra.mxu0 %v2198
    %2226 = vmatmul.bf16.gmra.mxu0 %v1881
    %v2227 = vpop.f32.mrf.mxu0
    %v2228 = vadd.f32 %v438, %v2227
    %v2229 = vpop.f32.mrf.mxu0
    %2230 = vdwg.mxu0
    %v2231 = vpack.c.bf16 %v1893, %v1893
    %v2232 = vpack.c.bf16 %v1939, %v1939
    %v2233 = vpack.c.bf16 %v1985, %v1985
    %v2234 = vpack.c.bf16 %v2031, %v2031
    %v2235 = vpack.c.bf16 %v2077, %v2077
    %v2236 = vpack.c.bf16 %v2123, %v2123
    %v2237 = vpack.c.bf16 %v2169, %v2169
    %v2238 = vpack.c.bf16 %v2215, %v2215
    %v2239 = vpack.c.bf16 %v1906, %v1906
    %v2240 = vpack.c.bf16 %v1952, %v1952
    %v2241 = vpack.c.bf16 %v1998, %v1998
    %v2242 = vpack.c.bf16 %v2044, %v2044
    %v2243 = vpack.c.bf16 %v2090, %v2090
    %v2244 = vpack.c.bf16 %v2136, %v2136
    %v2245 = vpack.c.bf16 %v2182, %v2182
    %v2246 = vpack.c.bf16 %v2228, %v2228
    %v2248 = vunpack.c.l.b16 %v2231
    %v2249 = vpack.c.b16 %v2248, %v2248
    %2250 = vrot.lane.b32.xlu0 %v2249, 64
    %v2251 = vpop.permute.xlu0 %2250
    %v2253 = vsel %vm918, %v2231, 0
    %v2256 = vsel %vm918, %v2251, 0
    %2258 = vmatpush.bf16.xpose.msra.mxu0 0
    %2259 = vmatpush.bf16.xpose.msra.mxu0 0
    %2260 = vmatpush.bf16.xpose.msra.mxu0 0
    %2261 = vmatpush.bf16.xpose.msra.mxu0 0
    %2262 = vmatpush.bf16.xpose.msra.mxu0 0
    %2263 = vmatpush.bf16.xpose.msra.mxu0 0
    %2264 = vmatpush.bf16.xpose.msra.mxu0 0
    %2265 = vmatpush.bf16.xpose.msra.mxu0 %v2256
    %2266 = vmatmul.bf16.gmra.mxu0 %v2253
    %v2267 = vpop.f32.mrf.mxu0
    %v2268 = vadd.f32 %v443, %v2267
    %v2269 = vpop.f32.mrf.mxu0
    %2270 = vdwg.mxu0
    %v2272 = vunpack.c.l.b16 %v2232
    %v2273 = vpack.c.b16 %v2272, %v2272
    %2274 = vrot.lane.b32.xlu0 %v2273, 64
    %v2275 = vpop.permute.xlu0 %2274
    %v2277 = vsel %vm918, %v2232, 0
    %v2280 = vsel %vm918, %v2275, 0
    %2282 = vmatpush.bf16.xpose.msra.mxu0 0
    %2283 = vmatpush.bf16.xpose.msra.mxu0 0
    %2284 = vmatpush.bf16.xpose.msra.mxu0 0
    %2285 = vmatpush.bf16.xpose.msra.mxu0 0
    %2286 = vmatpush.bf16.xpose.msra.mxu0 0
    %2287 = vmatpush.bf16.xpose.msra.mxu0 0
    %2288 = vmatpush.bf16.xpose.msra.mxu0 0
    %2289 = vmatpush.bf16.xpose.msra.mxu0 %v2280
    %2290 = vmatmul.bf16.gmra.mxu0 %v2277
    %v2291 = vpop.f32.mrf.mxu0
    %v2292 = vadd.f32 %v443, %v2291
    %v2293 = vpop.f32.mrf.mxu0
    %2294 = vdwg.mxu0
    %v2296 = vunpack.c.l.b16 %v2233
    %v2297 = vpack.c.b16 %v2296, %v2296
    %2298 = vrot.lane.b32.xlu0 %v2297, 64
    %v2299 = vpop.permute.xlu0 %2298
    %v2301 = vsel %vm918, %v2233, 0
    %v2304 = vsel %vm918, %v2299, 0
    %2306 = vmatpush.bf16.xpose.msra.mxu0 0
    %2307 = vmatpush.bf16.xpose.msra.mxu0 0
    %2308 = vmatpush.bf16.xpose.msra.mxu0 0
    %2309 = vmatpush.bf16.xpose.msra.mxu0 0
    %2310 = vmatpush.bf16.xpose.msra.mxu0 0
    %2311 = vmatpush.bf16.xpose.msra.mxu0 0
    %2312 = vmatpush.bf16.xpose.msra.mxu0 0
    %2313 = vmatpush.bf16.xpose.msra.mxu0 %v2304
    %2314 = vmatmul.bf16.gmra.mxu0 %v2301
    %v2315 = vpop.f32.mrf.mxu0
    %v2316 = vadd.f32 %v443, %v2315
    %v2317 = vpop.f32.mrf.mxu0
    %2318 = vdwg.mxu0
    %v2320 = vunpack.c.l.b16 %v2234
    %v2321 = vpack.c.b16 %v2320, %v2320
    %2322 = vrot.lane.b32.xlu0 %v2321, 64
    %v2323 = vpop.permute.xlu0 %2322
    %v2325 = vsel %vm918, %v2234, 0
    %v2328 = vsel %vm918, %v2323, 0
    %2330 = vmatpush.bf16.xpose.msra.mxu0 0
    %2331 = vmatpush.bf16.xpose.msra.mxu0 0
    %2332 = vmatpush.bf16.xpose.msra.mxu0 0
    %2333 = vmatpush.bf16.xpose.msra.mxu0 0
    %2334 = vmatpush.bf16.xpose.msra.mxu0 0
    %2335 = vmatpush.bf16.xpose.msra.mxu0 0
    %2336 = vmatpush.bf16.xpose.msra.mxu0 0
    %2337 = vmatpush.bf16.xpose.msra.mxu0 %v2328
    %2338 = vmatmul.bf16.gmra.mxu0 %v2325
    %v2339 = vpop.f32.mrf.mxu0
    %v2340 = vadd.f32 %v443, %v2339
    %v2341 = vpop.f32.mrf.mxu0
    %2342 = vdwg.mxu0
    %v2344 = vunpack.c.l.b16 %v2235
    %v2345 = vpack.c.b16 %v2344, %v2344
    %2346 = vrot.lane.b32.xlu0 %v2345, 64
    %v2347 = vpop.permute.xlu0 %2346
    %v2349 = vsel %vm918, %v2235, 0
    %v2352 = vsel %vm918, %v2347, 0
    %2354 = vmatpush.bf16.xpose.msra.mxu0 0
    %2355 = vmatpush.bf16.xpose.msra.mxu0 0
    %2356 = vmatpush.bf16.xpose.msra.mxu0 0
    %2357 = vmatpush.bf16.xpose.msra.mxu0 0
    %2358 = vmatpush.bf16.xpose.msra.mxu0 0
    %2359 = vmatpush.bf16.xpose.msra.mxu0 0
    %2360 = vmatpush.bf16.xpose.msra.mxu0 0
    %2361 = vmatpush.bf16.xpose.msra.mxu0 %v2352
    %2362 = vmatmul.bf16.gmra.mxu0 %v2349
    %v2363 = vpop.f32.mrf.mxu0
    %v2364 = vadd.f32 %v443, %v2363
    %v2365 = vpop.f32.mrf.mxu0
    %2366 = vdwg.mxu0
    %v2368 = vunpack.c.l.b16 %v2236
    %v2369 = vpack.c.b16 %v2368, %v2368
    %2370 = vrot.lane.b32.xlu0 %v2369, 64
    %v2371 = vpop.permute.xlu0 %2370
    %v2373 = vsel %vm918, %v2236, 0
    %v2376 = vsel %vm918, %v2371, 0
    %2378 = vmatpush.bf16.xpose.msra.mxu0 0
    %2379 = vmatpush.bf16.xpose.msra.mxu0 0
    %2380 = vmatpush.bf16.xpose.msra.mxu0 0
    %2381 = vmatpush.bf16.xpose.msra.mxu0 0
    %2382 = vmatpush.bf16.xpose.msra.mxu0 0
    %2383 = vmatpush.bf16.xpose.msra.mxu0 0
    %2384 = vmatpush.bf16.xpose.msra.mxu0 0
    %2385 = vmatpush.bf16.xpose.msra.mxu0 %v2376
    %2386 = vmatmul.bf16.gmra.mxu0 %v2373
    %v2387 = vpop.f32.mrf.mxu0
    %v2388 = vadd.f32 %v443, %v2387
    %v2389 = vpop.f32.mrf.mxu0
    %2390 = vdwg.mxu0
    %v2392 = vunpack.c.l.b16 %v2237
    %v2393 = vpack.c.b16 %v2392, %v2392
    %2394 = vrot.lane.b32.xlu0 %v2393, 64
    %v2395 = vpop.permute.xlu0 %2394
    %v2397 = vsel %vm918, %v2237, 0
    %v2400 = vsel %vm918, %v2395, 0
    %2402 = vmatpush.bf16.xpose.msra.mxu0 0
    %2403 = vmatpush.bf16.xpose.msra.mxu0 0
    %2404 = vmatpush.bf16.xpose.msra.mxu0 0
    %2405 = vmatpush.bf16.xpose.msra.mxu0 0
    %2406 = vmatpush.bf16.xpose.msra.mxu0 0
    %2407 = vmatpush.bf16.xpose.msra.mxu0 0
    %2408 = vmatpush.bf16.xpose.msra.mxu0 0
    %2409 = vmatpush.bf16.xpose.msra.mxu0 %v2400
    %2410 = vmatmul.bf16.gmra.mxu0 %v2397
    %v2411 = vpop.f32.mrf.mxu0
    %v2412 = vadd.f32 %v443, %v2411
    %v2413 = vpop.f32.mrf.mxu0
    %2414 = vdwg.mxu0
    %v2416 = vunpack.c.l.b16 %v2238
    %v2417 = vpack.c.b16 %v2416, %v2416
    %2418 = vrot.lane.b32.xlu0 %v2417, 64
    %v2419 = vpop.permute.xlu0 %2418
    %v2421 = vsel %vm918, %v2238, 0
    %v2424 = vsel %vm918, %v2419, 0
    %2426 = vmatpush.bf16.xpose.msra.mxu0 0
    %2427 = vmatpush.bf16.xpose.msra.mxu0 0
    %2428 = vmatpush.bf16.xpose.msra.mxu0 0
    %2429 = vmatpush.bf16.xpose.msra.mxu0 0
    %2430 = vmatpush.bf16.xpose.msra.mxu0 0
    %2431 = vmatpush.bf16.xpose.msra.mxu0 0
    %2432 = vmatpush.bf16.xpose.msra.mxu0 0
    %2433 = vmatpush.bf16.xpose.msra.mxu0 %v2424
    %2434 = vmatmul.bf16.gmra.mxu0 %v2421
    %v2435 = vpop.f32.mrf.mxu0
    %v2436 = vadd.f32 %v443, %v2435
    %v2437 = vpop.f32.mrf.mxu0
    %2438 = vdwg.mxu0
    %v2439 = vsel %vm1106, %v2268, -inf
    %2440 = vmax.xlane.f32.xlu0 %v2439
    %v2441 = vpop.xlane.xlu0 %2440
    %v2442 = vsel %vm1106, %v2292, -inf
    %2443 = vmax.xlane.f32.xlu0 %v2442
    %v2444 = vpop.xlane.xlu0 %2443
    %v2445 = vsel %vm1106, %v2316, -inf
    %2446 = vmax.xlane.f32.xlu0 %v2445
    %v2447 = vpop.xlane.xlu0 %2446
    %v2448 = vsel %vm1106, %v2340, -inf
    %2449 = vmax.xlane.f32.xlu0 %v2448
    %v2450 = vpop.xlane.xlu0 %2449
    %v2451 = vsel %vm1106, %v2364, -inf
    %2452 = vmax.xlane.f32.xlu0 %v2451
    %v2453 = vpop.xlane.xlu0 %2452
    %v2454 = vsel %vm1106, %v2388, -inf
    %2455 = vmax.xlane.f32.xlu0 %v2454
    %v2456 = vpop.xlane.xlu0 %2455
    %v2457 = vsel %vm1106, %v2412, -inf
    %2458 = vmax.xlane.f32.xlu0 %v2457
    %v2459 = vpop.xlane.xlu0 %2458
    %v2460 = vsel %vm1106, %v2436, -inf
    %2461 = vmax.xlane.f32.xlu0 %v2460
    %v2462 = vpop.xlane.xlu0 %2461
    %v2463 = vsub.f32 %v2268, %v2441
    %v2464 = vsub.f32 %v2292, %v2444
    %v2465 = vsub.f32 %v2316, %v2447
    %v2466 = vsub.f32 %v2340, %v2450
    %v2467 = vsub.f32 %v2364, %v2453
    %v2468 = vsub.f32 %v2388, %v2456
    %v2469 = vsub.f32 %v2412, %v2459
    %v2470 = vsub.f32 %v2436, %v2462
    %v2471 = vmul.f32 %v2463, 1.442695
    %v2472 = vpow.pop %v2471
    %v2473 = vmul.f32 %v2464, 1.442695
    %v2474 = vpow.pop %v2473
    %v2475 = vmul.f32 %v2465, 1.442695
    %v2476 = vpow.pop %v2475
    %v2477 = vmul.f32 %v2466, 1.442695
    %v2478 = vpow.pop %v2477
    %v2479 = vmul.f32 %v2467, 1.442695
    %v2480 = vpow.pop %v2479
    %v2481 = vmul.f32 %v2468, 1.442695
    %v2482 = vpow.pop %v2481
    %v2483 = vmul.f32 %v2469, 1.442695
    %v2484 = vpow.pop %v2483
    %v2485 = vmul.f32 %v2470, 1.442695
    %v2486 = vpow.pop %v2485
    %v2487 = vsel %vm1106, %v2472, 0.0
    %2488 = vadd.xlane.f32.xlu0 %v2487
    %v2489 = vpop.xlane.xlu0 %2488
    %v2490 = vsel %vm1106, %v2474, 0.0
    %2491 = vadd.xlane.f32.xlu0 %v2490
    %v2492 = vpop.xlane.xlu0 %2491
    %v2493 = vsel %vm1106, %v2476, 0.0
    %2494 = vadd.xlane.f32.xlu0 %v2493
    %v2495 = vpop.xlane.xlu0 %2494
    %v2496 = vsel %vm1106, %v2478, 0.0
    %2497 = vadd.xlane.f32.xlu0 %v2496
    %v2498 = vpop.xlane.xlu0 %2497
    %v2499 = vsel %vm1106, %v2480, 0.0
    %2500 = vadd.xlane.f32.xlu0 %v2499
    %v2501 = vpop.xlane.xlu0 %2500
    %v2502 = vsel %vm1106, %v2482, 0.0
    %2503 = vadd.xlane.f32.xlu0 %v2502
    %v2504 = vpop.xlane.xlu0 %2503
    %v2505 = vsel %vm1106, %v2484, 0.0
    %2506 = vadd.xlane.f32.xlu0 %v2505
    %v2507 = vpop.xlane.xlu0 %2506
    %v2508 = vsel %vm1106, %v2486, 0.0
    %2509 = vadd.xlane.f32.xlu0 %v2508
    %v2510 = vpop.xlane.xlu0 %2509
    %v2511 = vrcp.pop %v2489
    %v2512 = vrcp.pop %v2492
    %v2513 = vrcp.pop %v2495
    %v2514 = vrcp.pop %v2498
    %v2515 = vrcp.pop %v2501
    %v2516 = vrcp.pop %v2504
    %v2517 = vrcp.pop %v2507
    %v2518 = vrcp.pop %v2510
    %v2519 = vmul.f32 %v2472, %v2511
    %v2520 = vmul.f32 %v2474, %v2512
    %v2521 = vmul.f32 %v2476, %v2513
    %v2522 = vmul.f32 %v2478, %v2514
    %v2523 = vmul.f32 %v2480, %v2515
    %v2524 = vmul.f32 %v2482, %v2516
    %v2525 = vmul.f32 %v2484, %v2517
    %v2526 = vmul.f32 %v2486, %v2518
    %v2527 = vpack.c.bf16 %v2519, %v2519
    %v2528 = vpack.c.bf16 %v2520, %v2520
    %v2529 = vpack.c.bf16 %v2521, %v2521
    %v2530 = vpack.c.bf16 %v2522, %v2522
    %v2531 = vpack.c.bf16 %v2523, %v2523
    %v2532 = vpack.c.bf16 %v2524, %v2524
    %v2533 = vpack.c.bf16 %v2525, %v2525
    %v2534 = vpack.c.bf16 %v2526, %v2526
    %v2536 = vsel %vm1106, %v2527, 0
    %v2539 = vsel %vm59, %v2239, 0
    %2541 = vmatpush.bf16.msra.mxu0 0
    %2542 = vmatpush.bf16.msra.mxu0 0
    %2543 = vmatpush.bf16.msra.mxu0 0
    %2544 = vmatpush.bf16.msra.mxu0 0
    %2545 = vmatpush.bf16.msra.mxu0 0
    %2546 = vmatpush.bf16.msra.mxu0 0
    %2547 = vmatpush.bf16.msra.mxu0 0
    %2548 = vmatpush.bf16.msra.mxu0 %v2539
    %2549 = vmatmul.bf16.gmra.mxu0 %v2536
    %v2550 = vpop.f32.mrf.mxu0
    %v2551 = vadd.f32 0.0, %v2550
    %v2552 = vpop.f32.mrf.mxu0
    %2553 = vdwg.mxu0
    %v2555 = vsel %vm1106, %v2528, 0
    %v2558 = vsel %vm59, %v2240, 0
    %2560 = vmatpush.bf16.msra.mxu0 0
    %2561 = vmatpush.bf16.msra.mxu0 0
    %2562 = vmatpush.bf16.msra.mxu0 0
    %2563 = vmatpush.bf16.msra.mxu0 0
    %2564 = vmatpush.bf16.msra.mxu0 0
    %2565 = vmatpush.bf16.msra.mxu0 0
    %2566 = vmatpush.bf16.msra.mxu0 0
    %2567 = vmatpush.bf16.msra.mxu0 %v2558
    %2568 = vmatmul.bf16.gmra.mxu0 %v2555
    %v2569 = vpop.f32.mrf.mxu0
    %v2570 = vadd.f32 0.0, %v2569
    %v2571 = vpop.f32.mrf.mxu0
    %2572 = vdwg.mxu0
    %v2574 = vsel %vm1106, %v2529, 0
    %v2577 = vsel %vm59, %v2241, 0
    %2579 = vmatpush.bf16.msra.mxu0 0
    %2580 = vmatpush.bf16.msra.mxu0 0
    %2581 = vmatpush.bf16.msra.mxu0 0
    %2582 = vmatpush.bf16.msra.mxu0 0
    %2583 = vmatpush.bf16.msra.mxu0 0
    %2584 = vmatpush.bf16.msra.mxu0 0
    %2585 = vmatpush.bf16.msra.mxu0 0
    %2586 = vmatpush.bf16.msra.mxu0 %v2577
    %2587 = vmatmul.bf16.gmra.mxu0 %v2574
    %v2588 = vpop.f32.mrf.mxu0
    %v2589 = vadd.f32 0.0, %v2588
    %v2590 = vpop.f32.mrf.mxu0
    %2591 = vdwg.mxu0
    %v2593 = vsel %vm1106, %v2530, 0
    %v2596 = vsel %vm59, %v2242, 0
    %2598 = vmatpush.bf16.msra.mxu0 0
    %2599 = vmatpush.bf16.msra.mxu0 0
    %2600 = vmatpush.bf16.msra.mxu0 0
    %2601 = vmatpush.bf16.msra.mxu0 0
    %2602 = vmatpush.bf16.msra.mxu0 0
    %2603 = vmatpush.bf16.msra.mxu0 0
    %2604 = vmatpush.bf16.msra.mxu0 0
    %2605 = vmatpush.bf16.msra.mxu0 %v2596
    %2606 = vmatmul.bf16.gmra.mxu0 %v2593
    %v2607 = vpop.f32.mrf.mxu0
    %v2608 = vadd.f32 0.0, %v2607
    %v2609 = vpop.f32.mrf.mxu0
    %2610 = vdwg.mxu0
    %v2612 = vsel %vm1106, %v2531, 0
    %v2615 = vsel %vm59, %v2243, 0
    %2617 = vmatpush.bf16.msra.mxu0 0
    %2618 = vmatpush.bf16.msra.mxu0 0
    %2619 = vmatpush.bf16.msra.mxu0 0
    %2620 = vmatpush.bf16.msra.mxu0 0
    %2621 = vmatpush.bf16.msra.mxu0 0
    %2622 = vmatpush.bf16.msra.mxu0 0
    %2623 = vmatpush.bf16.msra.mxu0 0
    %2624 = vmatpush.bf16.msra.mxu0 %v2615
    %2625 = vmatmul.bf16.gmra.mxu0 %v2612
    %v2626 = vpop.f32.mrf.mxu0
    %v2627 = vadd.f32 0.0, %v2626
    %v2628 = vpop.f32.mrf.mxu0
    %2629 = vdwg.mxu0
    %v2631 = vsel %vm1106, %v2532, 0
    %v2634 = vsel %vm59, %v2244, 0
    %2636 = vmatpush.bf16.msra.mxu0 0
    %2637 = vmatpush.bf16.msra.mxu0 0
    %2638 = vmatpush.bf16.msra.mxu0 0
    %2639 = vmatpush.bf16.msra.mxu0 0
    %2640 = vmatpush.bf16.msra.mxu0 0
    %2641 = vmatpush.bf16.msra.mxu0 0
    %2642 = vmatpush.bf16.msra.mxu0 0
    %2643 = vmatpush.bf16.msra.mxu0 %v2634
    %2644 = vmatmul.bf16.gmra.mxu0 %v2631
    %v2645 = vpop.f32.mrf.mxu0
    %v2646 = vadd.f32 0.0, %v2645
    %v2647 = vpop.f32.mrf.mxu0
    %2648 = vdwg.mxu0
    %v2650 = vsel %vm1106, %v2533, 0
    %v2653 = vsel %vm59, %v2245, 0
    %2655 = vmatpush.bf16.msra.mxu0 0
    %2656 = vmatpush.bf16.msra.mxu0 0
    %2657 = vmatpush.bf16.msra.mxu0 0
    %2658 = vmatpush.bf16.msra.mxu0 0
    %2659 = vmatpush.bf16.msra.mxu0 0
    %2660 = vmatpush.bf16.msra.mxu0 0
    %2661 = vmatpush.bf16.msra.mxu0 0
    %2662 = vmatpush.bf16.msra.mxu0 %v2653
    %2663 = vmatmul.bf16.gmra.mxu0 %v2650
    %v2664 = vpop.f32.mrf.mxu0
    %v2665 = vadd.f32 0.0, %v2664
    %v2666 = vpop.f32.mrf.mxu0
    %2667 = vdwg.mxu0
    %v2669 = vsel %vm1106, %v2534, 0
    %v2672 = vsel %vm59, %v2246, 0
    %2674 = vmatpush.bf16.msra.mxu0 0
    %2675 = vmatpush.bf16.msra.mxu0 0
    %2676 = vmatpush.bf16.msra.mxu0 0
    %2677 = vmatpush.bf16.msra.mxu0 0
    %2678 = vmatpush.bf16.msra.mxu0 0
    %2679 = vmatpush.bf16.msra.mxu0 0
    %2680 = vmatpush.bf16.msra.mxu0 0
    %2681 = vmatpush.bf16.msra.mxu0 %v2672
    %2682 = vmatmul.bf16.gmra.mxu0 %v2669
    %v2683 = vpop.f32.mrf.mxu0
    %v2684 = vadd.f32 0.0, %v2683
    %v2685 = vpop.f32.mrf.mxu0
    %2686 = vdwg.mxu0
    %v2687 = vpack.c.bf16 %v2551, %v2551
    %v2688 = vpack.c.bf16 %v2570, %v2570
    %v2689 = vpack.c.bf16 %v2589, %v2589
    %v2690 = vpack.c.bf16 %v2608, %v2608
    %v2691 = vpack.c.bf16 %v2627, %v2627
    %v2692 = vpack.c.bf16 %v2646, %v2646
    %v2693 = vpack.c.bf16 %v2665, %v2665
    %v2694 = vpack.c.bf16 %v2684, %v2684
    %2695 = vrot.lane.b32.xlu0 %v1792, 64
    %v2696 = vpop.permute.xlu0 %2695
    %2697 = vrot.lane.b32.xlu0 %v1793, 64
    %v2698 = vpop.permute.xlu0 %2697
    %2699 = vrot.lane.b32.xlu0 %v1794, 64
    %v2700 = vpop.permute.xlu0 %2699
    %2701 = vrot.lane.b32.xlu0 %v1795, 64
    %v2702 = vpop.permute.xlu0 %2701
    %v2703 = vrot.slane %v2696, 4
    %v2704 = vrot.slane %v2698, 4
    %v2705 = vrot.slane %v2700, 4
    %v2706 = vrot.slane %v2702, 4
    %v2707 = vunpack.c.l.b16 %v2703
    %v2708 = vunpack.c.l.b16 %v2704
    %v2709 = vunpack.c.l.b16 %v2705
    %v2710 = vunpack.c.l.b16 %v2706
    %v2711 = vpack.c.b16 %v2708, %v2707
    %v2712 = vpack.c.b16 %v2710, %v2709
    %v2714 = vsel %vm918, %v2687, 0
    %v2717 = vsel %vm918, %v2711, 0
    %v2720 = vsel %vm918, %v2712, 0
    %2722 = vmatpush.bf16.xpose.msra.mxu0 0
    %2723 = vmatpush.bf16.xpose.msra.mxu0 0
    %2724 = vmatpush.bf16.xpose.msra.mxu0 0
    %2725 = vmatpush.bf16.xpose.msra.mxu0 0
    %2726 = vmatpush.bf16.xpose.msra.mxu0 0
    %2727 = vmatpush.bf16.xpose.msra.mxu0 0
    %2728 = vmatpush.bf16.xpose.msra.mxu0 %v2720
    %2729 = vmatpush.bf16.xpose.msra.mxu0 %v2717
    %2730 = vmatmul.bf16.gmra.mxu0 %v2714
    %v2731 = vpop.f32.mrf.mxu0
    %v2732 = vadd.f32 0.0, %v2731
    %v2733 = vpop.f32.mrf.mxu0
    %2734 = vdwg.mxu0
    %2735 = vrot.lane.b32.xlu0 %v1796, 64
    %v2736 = vpop.permute.xlu0 %2735
    %2737 = vrot.lane.b32.xlu0 %v1797, 64
    %v2738 = vpop.permute.xlu0 %2737
    %2739 = vrot.lane.b32.xlu0 %v1798, 64
    %v2740 = vpop.permute.xlu0 %2739
    %2741 = vrot.lane.b32.xlu0 %v1799, 64
    %v2742 = vpop.permute.xlu0 %2741
    %v2743 = vrot.slane %v2736, 4
    %v2744 = vrot.slane %v2738, 4
    %v2745 = vrot.slane %v2740, 4
    %v2746 = vrot.slane %v2742, 4
    %v2747 = vunpack.c.l.b16 %v2743
    %v2748 = vunpack.c.l.b16 %v2744
    %v2749 = vunpack.c.l.b16 %v2745
    %v2750 = vunpack.c.l.b16 %v2746
    %v2751 = vpack.c.b16 %v2748, %v2747
    %v2752 = vpack.c.b16 %v2750, %v2749
    %v2754 = vsel %vm918, %v2688, 0
    %v2757 = vsel %vm918, %v2751, 0
    %v2760 = vsel %vm918, %v2752, 0
    %2762 = vmatpush.bf16.xpose.msra.mxu0 0
    %2763 = vmatpush.bf16.xpose.msra.mxu0 0
    %2764 = vmatpush.bf16.xpose.msra.mxu0 0
    %2765 = vmatpush.bf16.xpose.msra.mxu0 0
    %2766 = vmatpush.bf16.xpose.msra.mxu0 0
    %2767 = vmatpush.bf16.xpose.msra.mxu0 0
    %2768 = vmatpush.bf16.xpose.msra.mxu0 %v2760
    %2769 = vmatpush.bf16.xpose.msra.mxu0 %v2757
    %2770 = vmatmul.bf16.gmra.mxu0 %v2754
    %v2771 = vpop.f32.mrf.mxu0
    %v2772 = vadd.f32 0.0, %v2771
    %v2773 = vpop.f32.mrf.mxu0
    %2774 = vdwg.mxu0
    %2775 = vrot.lane.b32.xlu0 %v1800, 64
    %v2776 = vpop.permute.xlu0 %2775
    %2777 = vrot.lane.b32.xlu0 %v1801, 64
    %v2778 = vpop.permute.xlu0 %2777
    %2779 = vrot.lane.b32.xlu0 %v1802, 64
    %v2780 = vpop.permute.xlu0 %2779
    %2781 = vrot.lane.b32.xlu0 %v1803, 64
    %v2782 = vpop.permute.xlu0 %2781
    %v2783 = vrot.slane %v2776, 4
    %v2784 = vrot.slane %v2778, 4
    %v2785 = vrot.slane %v2780, 4
    %v2786 = vrot.slane %v2782, 4
    %v2787 = vunpack.c.l.b16 %v2783
    %v2788 = vunpack.c.l.b16 %v2784
    %v2789 = vunpack.c.l.b16 %v2785
    %v2790 = vunpack.c.l.b16 %v2786
    %v2791 = vpack.c.b16 %v2788, %v2787
    %v2792 = vpack.c.b16 %v2790, %v2789
    %v2794 = vsel %vm918, %v2689, 0
    %v2797 = vsel %vm918, %v2791, 0
    %v2800 = vsel %vm918, %v2792, 0
    %2802 = vmatpush.bf16.xpose.msra.mxu0 0
    %2803 = vmatpush.bf16.xpose.msra.mxu0 0
    %2804 = vmatpush.bf16.xpose.msra.mxu0 0
    %2805 = vmatpush.bf16.xpose.msra.mxu0 0
    %2806 = vmatpush.bf16.xpose.msra.mxu0 0
    %2807 = vmatpush.bf16.xpose.msra.mxu0 0
    %2808 = vmatpush.bf16.xpose.msra.mxu0 %v2800
    %2809 = vmatpush.bf16.xpose.msra.mxu0 %v2797
    %2810 = vmatmul.bf16.gmra.mxu0 %v2794
    %v2811 = vpop.f32.mrf.mxu0
    %v2812 = vadd.f32 0.0, %v2811
    %v2813 = vpop.f32.mrf.mxu0
    %2814 = vdwg.mxu0
    %2815 = vrot.lane.b32.xlu0 %v1804, 64
    %v2816 = vpop.permute.xlu0 %2815
    %2817 = vrot.lane.b32.xlu0 %v1805, 64
    %v2818 = vpop.permute.xlu0 %2817
    %2819 = vrot.lane.b32.xlu0 %v1806, 64
    %v2820 = vpop.permute.xlu0 %2819
    %2821 = vrot.lane.b32.xlu0 %v1807, 64
    %v2822 = vpop.permute.xlu0 %2821
    %v2823 = vrot.slane %v2816, 4
    %v2824 = vrot.slane %v2818, 4
    %v2825 = vrot.slane %v2820, 4
    %v2826 = vrot.slane %v2822, 4
    %v2827 = vunpack.c.l.b16 %v2823
    %v2828 = vunpack.c.l.b16 %v2824
    %v2829 = vunpack.c.l.b16 %v2825
    %v2830 = vunpack.c.l.b16 %v2826
    %v2831 = vpack.c.b16 %v2828, %v2827
    %v2832 = vpack.c.b16 %v2830, %v2829
    %v2834 = vsel %vm918, %v2690, 0
    %v2837 = vsel %vm918, %v2831, 0
    %v2840 = vsel %vm918, %v2832, 0
    %2842 = vmatpush.bf16.xpose.msra.mxu0 0
    %2843 = vmatpush.bf16.xpose.msra.mxu0 0
    %2844 = vmatpush.bf16.xpose.msra.mxu0 0
    %2845 = vmatpush.bf16.xpose.msra.mxu0 0
    %2846 = vmatpush.bf16.xpose.msra.mxu0 0
    %2847 = vmatpush.bf16.xpose.msra.mxu0 0
    %2848 = vmatpush.bf16.xpose.msra.mxu0 %v2840
    %2849 = vmatpush.bf16.xpose.msra.mxu0 %v2837
    %2850 = vmatmul.bf16.gmra.mxu0 %v2834
    %v2851 = vpop.f32.mrf.mxu0
    %v2852 = vadd.f32 0.0, %v2851
    %v2853 = vpop.f32.mrf.mxu0
    %2854 = vdwg.mxu0
    %2855 = vrot.lane.b32.xlu0 %v1808, 64
    %v2856 = vpop.permute.xlu0 %2855
    %2857 = vrot.lane.b32.xlu0 %v1809, 64
    %v2858 = vpop.permute.xlu0 %2857
    %2859 = vrot.lane.b32.xlu0 %v1810, 64
    %v2860 = vpop.permute.xlu0 %2859
    %2861 = vrot.lane.b32.xlu0 %v1811, 64
    %v2862 = vpop.permute.xlu0 %2861
    %v2863 = vrot.slane %v2856, 4
    %v2864 = vrot.slane %v2858, 4
    %v2865 = vrot.slane %v2860, 4
    %v2866 = vrot.slane %v2862, 4
    %v2867 = vunpack.c.l.b16 %v2863
    %v2868 = vunpack.c.l.b16 %v2864
    %v2869 = vunpack.c.l.b16 %v2865
    %v2870 = vunpack.c.l.b16 %v2866
    %v2871 = vpack.c.b16 %v2868, %v2867
    %v2872 = vpack.c.b16 %v2870, %v2869
    %v2874 = vsel %vm918, %v2691, 0
    %v2877 = vsel %vm918, %v2871, 0
    %v2880 = vsel %vm918, %v2872, 0
    %2882 = vmatpush.bf16.xpose.msra.mxu0 0
    %2883 = vmatpush.bf16.xpose.msra.mxu0 0
    %2884 = vmatpush.bf16.xpose.msra.mxu0 0
    %2885 = vmatpush.bf16.xpose.msra.mxu0 0
    %2886 = vmatpush.bf16.xpose.msra.mxu0 0
    %2887 = vmatpush.bf16.xpose.msra.mxu0 0
    %2888 = vmatpush.bf16.xpose.msra.mxu0 %v2880
    %2889 = vmatpush.bf16.xpose.msra.mxu0 %v2877
    %2890 = vmatmul.bf16.gmra.mxu0 %v2874
    %v2891 = vpop.f32.mrf.mxu0
    %v2892 = vadd.f32 0.0, %v2891
    %v2893 = vpop.f32.mrf.mxu0
    %2894 = vdwg.mxu0
    %2895 = vrot.lane.b32.xlu0 %v1812, 64
    %v2896 = vpop.permute.xlu0 %2895
    %2897 = vrot.lane.b32.xlu0 %v1813, 64
    %v2898 = vpop.permute.xlu0 %2897
    %2899 = vrot.lane.b32.xlu0 %v1814, 64
    %v2900 = vpop.permute.xlu0 %2899
    %2901 = vrot.lane.b32.xlu0 %v1815, 64
    %v2902 = vpop.permute.xlu0 %2901
    %v2903 = vrot.slane %v2896, 4
    %v2904 = vrot.slane %v2898, 4
    %v2905 = vrot.slane %v2900, 4
    %v2906 = vrot.slane %v2902, 4
    %v2907 = vunpack.c.l.b16 %v2903
    %v2908 = vunpack.c.l.b16 %v2904
    %v2909 = vunpack.c.l.b16 %v2905
    %v2910 = vunpack.c.l.b16 %v2906
    %v2911 = vpack.c.b16 %v2908, %v2907
    %v2912 = vpack.c.b16 %v2910, %v2909
    %v2914 = vsel %vm918, %v2692, 0
    %v2917 = vsel %vm918, %v2911, 0
    %v2920 = vsel %vm918, %v2912, 0
    %2922 = vmatpush.bf16.xpose.msra.mxu0 0
    %2923 = vmatpush.bf16.xpose.msra.mxu0 0
    %2924 = vmatpush.bf16.xpose.msra.mxu0 0
    %2925 = vmatpush.bf16.xpose.msra.mxu0 0
    %2926 = vmatpush.bf16.xpose.msra.mxu0 0
    %2927 = vmatpush.bf16.xpose.msra.mxu0 0
    %2928 = vmatpush.bf16.xpose.msra.mxu0 %v2920
    %2929 = vmatpush.bf16.xpose.msra.mxu0 %v2917
    %2930 = vmatmul.bf16.gmra.mxu0 %v2914
    %v2931 = vpop.f32.mrf.mxu0
    %v2932 = vadd.f32 0.0, %v2931
    %v2933 = vpop.f32.mrf.mxu0
    %2934 = vdwg.mxu0
    %2935 = vrot.lane.b32.xlu0 %v1816, 64
    %v2936 = vpop.permute.xlu0 %2935
    %2937 = vrot.lane.b32.xlu0 %v1817, 64
    %v2938 = vpop.permute.xlu0 %2937
    %2939 = vrot.lane.b32.xlu0 %v1818, 64
    %v2940 = vpop.permute.xlu0 %2939
    %2941 = vrot.lane.b32.xlu0 %v1819, 64
    %v2942 = vpop.permute.xlu0 %2941
    %v2943 = vrot.slane %v2936, 4
    %v2944 = vrot.slane %v2938, 4
    %v2945 = vrot.slane %v2940, 4
    %v2946 = vrot.slane %v2942, 4
    %v2947 = vunpack.c.l.b16 %v2943
    %v2948 = vunpack.c.l.b16 %v2944
    %v2949 = vunpack.c.l.b16 %v2945
    %v2950 = vunpack.c.l.b16 %v2946
    %v2951 = vpack.c.b16 %v2948, %v2947
    %v2952 = vpack.c.b16 %v2950, %v2949
    %v2954 = vsel %vm918, %v2693, 0
    %v2957 = vsel %vm918, %v2951, 0
    %v2960 = vsel %vm918, %v2952, 0
    %2962 = vmatpush.bf16.xpose.msra.mxu0 0
    %2963 = vmatpush.bf16.xpose.msra.mxu0 0
    %2964 = vmatpush.bf16.xpose.msra.mxu0 0
    %2965 = vmatpush.bf16.xpose.msra.mxu0 0
    %2966 = vmatpush.bf16.xpose.msra.mxu0 0
    %2967 = vmatpush.bf16.xpose.msra.mxu0 0
    %2968 = vmatpush.bf16.xpose.msra.mxu0 %v2960
    %2969 = vmatpush.bf16.xpose.msra.mxu0 %v2957
    %2970 = vmatmul.bf16.gmra.mxu0 %v2954
    %v2971 = vpop.f32.mrf.mxu0
    %v2972 = vadd.f32 0.0, %v2971
    %v2973 = vpop.f32.mrf.mxu0
    %2974 = vdwg.mxu0
    %2975 = vrot.lane.b32.xlu0 %v1820, 64
    %v2976 = vpop.permute.xlu0 %2975
    %2977 = vrot.lane.b32.xlu0 %v1821, 64
    %v2978 = vpop.permute.xlu0 %2977
    %2979 = vrot.lane.b32.xlu0 %v1822, 64
    %v2980 = vpop.permute.xlu0 %2979
    %2981 = vrot.lane.b32.xlu0 %v1823, 64
    %v2982 = vpop.permute.xlu0 %2981
    %v2983 = vrot.slane %v2976, 4
    %v2984 = vrot.slane %v2978, 4
    %v2985 = vrot.slane %v2980, 4
    %v2986 = vrot.slane %v2982, 4
    %v2987 = vunpack.c.l.b16 %v2983
    %v2988 = vunpack.c.l.b16 %v2984
    %v2989 = vunpack.c.l.b16 %v2985
    %v2990 = vunpack.c.l.b16 %v2986
    %v2991 = vpack.c.b16 %v2988, %v2987
    %v2992 = vpack.c.b16 %v2990, %v2989
    %v2994 = vsel %vm918, %v2694, 0
    %v2997 = vsel %vm918, %v2991, 0
    %v3000 = vsel %vm918, %v2992, 0
    %3002 = vmatpush.bf16.xpose.msra.mxu0 0
    %3003 = vmatpush.bf16.xpose.msra.mxu0 0
    %3004 = vmatpush.bf16.xpose.msra.mxu0 0
    %3005 = vmatpush.bf16.xpose.msra.mxu0 0
    %3006 = vmatpush.bf16.xpose.msra.mxu0 0
    %3007 = vmatpush.bf16.xpose.msra.mxu0 0
    %3008 = vmatpush.bf16.xpose.msra.mxu0 %v3000
    %3009 = vmatpush.bf16.xpose.msra.mxu0 %v2997
    %3010 = vmatmul.bf16.gmra.mxu0 %v2994
    %v3011 = vpop.f32.mrf.mxu0
    %v3012 = vadd.f32 0.0, %v3011
    %v3013 = vpop.f32.mrf.mxu0
    %3014 = vdwg.mxu0
    %v3015 = vadd.f32 %v2732, %v2772
    %v3016 = vadd.f32 %v3015, %v2812
    %v3017 = vadd.f32 %v3016, %v2852
    %v3018 = vadd.f32 %v3017, %v2892
    %v3019 = vadd.f32 %v3018, %v2932
    %v3020 = vadd.f32 %v3019, %v2972
    %v3021 = vadd.f32 %v3020, %v3012
    %v3022 = vadd.f32 %v1784, %v3021
    %v3023 = vsel %vm491, %v3022, 0.0
    %3024 = vadd.xlane.f32.xlu0 %v3023
    %v3025 = vpop.xlane.xlu0 %3024
    %v3026 = vmul.f32 %v3025, %v501
    %v3027 = vsub.f32 %v3022, %v3026
    %v3028 = vmul.f32 %v3027, %v3027
    %v3029 = vsel %vm491, %v3028, 0.0
    %3030 = vadd.xlane.f32.xlu0 %v3029
    %v3031 = vpop.xlane.xlu0 %3030
    %v3032 = vmul.f32 %v3031, %v501
    %v3033 = vadd.f32 %v3032, 1e-05
    %v3034 = vrsqrt.pop %v3033
    %v3035 = vmul.f32 %v3034, %v3033
    %v3036 = vmul.f32 %v3035, %v3034
    %v3037 = vmul.f32 0.5, %v3036
    %v3038 = vsub.f32 1.5, %v3037
    %v3039 = vmul.f32 %v3034, %v3038
    %vm3040 = vweird.f32 %v3033
    %vm3041 = vweird.f32 %v3034
    %vm3042 = vmor %vm3040, %vm3041
    %v3043 = vsel %vm3042, %v3034, %v3039
    %v3044 = vmul.f32 %v3027, %v3043
    %v3045 = vperm.slane %v1787, 0
    %v3046 = vmul.f32 %v3044, %v3045
    %v3047 = vperm.slane %v1788, 0
    %v3048 = vadd.f32 %v3046, %v3047
    %v3049 = vpack.c.bf16 %v3048, %v3048
    %v3050 = vperm.slane %v1789, 0
    %v3055 = vunpack.c.l.b16 %v1825
    %v3056 = vunpack.c.l.b16 %v1826
    %v3057 = vunpack.c.l.b16 %v1827
    %v3058 = vunpack.c.l.b16 %v1828
    %v3059 = vpack.c.b16 %v3056, %v3055
    %v3060 = vpack.c.b16 %v3058, %v3057
    %v3064 = vsel %vm491, %v3049, 0
    %3066 = vmatpush.bf16.msra.mxu0 0
    %3067 = vmatpush.bf16.msra.mxu0 0
    %3068 = vmatpush.bf16.msra.mxu0 0
    %3069 = vmatpush.bf16.msra.mxu0 0
    %3070 = vmatpush.bf16.msra.mxu0 0
    %3071 = vmatpush.bf16.msra.mxu0 0
    %3072 = vmatpush.bf16.msra.mxu0 %v3060
    %3073 = vmatpush.bf16.msra.mxu0 %v3059
    %3074 = vmatmul.bf16.gmra.mxu0 %v3064
    %v3075 = vpop.f32.mrf.mxu0
    %v3076 = vadd.f32 %v3050, %v3075
    %v3077 = vpop.f32.mrf.mxu0
    %3078 = vdwg.mxu0
    %v3079 = vmul.f32 %v3076, %v3076
    %v3080 = vmul.f32 %v3076, %v3079
    %v3081 = vmul.f32 %v3080, 0.044715
    %v3082 = vadd.f32 %v3076, %v3081
    %v3083 = vmul.f32 %v3082, 0.7978846
    %v3084 = vtanh.pop %v3083
    %v3085 = vadd.f32 %v3084, 1.0
    %v3086 = vmul.f32 %v3085, 0.5
    %v3087 = vmul.f32 %v3076, %v3086
    %v3088 = vpack.c.bf16 %v3087, %v3087
    %v3093 = vunpack.c.l.b16 %v1829
    %v3094 = vunpack.c.l.b16 %v1830
    %v3095 = vunpack.c.l.b16 %v1831
    %v3096 = vunpack.c.l.b16 %v1832
    %v3097 = vpack.c.b16 %v3094, %v3093
    %v3098 = vpack.c.b16 %v3096, %v3095
    %3101 = vmatpush.bf16.xpose.msra.mxu0 0
    %3102 = vmatpush.bf16.xpose.msra.mxu0 0
    %3103 = vmatpush.bf16.xpose.msra.mxu0 0
    %3104 = vmatpush.bf16.xpose.msra.mxu0 0
    %3105 = vmatpush.bf16.xpose.msra.mxu0 0
    %3106 = vmatpush.bf16.xpose.msra.mxu0 0
    %3107 = vmatpush.bf16.xpose.msra.mxu0 %v3098
    %3108 = vmatpush.bf16.xpose.msra.mxu0 %v3097
    %3109 = vmatmul.bf16.gmra.mxu0 %v3088
    %v3110 = vpop.f32.mrf.mxu0
    %v3111 = vadd.f32 0.0, %v3110
    %v3112 = vpop.f32.mrf.mxu0
    %3113 = vdwg.mxu0
    %v3114 = vadd.f32 %v3022, %v3111
    %v3115 = vperm.slane %v1790, 0
    %v3116 = vadd.f32 %v3114, %v3115
    %v3117 = vld [vmem:[%s2 + $0xc] sm:$0x1]
    %v3118 = vld [vmem:[%s2 + $0xd] sm:$0x1]
    %v3119 = vsel %vm491, %v3116, 0.0
    %3120 = vadd.xlane.f32.xlu0 %v3119
    %v3121 = vpop.xlane.xlu0 %3120
    %v3122 = vmul.f32 %v3121, %v501
    %v3123 = vsub.f32 %v3116, %v3122
    %v3124 = vmul.f32 %v3123, %v3123
    %v3125 = vsel %vm491, %v3124, 0.0
    %3126 = vadd.xlane.f32.xlu0 %v3125
    %v3127 = vpop.xlane.xlu0 %3126
    %v3128 = vmul.f32 %v3127, %v501
    %v3129 = vadd.f32 %v3128, 1e-05
    %v3130 = vrsqrt.pop %v3129
    %v3131 = vmul.f32 %v3130, %v3129
    %v3132 = vmul.f32 %v3131, %v3130
    %v3133 = vmul.f32 0.5, %v3132
    %v3134 = vsub.f32 1.5, %v3133
    %v3135 = vmul.f32 %v3130, %v3134
    %vm3136 = vweird.f32 %v3129
    %vm3137 = vweird.f32 %v3130
    %vm3138 = vmor %vm3136, %vm3137
    %v3139 = vsel %vm3138, %v3130, %v3135
    %v3140 = vmul.f32 %v3123, %v3139
    %v3141 = vperm.slane %v3117, 0
    %v3142 = vmul.f32 %v3140, %v3141
    %v3143 = vperm.slane %v3118, 0
    %v3144 = vadd.f32 %v3142, %v3143
    %3145 = vst.msk [vmem:[#allocation5] sm:$0xff] %vm491, %v3144
    // Predicated region
    $region22: #{mixer_forward.1} parent=1 // pred_check
      _
    $region23: #{mixer_forward.1} parent=1 // pred_check_branch
      %3147 = sbr.rel (0) target = $region25
    $region24: #{mixer_forward.1} parent=1 // pred_region
      %3149 = vsyncadd [#allocation4], 0
      %s3151 = sshll.u32 [#allocation5], 4
      %s3152 = int_to_ptr.vmem [resolvable:$true] %s3151
      %s3153 = sshll.u32 %s4, 4
      %s3154 = int_to_ptr.hbm [resolvable:$true] %s3153
      %3156 = dma.vmem_to_hbm [thread:$0]  %s3152, 128, %s3154, [#allocation4]
    $region25: #{mixer_forward.1} parent=1 // pred_fallthru
      _
    // Predicated region
    $region26: #{mixer_forward.1} parent=1 // pred_check
      _
    $region27: #{mixer_forward.1} parent=1 // pred_check_branch
      %3158 = sbr.rel (0) target = $region29
    $region28: #{mixer_forward.1} parent=1 // pred_region
      %3160 = dma.done [#allocation4], 128
    $region29: #{mixer_forward.1} parent=1 // pred_fallthru
      _
    %3161 = vsyncpa [#allocation3], 1
    %3162 = vsyncpa [#allocation4], 1

</llo_original>
